<compile_context>
chip_gen: v5e
topology: v5e:2x2
jax: 0.10.0
libtpu: 0.0.40
codegen_flags: <defaults>
</compile_context>

<pallas_src>
import functools

import jax
import jax.numpy as jnp
from jax import lax
from jax.experimental import pallas as pl
from jax.experimental.pallas import tpu as pltpu

EPS = 1e-5
_VMEM_LIMIT = 32 * 1024 * 1024  # comfortably above the per-step working sets


# --------------------------------------------------------------------------
# In-kernel helpers
# --------------------------------------------------------------------------
def _write_tile_stats(y, st_ref):
    """y: (rows, C) f32.  Store per-tile [sum; M2] (M2 = sum of squared
    deviations from the *tile* mean) into a (1, 2, C) stats block."""
    rows, c = y.shape
    s = jnp.sum(y, axis=0, keepdims=True)                       # (1, C)
    mu = s * (1.0 / rows)
    m2 = jnp.sum(jnp.square(y - mu), axis=0, keepdims=True)     # (1, C)
    st_ref[...] = jnp.concatenate([s, m2], axis=0).reshape(1, 2, c)


# --------------------------------------------------------------------------
# Pass 1: conv1 (1x1) + BN1 partial stats
# --------------------------------------------------------------------------
def _conv1_stats_kernel(x_ref, w_ref, y_ref, st_ref):
    y = jnp.dot(x_ref[...], w_ref[...], preferred_element_type=jnp.float32)
    y_ref[...] = y.astype(y_ref.dtype)
    _write_tile_stats(y, st_ref)


# --------------------------------------------------------------------------
# Pass 2: BN1 + ReLU + grouped 3x3 conv (stride=1, pad=1) + BN2 partial stats
# (grid over batch images; 9 tap matmuls accumulated into one f32 acc)
# --------------------------------------------------------------------------
def _bn_relu_gconv3x3_stats_kernel(y1_ref, sc_ref, sh_ref, w2_ref,
                                   y2_ref, st_ref):
    _, H, W, D = y1_ref.shape
    a = y1_ref[...].astype(jnp.float32) * sc_ref[...] + sh_ref[...]
    a = jnp.maximum(a, 0.0).astype(jnp.bfloat16)                # (1,H,W,D)

    # Single zero-padded copy (instead of a 9x patch buffer).
    zw = jnp.zeros((1, H, 1, D), jnp.bfloat16)
    ap = jnp.concatenate([zw, a, zw], axis=2)                   # (1,H,W+2,D)
    zh = jnp.zeros((1, 1, W + 2, D), jnp.bfloat16)
    ap = jnp.concatenate([zh, ap, zh], axis=1)                  # (1,H+2,W+2,D)

    acc = jnp.zeros((H * W, D), jnp.float32)
    for t in range(9):                                          # static unroll
        dh, dw = t // 3, t % 3
        tap = ap[:, dh:dh + H, dw:dw + W, :].reshape(H * W, D)
        acc = acc + jnp.dot(tap, w2_ref[t],
                            preferred_element_type=jnp.float32)

    y2_ref[...] = acc.reshape(1, H, W, D).astype(y2_ref.dtype)
    _write_tile_stats(acc, st_ref)


# --------------------------------------------------------------------------
# Pass 3: BN2 + ReLU + conv3 (1x1) + BN3 partial stats
# --------------------------------------------------------------------------
def _bn_relu_conv1x1_stats_kernel(y_ref, sc_ref, sh_ref, w_ref, o_ref, st_ref):
    a = y_ref[...].astype(jnp.float32) * sc_ref[...] + sh_ref[...]
    a = jnp.maximum(a, 0.0).astype(jnp.bfloat16)
    y = jnp.dot(a, w_ref[...], preferred_element_type=jnp.float32)
    o_ref[...] = y.astype(o_ref.dtype)
    _write_tile_stats(y, st_ref)


# --------------------------------------------------------------------------
# Pass 4: BN3 + identity residual + ReLU
# --------------------------------------------------------------------------
def _bn_residual_relu_kernel(y3_ref, sc_ref, sh_ref, x_ref, o_ref):
    y = y3_ref[...].astype(jnp.float32) * sc_ref[...] + sh_ref[...]
    o_ref[...] = jnp.maximum(y + x_ref[...].astype(jnp.float32), 0.0)


# --------------------------------------------------------------------------
# Wrapper-side glue (tiny per-channel math between passes, weight reshaping)
# --------------------------------------------------------------------------
def _bn_affine(stats, rows_per_tile, total_rows, gamma, beta):
    """Combine per-tile (sum, M2) partials (Chan/Welford) -> scale, shift."""
    tile_sum = stats[:, 0, :]                                   # (T, C)
    tile_m2 = stats[:, 1, :]
    tile_mean = tile_sum / rows_per_tile
    mean = jnp.sum(tile_sum, axis=0) / total_rows
    m2 = jnp.sum(tile_m2, axis=0) + rows_per_tile * jnp.sum(
        jnp.square(tile_mean - mean[None, :]), axis=0)
    var = m2 / total_rows                                       # biased (PyTorch)
    scale = gamma * lax.rsqrt(var + EPS)
    shift = beta - mean * scale
    return (scale.reshape(1, -1).astype(jnp.float32),
            shift.reshape(1, -1).astype(jnp.float32))


def _expand_grouped_weight_taps(w2g, cardinality):
    """(D, D//card, 3, 3) PyTorch grouped OIHW weight -> (9, D, D) per-tap
    block-diagonal matrices laid out [ci, co] (so `act @ W[t]` is tap t)."""
    D, Cg = w2g.shape[0], w2g.shape[1]
    taps = jnp.zeros((9, D, D), jnp.float32)
    for g in range(cardinality):
        blk = w2g[g * Cg:(g + 1) * Cg]                               # (co,ci,kh,kw)
        blk_t = jnp.transpose(blk, (2, 3, 1, 0)).reshape(9, Cg, Cg)  # (tap,ci,co)
        taps = taps.at[:, g * Cg:(g + 1) * Cg, g * Cg:(g + 1) * Cg].set(blk_t)
    return taps


def _row_tile(n, target=1024):
    """Largest divisor of n that is <= target and a multiple of 8; else n."""
    for t in range(min(n, target), 7, -1):
        if n % t == 0 and t % 8 == 0:
            return t
    return n


def _cparams():
    return pltpu.CompilerParams(dimension_semantics=("parallel",),
                                vmem_limit_bytes=_VMEM_LIMIT)


@functools.partial(jax.jit, static_argnames=("cardinality",))
def bottleneck_forward_nhwc(x_nhwc, params, *, cardinality):
    """Bottleneck forward. Input/output are NHWC; output is float32.

    (NCHW<->NHWC conversion for PyTorch interop is assumed to be done once per
    model outside this per-block hot path.)"""
    N, H, W, Cin = x_nhwc.shape
    D = params["w1"].shape[0]
    Cout = params["w3"].shape[0]
    if Cin != Cout:
        raise ValueError(
            f"stride=1 / downsample=None requires in_channels == "
            f"out_channels*expansion (got Cin={Cin}, Cout={Cout}).")
    NHW = N * H * W
    TM = _row_tile(NHW)
    T = NHW // TM

    # Ship activations as bf16 (halves HBM traffic of the largest operands).
    x2d = x_nhwc.astype(jnp.bfloat16).reshape(NHW, Cin)

    # Weight reshaping (would be precomputed once per model in practice).
    w1d = jnp.transpose(params["w1"][:, :, 0, 0], (1, 0)).astype(jnp.bfloat16)
    w3d = jnp.transpose(params["w3"][:, :, 0, 0], (1, 0)).astype(jnp.bfloat16)
    w2t = _expand_grouped_weight_taps(params["w2"],
                                      cardinality).astype(jnp.bfloat16)

    # ---- pass 1: conv1 + BN1 partial stats -------------------------------
    y1, st1 = pl.pallas_call(
        _conv1_stats_kernel,
        out_shape=(jax.ShapeDtypeStruct((NHW, D), jnp.bfloat16),
                   jax.ShapeDtypeStruct((T, 2, D), jnp.float32)),
        grid=(T,),
        in_specs=[pl.BlockSpec((TM, Cin), lambda i: (i, 0)),
                  pl.BlockSpec((Cin, D), lambda i: (0, 0))],
        out_specs=(pl.BlockSpec((TM, D), lambda i: (i, 0)),
                   pl.BlockSpec((1, 2, D), lambda i: (i, 0, 0))),
        compiler_params=_cparams(),
        cost_estimate=pl.CostEstimate(
            flops=2 * NHW * Cin * D, transcendentals=0,
            bytes_accessed=2 * NHW * (Cin + D) + 2 * Cin * D + 8 * T * D),
    )(x2d, w1d)
    sc1, sh1 = _bn_affine(st1, TM, NHW, params["g1"], params["b1"])

    # ---- pass 2: BN1+ReLU + grouped conv2 + BN2 partial stats -------------
    y1_img = y1.reshape(N, H, W, D)
    y2_img, st2 = pl.pallas_call(
        _bn_relu_gconv3x3_stats_kernel,
        out_shape=(jax.ShapeDtypeStruct((N, H, W, D), jnp.bfloat16),
                   jax.ShapeDtypeStruct((N, 2, D), jnp.float32)),
        grid=(N,),
        in_specs=[pl.BlockSpec((1, H, W, D), lambda i: (i, 0, 0, 0)),
                  pl.BlockSpec((1, D), lambda i: (0, 0)),
                  pl.BlockSpec((1, D), lambda i: (0, 0)),
                  pl.BlockSpec((9, D, D), lambda i: (0, 0, 0))],
        out_specs=(pl.BlockSpec((1, H, W, D), lambda i: (i, 0, 0, 0)),
                   pl.BlockSpec((1, 2, D), lambda i: (i, 0, 0))),
        compiler_params=_cparams(),
        cost_estimate=pl.CostEstimate(
            flops=2 * NHW * 9 * D * D, transcendentals=0,
            bytes_accessed=4 * NHW * D + 18 * D * D + 8 * N * D),
    )(y1_img, sc1, sh1, w2t)
    sc2, sh2 = _bn_affine(st2, H * W, NHW, params["g2"], params["b2"])

    # ---- pass 3: BN2+ReLU + conv3 + BN3 partial stats ----------------------
    y2 = y2_img.reshape(NHW, D)
    y3, st3 = pl.pallas_call(
        _bn_relu_conv1x1_stats_kernel,
        out_shape=(jax.ShapeDtypeStruct((NHW, Cout), jnp.bfloat16),
                   jax.ShapeDtypeStruct((T, 2, Cout), jnp.float32)),
        grid=(T,),
        in_specs=[pl.BlockSpec((TM, D), lambda i: (i, 0)),
                  pl.BlockSpec((1, D), lambda i: (0, 0)),
                  pl.BlockSpec((1, D), lambda i: (0, 0)),
                  pl.BlockSpec((D, Cout), lambda i: (0, 0))],
        out_specs=(pl.BlockSpec((TM, Cout), lambda i: (i, 0)),
                   pl.BlockSpec((1, 2, Cout), lambda i: (i, 0, 0))),
        compiler_params=_cparams(),
        cost_estimate=pl.CostEstimate(
            flops=2 * NHW * D * Cout, transcendentals=0,
            bytes_accessed=2 * NHW * (D + Cout) + 2 * D * Cout + 8 * T * Cout),
    )(y2, sc2, sh2, w3d)
    sc3, sh3 = _bn_affine(st3, TM, NHW, params["g3"], params["b3"])

    # ---- pass 4: BN3 + residual + ReLU ------------------------------------
    out2d = pl.pallas_call(
        _bn_residual_relu_kernel,
        out_shape=jax.ShapeDtypeStruct((NHW, Cout), jnp.float32),
        grid=(T,),
        in_specs=[pl.BlockSpec((TM, Cout), lambda i: (i, 0)),
                  pl.BlockSpec((1, Cout), lambda i: (0, 0)),
                  pl.BlockSpec((1, Cout), lambda i: (0, 0)),
                  pl.BlockSpec((TM, Cout), lambda i: (i, 0))],
        out_specs=pl.BlockSpec((TM, Cout), lambda i: (i, 0)),
        compiler_params=_cparams(),
        cost_estimate=pl.CostEstimate(
            flops=3 * NHW * Cout, transcendentals=0,
            bytes_accessed=4 * NHW * Cout + 4 * NHW * Cout),
    )(y3, sc3, sh3, x2d)

    return out2d.reshape(N, H, W, Cout)


# --------------------------------------------------------------------------
# Pure-JAX reference (PyTorch training-mode BN semantics), NHWC
# --------------------------------------------------------------------------
def _reference_nhwc(x, params, cardinality):
    def bn(y, g, b):
        mean = jnp.mean(y, axis=(0, 1, 2), keepdims=True)
        var = jnp.mean(jnp.square(y - mean), axis=(0, 1, 2), keepdims=True)
        return ((y - mean) / jnp.sqrt(var + EPS)) * g.reshape(1, 1, 1, -1) \
            + b.reshape(1, 1, 1, -1)

    dn = ("NHWC", "OIHW", "NHWC")
    y = lax.conv_general_dilated(x, params["w1"], (1, 1), "VALID",
                                 dimension_numbers=dn)
    y = jnp.maximum(bn(y, params["g1"], params["b1"]), 0.0)
    y = lax.conv_general_dilated(y, params["w2"], (1, 1), ((1, 1), (1, 1)),
                                 feature_group_count=cardinality,
                                 dimension_numbers=dn)
    y = jnp.maximum(bn(y, params["g2"], params["b2"]), 0.0)
    y = lax.conv_general_dilated(y, params["w3"], (1, 1), "VALID",
                                 dimension_numbers=dn)
    y = bn(y, params["g3"], params["b3"])
    return jnp.maximum(y + x, 0.0)


if __name__ == "__main__":
    # Module hyper-params (ResNeXt defaults): cardinality=32, base_width=4.
    out_channels = 64
    cardinality = 32
    base_width = 4
    expansion = 4
    D = int(out_channels * (base_width / 64.0)) * cardinality    # 128
    Cout = out_channels * expansion                               # 256
    Cin = Cout    # downsample=None + stride=1 -> identity must match output
    N, H, W = 2, 8, 8

    key = jax.random.PRNGKey(0)
    ks = jax.random.split(key, 10)
    # NHWC once per model (not per block).
    x = jax.random.normal(ks[0], (N, H, W, Cin), jnp.float32)

    params = {
        "w1": 0.05 * jax.random.normal(ks[1], (D, Cin, 1, 1), jnp.float32),
        "w2": 0.10 * jax.random.normal(ks[2], (D, D // cardinality, 3, 3),
                                       jnp.float32),
        "w3": 0.05 * jax.random.normal(ks[3], (Cout, D, 1, 1), jnp.float32),
        "g1": 1.0 + 0.1 * jax.random.normal(ks[4], (D,), jnp.float32),
        "b1": 0.1 * jax.random.normal(ks[5], (D,), jnp.float32),
        "g2": 1.0 + 0.1 * jax.random.normal(ks[6], (D,), jnp.float32),
        "b2": 0.1 * jax.random.normal(ks[7], (D,), jnp.float32),
        "g3": 1.0 + 0.1 * jax.random.normal(ks[8], (Cout,), jnp.float32),
        "b3": 0.1 * jax.random.normal(ks[9], (Cout,), jnp.float32),
    }

    out = bottleneck_forward_nhwc(x, params, cardinality=cardinality)
    out = jax.block_until_ready(out)

    # Sanity check vs f32 reference (tolerance covers bf16 MXU inputs and
    # bf16 inter-pass activations; a semantic error would be O(1)).
    ref = _reference_nhwc(x, params, cardinality)
    diff = jnp.abs(out - ref)
    max_abs = float(jnp.max(diff))
    max_rel = float(jnp.max(diff / (1.0 + jnp.abs(ref))))
    assert out.shape == (N, H, W, Cout)
    assert max_abs < 0.3 and max_rel < 0.1, \
        f"kernel vs reference: max|diff|={max_abs}, max rel={max_rel}"

    print("KERNEL_OK")
</pallas_src>

<mosaic_0001>
module attributes {stable_mosaic.version = 11 : i64} {
  func.func @_conv1_stats_kernel(%arg0: i32, %arg1: memref<128x256xbf16, #tpu.memory_space<vmem>>, %arg2: memref<256x128xbf16, #tpu.memory_space<vmem>>, %arg3: memref<128x128xbf16, #tpu.memory_space<vmem>>, %arg4: memref<1x2x128xf32, #tpu.memory_space<vmem>>) attributes {dimension_semantics = [#tpu.dimension_semantics<parallel>], iteration_bounds = array<i64: 1>, scalar_prefetch = 0 : i64, scratch_operands = 0 : i64, tpu.core_type = #tpu.core_type<tc>, window_params = [{transform_indices = @transform_0, window_bounds = array<i64: 128, 256>}, {pipeline_mode = #tpu.pipeline_mode<synchronous>, transform_indices = @transform_1, window_bounds = array<i64: 256, 128>}, {transform_indices = @transform_2, window_bounds = array<i64: 128, 128>}, {transform_indices = @transform_3, window_bounds = array<i64: 1, 2, 128>}]} {
    %c0 = arith.constant 0 : index
    %c0_0 = arith.constant 0 : index
    %0 = vector.load %arg1[%c0, %c0_0] : memref<128x256xbf16, #tpu.memory_space<vmem>>, vector<128x256xbf16>
    %c0_1 = arith.constant 0 : index
    %c0_2 = arith.constant 0 : index
    %1 = vector.load %arg2[%c0_1, %c0_2] : memref<256x128xbf16, #tpu.memory_space<vmem>>, vector<256x128xbf16>
    %cst = arith.constant dense<0.000000e+00> : vector<128x128xf32>
    %2 = tpu.matmul %0, %1, %cst {dimension_numbers = #tpu.dot_dimension_numbers<[1], [0], [0], [1], [0, 0, 1, 1], [], []>} : vector<128x256xbf16>, vector<256x128xbf16>, vector<128x128xf32> -> vector<128x128xf32>
    %3 = arith.truncf %2 : vector<128x128xf32> to vector<128x128xbf16>
    %c0_3 = arith.constant 0 : index
    %c0_4 = arith.constant 0 : index
    %4 = vector.load %arg3[%c0_3, %c0_4] : memref<128x128xbf16, #tpu.memory_space<vmem>>, vector<128x128xbf16>
    tpu.vector_store %arg3[%c0_3, %c0_4], %3 {strides = array<i32>} : memref<128x128xbf16, #tpu.memory_space<vmem>>, vector<128x128xbf16>,
    %cst_5 = arith.constant dense<0.000000e+00> : vector<128xf32>
    %5 = vector.multi_reduction <add>, %2, %cst_5 [0] : vector<128x128xf32> to vector<128xf32>
    %6 = vector.shape_cast %5 : vector<128xf32> to vector<1x128xf32>
    %cst_6 = arith.constant 7.812500e-03 : f32
    %7 = vector.broadcast %cst_6 : f32 to vector<1x128xf32>
    %8 = arith.mulf %6, %7 : vector<1x128xf32>
    %9 = vector.broadcast %8 : vector<1x128xf32> to vector<128x128xf32>
    %10 = arith.subf %2, %9 : vector<128x128xf32>
    %11 = arith.mulf %10, %10 : vector<128x128xf32>
    %cst_7 = arith.constant dense<0.000000e+00> : vector<128xf32>
    %12 = vector.multi_reduction <add>, %11, %cst_7 [0] : vector<128x128xf32> to vector<128xf32>
    %13 = vector.shape_cast %12 : vector<128xf32> to vector<1x128xf32>
    %14 = tpu.concatenate %6, %13 in 0 : vector<1x128xf32>, vector<1x128xf32> -> vector<2x128xf32>
    %15 = vector.shape_cast %14 : vector<2x128xf32> to vector<1x2x128xf32>
    %c0_8 = arith.constant 0 : index
    %c0_9 = arith.constant 0 : index
    %c0_10 = arith.constant 0 : index
    %16 = vector.load %arg4[%c0_8, %c0_9, %c0_10] : memref<1x2x128xf32, #tpu.memory_space<vmem>>, vector<1x2x128xf32>
    tpu.vector_store %arg4[%c0_8, %c0_9, %c0_10], %15 {strides = array<i32>} : memref<1x2x128xf32, #tpu.memory_space<vmem>>, vector<1x2x128xf32>,
    return
  }
  func.func @transform_0(%arg0: i32) -> (i32, i32) {
    %c0_i32 = arith.constant 0 : i32
    %c0_i32_0 = arith.constant 0 : i32
    return %arg0, %c0_i32 : i32, i32
  }
  func.func @transform_1(%arg0: i32) -> (i32, i32) {
    %c0_i32 = arith.constant 0 : i32
    %c0_i32_0 = arith.constant 0 : i32
    %c0_i32_1 = arith.constant 0 : i32
    return %c0_i32, %c0_i32_0 : i32, i32
  }
  func.func @transform_2(%arg0: i32) -> (i32, i32) {
    %c0_i32 = arith.constant 0 : i32
    %c0_i32_0 = arith.constant 0 : i32
    return %arg0, %c0_i32 : i32, i32
  }
  func.func @transform_3(%arg0: i32) -> (i32, i32, i32) {
    %c0_i32 = arith.constant 0 : i32
    %c0_i32_0 = arith.constant 0 : i32
    %c0_i32_1 = arith.constant 0 : i32
    return %arg0, %c0_i32, %c0_i32_0 : i32, i32, i32
  }
}

module attributes {stable_mosaic.version = 11 : i64} {
  func.func @_bn_relu_gconv3x3_stats_kernel(%arg0: i32, %arg1: memref<1x8x8x128xbf16, #tpu.memory_space<vmem>>, %arg2: memref<1x128xf32, #tpu.memory_space<vmem>>, %arg3: memref<1x128xf32, #tpu.memory_space<vmem>>, %arg4: memref<9x128x128xbf16, #tpu.memory_space<vmem>>, %arg5: memref<1x8x8x128xbf16, #tpu.memory_space<vmem>>, %arg6: memref<1x2x128xf32, #tpu.memory_space<vmem>>) attributes {dimension_semantics = [#tpu.dimension_semantics<parallel>], iteration_bounds = array<i64: 2>, scalar_prefetch = 0 : i64, scratch_operands = 0 : i64, tpu.core_type = #tpu.core_type<tc>, window_params = [{transform_indices = @transform_0, window_bounds = array<i64: 1, 8, 8, 128>}, {pipeline_mode = #tpu.pipeline_mode<synchronous>, transform_indices = @transform_1, window_bounds = array<i64: 1, 128>}, {pipeline_mode = #tpu.pipeline_mode<synchronous>, transform_indices = @transform_2, window_bounds = array<i64: 1, 128>}, {pipeline_mode = #tpu.pipeline_mode<synchronous>, transform_indices = @transform_3, window_bounds = array<i64: 9, 128, 128>}, {transform_indices = @transform_4, window_bounds = array<i64: 1, 8, 8, 128>}, {transform_indices = @transform_5, window_bounds = array<i64: 1, 2, 128>}]} {
    %c0 = arith.constant 0 : index
    %c0_0 = arith.constant 0 : index
    %c0_1 = arith.constant 0 : index
    %c0_2 = arith.constant 0 : index
    %0 = vector.load %arg1[%c0, %c0_0, %c0_1, %c0_2] : memref<1x8x8x128xbf16, #tpu.memory_space<vmem>>, vector<1x8x8x128xbf16>
    %1 = arith.extf %0 : vector<1x8x8x128xbf16> to vector<1x8x8x128xf32>
    %c0_3 = arith.constant 0 : index
    %c0_4 = arith.constant 0 : index
    %2 = vector.load %arg2[%c0_3, %c0_4] : memref<1x128xf32, #tpu.memory_space<vmem>>, vector<1x128xf32>
    %3 = vector.shape_cast %2 : vector<1x128xf32> to vector<1x1x1x128xf32>
    %4 = vector.broadcast %3 : vector<1x1x1x128xf32> to vector<1x8x8x128xf32>
    %5 = arith.mulf %1, %4 : vector<1x8x8x128xf32>
    %c0_5 = arith.constant 0 : index
    %c0_6 = arith.constant 0 : index
    %6 = vector.load %arg3[%c0_5, %c0_6] : memref<1x128xf32, #tpu.memory_space<vmem>>, vector<1x128xf32>
    %7 = vector.shape_cast %6 : vector<1x128xf32> to vector<1x1x1x128xf32>
    %8 = vector.broadcast %7 : vector<1x1x1x128xf32> to vector<1x8x8x128xf32>
    %9 = arith.addf %5, %8 : vector<1x8x8x128xf32>
    %cst = arith.constant 0.000000e+00 : f32
    %10 = vector.broadcast %cst : f32 to vector<1x8x8x128xf32>
    %11 = arith.maximumf %9, %10 : vector<1x8x8x128xf32>
    %12 = arith.truncf %11 : vector<1x8x8x128xf32> to vector<1x8x8x128xbf16>
    %cst_7 = arith.constant 0.000000e+00 : bf16
    %13 = vector.broadcast %cst_7 : bf16 to vector<1x8x1x128xbf16>
    %14 = tpu.concatenate %13, %12, %13 in 2 : vector<1x8x1x128xbf16>, vector<1x8x8x128xbf16>, vector<1x8x1x128xbf16> -> vector<1x8x10x128xbf16>
    %cst_8 = arith.constant 0.000000e+00 : bf16
    %15 = vector.broadcast %cst_8 : bf16 to vector<1x1x10x128xbf16>
    %16 = tpu.concatenate %15, %14, %15 in 1 : vector<1x1x10x128xbf16>, vector<1x8x10x128xbf16>, vector<1x1x10x128xbf16> -> vector<1x10x10x128xbf16>
    %cst_9 = arith.constant 0.000000e+00 : f32
    %17 = vector.broadcast %cst_9 : f32 to vector<64x128xf32>
    %18 = vector.extract_strided_slice %16 {offsets = [0, 0, 0, 0], sizes = [1, 8, 8, 128], strides = [1, 1, 1, 1]} : vector<1x10x10x128xbf16> to vector<1x8x8x128xbf16>
    %19 = vector.shape_cast %18 : vector<1x8x8x128xbf16> to vector<64x128xbf16>
    %c0_10 = arith.constant 0 : index
    %c0_11 = arith.constant 0 : index
    %c0_12 = arith.constant 0 : index
    %20 = vector.load %arg4[%c0_10, %c0_11, %c0_12] : memref<9x128x128xbf16, #tpu.memory_space<vmem>>, vector<1x128x128xbf16>
    %21 = vector.shape_cast %20 : vector<1x128x128xbf16> to vector<128x128xbf16>
    %cst_13 = arith.constant dense<0.000000e+00> : vector<64x128xf32>
    %22 = tpu.matmul %19, %21, %cst_13 {dimension_numbers = #tpu.dot_dimension_numbers<[1], [0], [0], [1], [0, 0, 1, 1], [], []>} : vector<64x128xbf16>, vector<128x128xbf16>, vector<64x128xf32> -> vector<64x128xf32>
    %23 = arith.addf %17, %22 : vector<64x128xf32>
    %24 = vector.extract_strided_slice %16 {offsets = [0, 0, 1, 0], sizes = [1, 8, 8, 128], strides = [1, 1, 1, 1]} : vector<1x10x10x128xbf16> to vector<1x8x8x128xbf16>
    %25 = vector.shape_cast %24 : vector<1x8x8x128xbf16> to vector<64x128xbf16>
    %c1 = arith.constant 1 : index
    %c0_14 = arith.constant 0 : index
    %c0_15 = arith.constant 0 : index
    %26 = vector.load %arg4[%c1, %c0_14, %c0_15] : memref<9x128x128xbf16, #tpu.memory_space<vmem>>, vector<1x128x128xbf16>
    %27 = vector.shape_cast %26 : vector<1x128x128xbf16> to vector<128x128xbf16>
    %cst_16 = arith.constant dense<0.000000e+00> : vector<64x128xf32>
    %28 = tpu.matmul %25, %27, %cst_16 {dimension_numbers = #tpu.dot_dimension_numbers<[1], [0], [0], [1], [0, 0, 1, 1], [], []>} : vector<64x128xbf16>, vector<128x128xbf16>, vector<64x128xf32> -> vector<64x128xf32>
    %29 = arith.addf %23, %28 : vector<64x128xf32>
    %30 = vector.extract_strided_slice %16 {offsets = [0, 0, 2, 0], sizes = [1, 8, 8, 128], strides = [1, 1, 1, 1]} : vector<1x10x10x128xbf16> to vector<1x8x8x128xbf16>
    %31 = vector.shape_cast %30 : vector<1x8x8x128xbf16> to vector<64x128xbf16>
    %c2 = arith.constant 2 : index
    %c0_17 = arith.constant 0 : index
    %c0_18 = arith.constant 0 : index
    %32 = vector.load %arg4[%c2, %c0_17, %c0_18] : memref<9x128x128xbf16, #tpu.memory_space<vmem>>, vector<1x128x128xbf16>
    %33 = vector.shape_cast %32 : vector<1x128x128xbf16> to vector<128x128xbf16>
    %cst_19 = arith.constant dense<0.000000e+00> : vector<64x128xf32>
    %34 = tpu.matmul %31, %33, %cst_19 {dimension_numbers = #tpu.dot_dimension_numbers<[1], [0], [0], [1], [0, 0, 1, 1], [], []>} : vector<64x128xbf16>, vector<128x128xbf16>, vector<64x128xf32> -> vector<64x128xf32>
    %35 = arith.addf %29, %34 : vector<64x128xf32>
    %36 = vector.extract_strided_slice %16 {offsets = [0, 1, 0, 0], sizes = [1, 8, 8, 128], strides = [1, 1, 1, 1]} : vector<1x10x10x128xbf16> to vector<1x8x8x128xbf16>
    %37 = vector.shape_cast %36 : vector<1x8x8x128xbf16> to vector<64x128xbf16>
    %c3 = arith.constant 3 : index
    %c0_20 = arith.constant 0 : index
    %c0_21 = arith.constant 0 : index
    %38 = vector.load %arg4[%c3, %c0_20, %c0_21] : memref<9x128x128xbf16, #tpu.memory_space<vmem>>, vector<1x128x128xbf16>
    %39 = vector.shape_cast %38 : vector<1x128x128xbf16> to vector<128x128xbf16>
    %cst_22 = arith.constant dense<0.000000e+00> : vector<64x128xf32>
    %40 = tpu.matmul %37, %39, %cst_22 {dimension_numbers = #tpu.dot_dimension_numbers<[1], [0], [0], [1], [0, 0, 1, 1], [], []>} : vector<64x128xbf16>, vector<128x128xbf16>, vector<64x128xf32> -> vector<64x128xf32>
    %41 = arith.addf %35, %40 : vector<64x128xf32>
    %42 = vector.extract_strided_slice %16 {offsets = [0, 1, 1, 0], sizes = [1, 8, 8, 128], strides = [1, 1, 1, 1]} : vector<1x10x10x128xbf16> to vector<1x8x8x128xbf16>
    %43 = vector.shape_cast %42 : vector<1x8x8x128xbf16> to vector<64x128xbf16>
    %c4 = arith.constant 4 : index
    %c0_23 = arith.constant 0 : index
    %c0_24 = arith.constant 0 : index
    %44 = vector.load %arg4[%c4, %c0_23, %c0_24] : memref<9x128x128xbf16, #tpu.memory_space<vmem>>, vector<1x128x128xbf16>
    %45 = vector.shape_cast %44 : vector<1x128x128xbf16> to vector<128x128xbf16>
    %cst_25 = arith.constant dense<0.000000e+00> : vector<64x128xf32>
    %46 = tpu.matmul %43, %45, %cst_25 {dimension_numbers = #tpu.dot_dimension_numbers<[1], [0], [0], [1], [0, 0, 1, 1], [], []>} : vector<64x128xbf16>, vector<128x128xbf16>, vector<64x128xf32> -> vector<64x128xf32>
    %47 = arith.addf %41, %46 : vector<64x128xf32>
    %48 = vector.extract_strided_slice %16 {offsets = [0, 1, 2, 0], sizes = [1, 8, 8, 128], strides = [1, 1, 1, 1]} : vector<1x10x10x128xbf16> to vector<1x8x8x128xbf16>
    %49 = vector.shape_cast %48 : vector<1x8x8x128xbf16> to vector<64x128xbf16>
    %c5 = arith.constant 5 : index
    %c0_26 = arith.constant 0 : index
    %c0_27 = arith.constant 0 : index
    %50 = vector.load %arg4[%c5, %c0_26, %c0_27] : memref<9x128x128xbf16, #tpu.memory_space<vmem>>, vector<1x128x128xbf16>
    %51 = vector.shape_cast %50 : vector<1x128x128xbf16> to vector<128x128xbf16>
    %cst_28 = arith.constant dense<0.000000e+00> : vector<64x128xf32>
    %52 = tpu.matmul %49, %51, %cst_28 {dimension_numbers = #tpu.dot_dimension_numbers<[1], [0], [0], [1], [0, 0, 1, 1], [], []>} : vector<64x128xbf16>, vector<128x128xbf16>, vector<64x128xf32> -> vector<64x128xf32>
    %53 = arith.addf %47, %52 : vector<64x128xf32>
    %54 = vector.extract_strided_slice %16 {offsets = [0, 2, 0, 0], sizes = [1, 8, 8, 128], strides = [1, 1, 1, 1]} : vector<1x10x10x128xbf16> to vector<1x8x8x128xbf16>
    %55 = vector.shape_cast %54 : vector<1x8x8x128xbf16> to vector<64x128xbf16>
    %c6 = arith.constant 6 : index
    %c0_29 = arith.constant 0 : index
    %c0_30 = arith.constant 0 : index
    %56 = vector.load %arg4[%c6, %c0_29, %c0_30] : memref<9x128x128xbf16, #tpu.memory_space<vmem>>, vector<1x128x128xbf16>
    %57 = vector.shape_cast %56 : vector<1x128x128xbf16> to vector<128x128xbf16>
    %cst_31 = arith.constant dense<0.000000e+00> : vector<64x128xf32>
    %58 = tpu.matmul %55, %57, %cst_31 {dimension_numbers = #tpu.dot_dimension_numbers<[1], [0], [0], [1], [0, 0, 1, 1], [], []>} : vector<64x128xbf16>, vector<128x128xbf16>, vector<64x128xf32> -> vector<64x128xf32>
    %59 = arith.addf %53, %58 : vector<64x128xf32>
    %60 = vector.extract_strided_slice %16 {offsets = [0, 2, 1, 0], sizes = [1, 8, 8, 128], strides = [1, 1, 1, 1]} : vector<1x10x10x128xbf16> to vector<1x8x8x128xbf16>
    %61 = vector.shape_cast %60 : vector<1x8x8x128xbf16> to vector<64x128xbf16>
    %c7 = arith.constant 7 : index
    %c0_32 = arith.constant 0 : index
    %c0_33 = arith.constant 0 : index
    %62 = vector.load %arg4[%c7, %c0_32, %c0_33] : memref<9x128x128xbf16, #tpu.memory_space<vmem>>, vector<1x128x128xbf16>
    %63 = vector.shape_cast %62 : vector<1x128x128xbf16> to vector<128x128xbf16>
    %cst_34 = arith.constant dense<0.000000e+00> : vector<64x128xf32>
    %64 = tpu.matmul %61, %63, %cst_34 {dimension_numbers = #tpu.dot_dimension_numbers<[1], [0], [0], [1], [0, 0, 1, 1], [], []>} : vector<64x128xbf16>, vector<128x128xbf16>, vector<64x128xf32> -> vector<64x128xf32>
    %65 = arith.addf %59, %64 : vector<64x128xf32>
    %66 = vector.extract_strided_slice %16 {offsets = [0, 2, 2, 0], sizes = [1, 8, 8, 128], strides = [1, 1, 1, 1]} : vector<1x10x10x128xbf16> to vector<1x8x8x128xbf16>
    %67 = vector.shape_cast %66 : vector<1x8x8x128xbf16> to vector<64x128xbf16>
    %c8 = arith.constant 8 : index
    %c0_35 = arith.constant 0 : index
    %c0_36 = arith.constant 0 : index
    %68 = vector.load %arg4[%c8, %c0_35, %c0_36] : memref<9x128x128xbf16, #tpu.memory_space<vmem>>, vector<1x128x128xbf16>
    %69 = vector.shape_cast %68 : vector<1x128x128xbf16> to vector<128x128xbf16>
    %cst_37 = arith.constant dense<0.000000e+00> : vector<64x128xf32>
    %70 = tpu.matmul %67, %69, %cst_37 {dimension_numbers = #tpu.dot_dimension_numbers<[1], [0], [0], [1], [0, 0, 1, 1], [], []>} : vector<64x128xbf16>, vector<128x128xbf16>, vector<64x128xf32> -> vector<64x128xf32>
    %71 = arith.addf %65, %70 : vector<64x128xf32>
    %72 = vector.shape_cast %71 : vector<64x128xf32> to vector<1x8x8x128xf32>
    %73 = arith.truncf %72 : vector<1x8x8x128xf32> to vector<1x8x8x128xbf16>
    %c0_38 = arith.constant 0 : index
    %c0_39 = arith.constant 0 : index
    %c0_40 = arith.constant 0 : index
    %c0_41 = arith.constant 0 : index
    %74 = vector.load %arg5[%c0_38, %c0_39, %c0_40, %c0_41] : memref<1x8x8x128xbf16, #tpu.memory_space<vmem>>, vector<1x8x8x128xbf16>
    tpu.vector_store %arg5[%c0_38, %c0_39, %c0_40, %c0_41], %73 {strides = array<i32>} : memref<1x8x8x128xbf16, #tpu.memory_space<vmem>>, vector<1x8x8x128xbf16>,
    %cst_42 = arith.constant dense<0.000000e+00> : vector<128xf32>
    %75 = vector.multi_reduction <add>, %71, %cst_42 [0] : vector<64x128xf32> to vector<128xf32>
    %76 = vector.shape_cast %75 : vector<128xf32> to vector<1x128xf32>
    %cst_43 = arith.constant 1.562500e-02 : f32
    %77 = vector.broadcast %cst_43 : f32 to vector<1x128xf32>
    %78 = arith.mulf %76, %77 : vector<1x128xf32>
    %79 = vector.broadcast %78 : vector<1x128xf32> to vector<64x128xf32>
    %80 = arith.subf %71, %79 : vector<64x128xf32>
    %81 = arith.mulf %80, %80 : vector<64x128xf32>
    %cst_44 = arith.constant dense<0.000000e+00> : vector<128xf32>
    %82 = vector.multi_reduction <add>, %81, %cst_44 [0] : vector<64x128xf32> to vector<128xf32>
    %83 = vector.shape_cast %82 : vector<128xf32> to vector<1x128xf32>
    %84 = tpu.concatenate %76, %83 in 0 : vector<1x128xf32>, vector<1x128xf32> -> vector<2x128xf32>
    %85 = vector.shape_cast %84 : vector<2x128xf32> to vector<1x2x128xf32>
    %c0_45 = arith.constant 0 : index
    %c0_46 = arith.constant 0 : index
    %c0_47 = arith.constant 0 : index
    %86 = vector.load %arg6[%c0_45, %c0_46, %c0_47] : memref<1x2x128xf32, #tpu.memory_space<vmem>>, vector<1x2x128xf32>
    tpu.vector_store %arg6[%c0_45, %c0_46, %c0_47], %85 {strides = array<i32>} : memref<1x2x128xf32, #tpu.memory_space<vmem>>, vector<1x2x128xf32>,
    return
  }
  func.func @transform_0(%arg0: i32) -> (i32, i32, i32, i32) {
    %c0_i32 = arith.constant 0 : i32
    %c0_i32_0 = arith.constant 0 : i32
    %c0_i32_1 = arith.constant 0 : i32
    %c0_i32_2 = arith.constant 0 : i32
    return %arg0, %c0_i32, %c0_i32_0, %c0_i32_1 : i32, i32, i32, i32
  }
  func.func @transform_1(%arg0: i32) -> (i32, i32) {
    %c0_i32 = arith.constant 0 : i32
    %c0_i32_0 = arith.constant 0 : i32
    %c0_i32_1 = arith.constant 0 : i32
    return %c0_i32, %c0_i32_0 : i32, i32
  }
  func.func @transform_2(%arg0: i32) -> (i32, i32) {
    %c0_i32 = arith.constant 0 : i32
    %c0_i32_0 = arith.constant 0 : i32
    %c0_i32_1 = arith.constant 0 : i32
    return %c0_i32, %c0_i32_0 : i32, i32
  }
  func.func @transform_3(%arg0: i32) -> (i32, i32, i32) {
    %c0_i32 = arith.constant 0 : i32
    %c0_i32_0 = arith.constant 0 : i32
    %c0_i32_1 = arith.constant 0 : i32
    %c0_i32_2 = arith.constant 0 : i32
    return %c0_i32, %c0_i32_0, %c0_i32_1 : i32, i32, i32
  }
  func.func @transform_4(%arg0: i32) -> (i32, i32, i32, i32) {
    %c0_i32 = arith.constant 0 : i32
    %c0_i32_0 = arith.constant 0 : i32
    %c0_i32_1 = arith.constant 0 : i32
    %c0_i32_2 = arith.constant 0 : i32
    return %arg0, %c0_i32, %c0_i32_0, %c0_i32_1 : i32, i32, i32, i32
  }
  func.func @transform_5(%arg0: i32) -> (i32, i32, i32) {
    %c0_i32 = arith.constant 0 : i32
    %c0_i32_0 = arith.constant 0 : i32
    %c0_i32_1 = arith.constant 0 : i32
    return %arg0, %c0_i32, %c0_i32_0 : i32, i32, i32
  }
}

module attributes {stable_mosaic.version = 11 : i64} {
  func.func @_bn_relu_conv1x1_stats_kernel(%arg0: i32, %arg1: memref<128x128xbf16, #tpu.memory_space<vmem>>, %arg2: memref<1x128xf32, #tpu.memory_space<vmem>>, %arg3: memref<1x128xf32, #tpu.memory_space<vmem>>, %arg4: memref<128x256xbf16, #tpu.memory_space<vmem>>, %arg5: memref<128x256xbf16, #tpu.memory_space<vmem>>, %arg6: memref<1x2x256xf32, #tpu.memory_space<vmem>>) attributes {dimension_semantics = [#tpu.dimension_semantics<parallel>], iteration_bounds = array<i64: 1>, scalar_prefetch = 0 : i64, scratch_operands = 0 : i64, tpu.core_type = #tpu.core_type<tc>, window_params = [{transform_indices = @transform_0, window_bounds = array<i64: 128, 128>}, {pipeline_mode = #tpu.pipeline_mode<synchronous>, transform_indices = @transform_1, window_bounds = array<i64: 1, 128>}, {pipeline_mode = #tpu.pipeline_mode<synchronous>, transform_indices = @transform_2, window_bounds = array<i64: 1, 128>}, {pipeline_mode = #tpu.pipeline_mode<synchronous>, transform_indices = @transform_3, window_bounds = array<i64: 128, 256>}, {transform_indices = @transform_4, window_bounds = array<i64: 128, 256>}, {transform_indices = @transform_5, window_bounds = array<i64: 1, 2, 256>}]} {
    %c0 = arith.constant 0 : index
    %c0_0 = arith.constant 0 : index
    %0 = vector.load %arg1[%c0, %c0_0] : memref<128x128xbf16, #tpu.memory_space<vmem>>, vector<128x128xbf16>
    %1 = arith.extf %0 : vector<128x128xbf16> to vector<128x128xf32>
    %c0_1 = arith.constant 0 : index
    %c0_2 = arith.constant 0 : index
    %2 = vector.load %arg2[%c0_1, %c0_2] : memref<1x128xf32, #tpu.memory_space<vmem>>, vector<1x128xf32>
    %3 = vector.broadcast %2 : vector<1x128xf32> to vector<128x128xf32>
    %4 = arith.mulf %1, %3 : vector<128x128xf32>
    %c0_3 = arith.constant 0 : index
    %c0_4 = arith.constant 0 : index
    %5 = vector.load %arg3[%c0_3, %c0_4] : memref<1x128xf32, #tpu.memory_space<vmem>>, vector<1x128xf32>
    %6 = vector.broadcast %5 : vector<1x128xf32> to vector<128x128xf32>
    %7 = arith.addf %4, %6 : vector<128x128xf32>
    %cst = arith.constant 0.000000e+00 : f32
    %8 = vector.broadcast %cst : f32 to vector<128x128xf32>
    %9 = arith.maximumf %7, %8 : vector<128x128xf32>
    %10 = arith.truncf %9 : vector<128x128xf32> to vector<128x128xbf16>
    %c0_5 = arith.constant 0 : index
    %c0_6 = arith.constant 0 : index
    %11 = vector.load %arg4[%c0_5, %c0_6] : memref<128x256xbf16, #tpu.memory_space<vmem>>, vector<128x256xbf16>
    %cst_7 = arith.constant dense<0.000000e+00> : vector<128x256xf32>
    %12 = tpu.matmul %10, %11, %cst_7 {dimension_numbers = #tpu.dot_dimension_numbers<[1], [0], [0], [1], [0, 0, 1, 1], [], []>} : vector<128x128xbf16>, vector<128x256xbf16>, vector<128x256xf32> -> vector<128x256xf32>
    %13 = arith.truncf %12 : vector<128x256xf32> to vector<128x256xbf16>
    %c0_8 = arith.constant 0 : index
    %c0_9 = arith.constant 0 : index
    %14 = vector.load %arg5[%c0_8, %c0_9] : memref<128x256xbf16, #tpu.memory_space<vmem>>, vector<128x256xbf16>
    tpu.vector_store %arg5[%c0_8, %c0_9], %13 {strides = array<i32>} : memref<128x256xbf16, #tpu.memory_space<vmem>>, vector<128x256xbf16>,
    %cst_10 = arith.constant dense<0.000000e+00> : vector<256xf32>
    %15 = vector.multi_reduction <add>, %12, %cst_10 [0] : vector<128x256xf32> to vector<256xf32>
    %16 = vector.shape_cast %15 : vector<256xf32> to vector<1x256xf32>
    %cst_11 = arith.constant 7.812500e-03 : f32
    %17 = vector.broadcast %cst_11 : f32 to vector<1x256xf32>
    %18 = arith.mulf %16, %17 : vector<1x256xf32>
    %19 = vector.broadcast %18 : vector<1x256xf32> to vector<128x256xf32>
    %20 = arith.subf %12, %19 : vector<128x256xf32>
    %21 = arith.mulf %20, %20 : vector<128x256xf32>
    %cst_12 = arith.constant dense<0.000000e+00> : vector<256xf32>
    %22 = vector.multi_reduction <add>, %21, %cst_12 [0] : vector<128x256xf32> to vector<256xf32>
    %23 = vector.shape_cast %22 : vector<256xf32> to vector<1x256xf32>
    %24 = tpu.concatenate %16, %23 in 0 : vector<1x256xf32>, vector<1x256xf32> -> vector<2x256xf32>
    %25 = vector.shape_cast %24 : vector<2x256xf32> to vector<1x2x256xf32>
    %c0_13 = arith.constant 0 : index
    %c0_14 = arith.constant 0 : index
    %c0_15 = arith.constant 0 : index
    %26 = vector.load %arg6[%c0_13, %c0_14, %c0_15] : memref<1x2x256xf32, #tpu.memory_space<vmem>>, vector<1x2x256xf32>
    tpu.vector_store %arg6[%c0_13, %c0_14, %c0_15], %25 {strides = array<i32>} : memref<1x2x256xf32, #tpu.memory_space<vmem>>, vector<1x2x256xf32>,
    return
  }
  func.func @transform_0(%arg0: i32) -> (i32, i32) {
    %c0_i32 = arith.constant 0 : i32
    %c0_i32_0 = arith.constant 0 : i32
    return %arg0, %c0_i32 : i32, i32
  }
  func.func @transform_1(%arg0: i32) -> (i32, i32) {
    %c0_i32 = arith.constant 0 : i32
    %c0_i32_0 = arith.constant 0 : i32
    %c0_i32_1 = arith.constant 0 : i32
    return %c0_i32, %c0_i32_0 : i32, i32
  }
  func.func @transform_2(%arg0: i32) -> (i32, i32) {
    %c0_i32 = arith.constant 0 : i32
    %c0_i32_0 = arith.constant 0 : i32
    %c0_i32_1 = arith.constant 0 : i32
    return %c0_i32, %c0_i32_0 : i32, i32
  }
  func.func @transform_3(%arg0: i32) -> (i32, i32) {
    %c0_i32 = arith.constant 0 : i32
    %c0_i32_0 = arith.constant 0 : i32
    %c0_i32_1 = arith.constant 0 : i32
    return %c0_i32, %c0_i32_0 : i32, i32
  }
  func.func @transform_4(%arg0: i32) -> (i32, i32) {
    %c0_i32 = arith.constant 0 : i32
    %c0_i32_0 = arith.constant 0 : i32
    return %arg0, %c0_i32 : i32, i32
  }
  func.func @transform_5(%arg0: i32) -> (i32, i32, i32) {
    %c0_i32 = arith.constant 0 : i32
    %c0_i32_0 = arith.constant 0 : i32
    %c0_i32_1 = arith.constant 0 : i32
    return %arg0, %c0_i32, %c0_i32_0 : i32, i32, i32
  }
}

module attributes {stable_mosaic.version = 11 : i64} {
  func.func @_bn_residual_relu_kernel(%arg0: i32, %arg1: memref<128x256xbf16, #tpu.memory_space<vmem>>, %arg2: memref<1x256xf32, #tpu.memory_space<vmem>>, %arg3: memref<1x256xf32, #tpu.memory_space<vmem>>, %arg4: memref<128x256xbf16, #tpu.memory_space<vmem>>, %arg5: memref<128x256xf32, #tpu.memory_space<vmem>>) attributes {dimension_semantics = [#tpu.dimension_semantics<parallel>], iteration_bounds = array<i64: 1>, scalar_prefetch = 0 : i64, scratch_operands = 0 : i64, tpu.core_type = #tpu.core_type<tc>, window_params = [{transform_indices = @transform_0, window_bounds = array<i64: 128, 256>}, {pipeline_mode = #tpu.pipeline_mode<synchronous>, transform_indices = @transform_1, window_bounds = array<i64: 1, 256>}, {pipeline_mode = #tpu.pipeline_mode<synchronous>, transform_indices = @transform_2, window_bounds = array<i64: 1, 256>}, {transform_indices = @transform_3, window_bounds = array<i64: 128, 256>}, {transform_indices = @transform_4, window_bounds = array<i64: 128, 256>}]} {
    %c0 = arith.constant 0 : index
    %c0_0 = arith.constant 0 : index
    %0 = vector.load %arg1[%c0, %c0_0] : memref<128x256xbf16, #tpu.memory_space<vmem>>, vector<128x256xbf16>
    %1 = arith.extf %0 : vector<128x256xbf16> to vector<128x256xf32>
    %c0_1 = arith.constant 0 : index
    %c0_2 = arith.constant 0 : index
    %2 = vector.load %arg2[%c0_1, %c0_2] : memref<1x256xf32, #tpu.memory_space<vmem>>, vector<1x256xf32>
    %3 = vector.broadcast %2 : vector<1x256xf32> to vector<128x256xf32>
    %4 = arith.mulf %1, %3 : vector<128x256xf32>
    %c0_3 = arith.constant 0 : index
    %c0_4 = arith.constant 0 : index
    %5 = vector.load %arg3[%c0_3, %c0_4] : memref<1x256xf32, #tpu.memory_space<vmem>>, vector<1x256xf32>
    %6 = vector.broadcast %5 : vector<1x256xf32> to vector<128x256xf32>
    %7 = arith.addf %4, %6 : vector<128x256xf32>
    %c0_5 = arith.constant 0 : index
    %c0_6 = arith.constant 0 : index
    %8 = vector.load %arg4[%c0_5, %c0_6] : memref<128x256xbf16, #tpu.memory_space<vmem>>, vector<128x256xbf16>
    %9 = arith.extf %8 : vector<128x256xbf16> to vector<128x256xf32>
    %10 = arith.addf %7, %9 : vector<128x256xf32>
    %cst = arith.constant 0.000000e+00 : f32
    %11 = vector.broadcast %cst : f32 to vector<128x256xf32>
    %12 = arith.maximumf %10, %11 : vector<128x256xf32>
    %c0_7 = arith.constant 0 : index
    %c0_8 = arith.constant 0 : index
    %13 = vector.load %arg5[%c0_7, %c0_8] : memref<128x256xf32, #tpu.memory_space<vmem>>, vector<128x256xf32>
    tpu.vector_store %arg5[%c0_7, %c0_8], %12 {strides = array<i32>} : memref<128x256xf32, #tpu.memory_space<vmem>>, vector<128x256xf32>,
    return
  }
  func.func @transform_0(%arg0: i32) -> (i32, i32) {
    %c0_i32 = arith.constant 0 : i32
    %c0_i32_0 = arith.constant 0 : i32
    return %arg0, %c0_i32 : i32, i32
  }
  func.func @transform_1(%arg0: i32) -> (i32, i32) {
    %c0_i32 = arith.constant 0 : i32
    %c0_i32_0 = arith.constant 0 : i32
    %c0_i32_1 = arith.constant 0 : i32
    return %c0_i32, %c0_i32_0 : i32, i32
  }
  func.func @transform_2(%arg0: i32) -> (i32, i32) {
    %c0_i32 = arith.constant 0 : i32
    %c0_i32_0 = arith.constant 0 : i32
    %c0_i32_1 = arith.constant 0 : i32
    return %c0_i32, %c0_i32_0 : i32, i32
  }
  func.func @transform_3(%arg0: i32) -> (i32, i32) {
    %c0_i32 = arith.constant 0 : i32
    %c0_i32_0 = arith.constant 0 : i32
    return %arg0, %c0_i32 : i32, i32
  }
  func.func @transform_4(%arg0: i32) -> (i32, i32) {
    %c0_i32 = arith.constant 0 : i32
    %c0_i32_0 = arith.constant 0 : i32
    return %arg0, %c0_i32 : i32, i32
  }
}

</mosaic_0001>

<llo_original>
// kernel: bottleneck_forward_nhwc.4
$region0: #{bottleneck_forward_nhwc.4}
  #allocation0 [shape = 'u32[]', space=smem, size = 0x4, offset = 0x4, fixed_abs, tag = 'smem constant byte address 0x4 - core index']
  #allocation1 [shape = 'u32[72,128]{1,0:T(1,128)}', space=vmem, size = 0x9000, scoped, tag = 'internal scratch']
  %s0 = inlined_call_operand.vmem [shape: bf16[128,256], index: 0, kind: input, shape index: {}]
  %s1 = inlined_call_operand.vmem [shape: bf16[256,128], index: 1, kind: input, shape index: {}]
  %s2 = inlined_call_operand.vmem [shape: bf16[128,128], index: 2, kind: output, shape index: {0}]
  %s3 = inlined_call_operand.vmem [shape: f32[1,2,128], index: 3, kind: output, shape index: {1}]
  %4 = xla_tuple %s2, %s3
  %s5 = sld [smem:[#allocation0]]
  $region26: #{bottleneck_forward_nhwc.4} parent=0
    _
  %s7 = ssub.s32 1, %s5
  %s8 = scalar_select 0, %s7, %s5
  // Predicated region
  $region2: #{bottleneck_forward_nhwc.4} parent=0 // pred_check
    _
  $region3: #{bottleneck_forward_nhwc.4} parent=0 // pred_check_branch
    %10 = sbr.rel (0) target = $region5
  $region4: #{bottleneck_forward_nhwc.4} parent=0 // pred_region
    _
  $region5: #{bottleneck_forward_nhwc.4} parent=0 // pred_fallthru
    _
  // Predicated region
  $region6: #{bottleneck_forward_nhwc.4} parent=0 // pred_check
    _
  $region7: #{bottleneck_forward_nhwc.4} parent=0 // pred_check_branch
    %12 = sbr.rel (0) target = $region9
  $region8: #{bottleneck_forward_nhwc.4} parent=0 // pred_region
    _
  $region9: #{bottleneck_forward_nhwc.4} parent=0 // pred_fallthru
    _
  %v13 = vld [vmem:[%s0] sm:$0xff]
  %v14 = vld [vmem:[%s0 + $0x8] sm:$0xff]
  %v15 = vld [vmem:[%s0 + $0x10] sm:$0xff]
  %v16 = vld [vmem:[%s0 + $0x18] sm:$0xff]
  %v17 = vld [vmem:[%s0 + $0x20] sm:$0xff]
  %v18 = vld [vmem:[%s0 + $0x28] sm:$0xff]
  %v19 = vld [vmem:[%s0 + $0x30] sm:$0xff]
  %v20 = vld [vmem:[%s0 + $0x38] sm:$0xff]
  %v21 = vld [vmem:[%s0 + $0x40] sm:$0xff]
  %v22 = vld [vmem:[%s0 + $0x48] sm:$0xff]
  %v23 = vld [vmem:[%s0 + $0x50] sm:$0xff]
  %v24 = vld [vmem:[%s0 + $0x58] sm:$0xff]
  %v25 = vld [vmem:[%s0 + $0x60] sm:$0xff]
  %v26 = vld [vmem:[%s0 + $0x68] sm:$0xff]
  %v27 = vld [vmem:[%s0 + $0x70] sm:$0xff]
  %v28 = vld [vmem:[%s0 + $0x78] sm:$0xff]
  %v29 = vld [vmem:[%s1] sm:$0xf]
  %v30 = vld [vmem:[%s1 + $0x4] sm:$0xf]
  %v31 = vld [vmem:[%s1 + $0x8] sm:$0xf]
  %v32 = vld [vmem:[%s1 + $0xc] sm:$0xf]
  %v33 = vld [vmem:[%s1 + $0x10] sm:$0xf]
  %v34 = vld [vmem:[%s1 + $0x14] sm:$0xf]
  %v35 = vld [vmem:[%s1 + $0x18] sm:$0xf]
  %v36 = vld [vmem:[%s1 + $0x1c] sm:$0xf]
  %v37 = vld [vmem:[%s1 + $0x20] sm:$0xf]
  %v38 = vld [vmem:[%s1 + $0x24] sm:$0xf]
  %v39 = vld [vmem:[%s1 + $0x28] sm:$0xf]
  %v40 = vld [vmem:[%s1 + $0x2c] sm:$0xf]
  %v41 = vld [vmem:[%s1 + $0x30] sm:$0xf]
  %v42 = vld [vmem:[%s1 + $0x34] sm:$0xf]
  %v43 = vld [vmem:[%s1 + $0x38] sm:$0xf]
  %v44 = vld [vmem:[%s1 + $0x3c] sm:$0xf]
  %v45 = vld [vmem:[%s1 + $0x40] sm:$0xf]
  %v46 = vld [vmem:[%s1 + $0x44] sm:$0xf]
  %v47 = vld [vmem:[%s1 + $0x48] sm:$0xf]
  %v48 = vld [vmem:[%s1 + $0x4c] sm:$0xf]
  %v49 = vld [vmem:[%s1 + $0x50] sm:$0xf]
  %v50 = vld [vmem:[%s1 + $0x54] sm:$0xf]
  %v51 = vld [vmem:[%s1 + $0x58] sm:$0xf]
  %v52 = vld [vmem:[%s1 + $0x5c] sm:$0xf]
  %v53 = vld [vmem:[%s1 + $0x60] sm:$0xf]
  %v54 = vld [vmem:[%s1 + $0x64] sm:$0xf]
  %v55 = vld [vmem:[%s1 + $0x68] sm:$0xf]
  %v56 = vld [vmem:[%s1 + $0x6c] sm:$0xf]
  %v57 = vld [vmem:[%s1 + $0x70] sm:$0xf]
  %v58 = vld [vmem:[%s1 + $0x74] sm:$0xf]
  %v59 = vld [vmem:[%s1 + $0x78] sm:$0xf]
  %v60 = vld [vmem:[%s1 + $0x7c] sm:$0xf]
  %v77 = vunpack.c.l.b16 %v13
  %v78 = vunpack.c.h.b16 %v13
  %v79 = vunpack.c.l.b16 %v14
  %v80 = vunpack.c.h.b16 %v14
  %v81 = vunpack.c.l.b16 %v15
  %v82 = vunpack.c.h.b16 %v15
  %v83 = vunpack.c.l.b16 %v16
  %v84 = vunpack.c.h.b16 %v16
  %v85 = vunpack.c.l.b16 %v17
  %v86 = vunpack.c.h.b16 %v17
  %v87 = vunpack.c.l.b16 %v18
  %v88 = vunpack.c.h.b16 %v18
  %v89 = vunpack.c.l.b16 %v19
  %v90 = vunpack.c.h.b16 %v19
  %v91 = vunpack.c.l.b16 %v20
  %v92 = vunpack.c.h.b16 %v20
  %v93 = vunpack.c.l.b16 %v21
  %v94 = vunpack.c.h.b16 %v21
  %v95 = vunpack.c.l.b16 %v22
  %v96 = vunpack.c.h.b16 %v22
  %v97 = vunpack.c.l.b16 %v23
  %v98 = vunpack.c.h.b16 %v23
  %v99 = vunpack.c.l.b16 %v24
  %v100 = vunpack.c.h.b16 %v24
  %v101 = vunpack.c.l.b16 %v25
  %v102 = vunpack.c.h.b16 %v25
  %v103 = vunpack.c.l.b16 %v26
  %v104 = vunpack.c.h.b16 %v26
  %v105 = vunpack.c.l.b16 %v27
  %v106 = vunpack.c.h.b16 %v27
  %v107 = vunpack.c.l.b16 %v28
  %v108 = vunpack.c.h.b16 %v28
  %v109 = vpack.c.b16 %v79, %v77
  %v110 = vpack.c.b16 %v80, %v78
  %v111 = vpack.c.b16 %v83, %v81
  %v112 = vpack.c.b16 %v84, %v82
  %v113 = vpack.c.b16 %v87, %v85
  %v114 = vpack.c.b16 %v88, %v86
  %v115 = vpack.c.b16 %v91, %v89
  %v116 = vpack.c.b16 %v92, %v90
  %v117 = vpack.c.b16 %v95, %v93
  %v118 = vpack.c.b16 %v96, %v94
  %v119 = vpack.c.b16 %v99, %v97
  %v120 = vpack.c.b16 %v100, %v98
  %v121 = vpack.c.b16 %v103, %v101
  %v122 = vpack.c.b16 %v104, %v102
  %v123 = vpack.c.b16 %v107, %v105
  %v124 = vpack.c.b16 %v108, %v106
  %v173 = vunpack.c.l.b16 %v29
  %v174 = vunpack.c.l.b16 %v30
  %v175 = vunpack.c.l.b16 %v31
  %v176 = vunpack.c.l.b16 %v32
  %v177 = vunpack.c.l.b16 %v33
  %v178 = vunpack.c.l.b16 %v34
  %v179 = vunpack.c.l.b16 %v35
  %v180 = vunpack.c.l.b16 %v36
  %v181 = vunpack.c.l.b16 %v37
  %v182 = vunpack.c.l.b16 %v38
  %v183 = vunpack.c.l.b16 %v39
  %v184 = vunpack.c.l.b16 %v40
  %v185 = vunpack.c.l.b16 %v41
  %v186 = vunpack.c.l.b16 %v42
  %v187 = vunpack.c.l.b16 %v43
  %v188 = vunpack.c.l.b16 %v44
  %v189 = vunpack.c.l.b16 %v45
  %v190 = vunpack.c.l.b16 %v46
  %v191 = vunpack.c.l.b16 %v47
  %v192 = vunpack.c.l.b16 %v48
  %v193 = vunpack.c.l.b16 %v49
  %v194 = vunpack.c.l.b16 %v50
  %v195 = vunpack.c.l.b16 %v51
  %v196 = vunpack.c.l.b16 %v52
  %v197 = vunpack.c.l.b16 %v53
  %v198 = vunpack.c.l.b16 %v54
  %v199 = vunpack.c.l.b16 %v55
  %v200 = vunpack.c.l.b16 %v56
  %v201 = vunpack.c.l.b16 %v57
  %v202 = vunpack.c.l.b16 %v58
  %v203 = vunpack.c.l.b16 %v59
  %v204 = vunpack.c.l.b16 %v60
  %v205 = vpack.c.b16 %v174, %v173
  %v206 = vpack.c.b16 %v176, %v175
  %v207 = vpack.c.b16 %v178, %v177
  %v208 = vpack.c.b16 %v180, %v179
  %v209 = vpack.c.b16 %v182, %v181
  %v210 = vpack.c.b16 %v184, %v183
  %v211 = vpack.c.b16 %v186, %v185
  %v212 = vpack.c.b16 %v188, %v187
  %v213 = vpack.c.b16 %v190, %v189
  %v214 = vpack.c.b16 %v192, %v191
  %v215 = vpack.c.b16 %v194, %v193
  %v216 = vpack.c.b16 %v196, %v195
  %v217 = vpack.c.b16 %v198, %v197
  %v218 = vpack.c.b16 %v200, %v199
  %v219 = vpack.c.b16 %v202, %v201
  %v220 = vpack.c.b16 %v204, %v203
  %237 = vmatpush.bf16.msra.mxu0 %v212
  %238 = vmatpush.bf16.msra.mxu0 %v211
  %239 = vmatpush.bf16.msra.mxu0 %v210
  %240 = vmatpush.bf16.msra.mxu0 %v209
  %241 = vmatpush.bf16.msra.mxu0 %v208
  %242 = vmatpush.bf16.msra.mxu0 %v207
  %243 = vmatpush.bf16.msra.mxu0 %v206
  %244 = vmatpush.bf16.msra.mxu0 %v205
  %245 = vmatmul.bf16.gmra.mxu0 %v109
  %v246 = vpop.f32.mrf.mxu0
  %v247 = vadd.f32 0.0, %v246
  %v248 = vpop.f32.mrf.mxu0
  %v249 = vadd.f32 0.0, %v248
  %250 = vmatmul.bf16.gmra.mxu0 %v111
  %v251 = vpop.f32.mrf.mxu0
  %v252 = vadd.f32 0.0, %v251
  %v253 = vpop.f32.mrf.mxu0
  %v254 = vadd.f32 0.0, %v253
  %255 = vmatmul.bf16.gmra.mxu0 %v113
  %v256 = vpop.f32.mrf.mxu0
  %v257 = vadd.f32 0.0, %v256
  %v258 = vpop.f32.mrf.mxu0
  %v259 = vadd.f32 0.0, %v258
  %260 = vmatmul.bf16.gmra.mxu0 %v115
  %v261 = vpop.f32.mrf.mxu0
  %v262 = vadd.f32 0.0, %v261
  %v263 = vpop.f32.mrf.mxu0
  %v264 = vadd.f32 0.0, %v263
  %265 = vmatmul.bf16.gmra.mxu0 %v117
  %v266 = vpop.f32.mrf.mxu0
  %v267 = vadd.f32 0.0, %v266
  %v268 = vpop.f32.mrf.mxu0
  %v269 = vadd.f32 0.0, %v268
  %270 = vmatmul.bf16.gmra.mxu0 %v119
  %v271 = vpop.f32.mrf.mxu0
  %v272 = vadd.f32 0.0, %v271
  %v273 = vpop.f32.mrf.mxu0
  %v274 = vadd.f32 0.0, %v273
  %275 = vmatmul.bf16.gmra.mxu0 %v121
  %v276 = vpop.f32.mrf.mxu0
  %v277 = vadd.f32 0.0, %v276
  %v278 = vpop.f32.mrf.mxu0
  %v279 = vadd.f32 0.0, %v278
  %280 = vmatmul.bf16.gmra.mxu0 %v123
  %v281 = vpop.f32.mrf.mxu0
  %v282 = vadd.f32 0.0, %v281
  %v283 = vpop.f32.mrf.mxu0
  %v284 = vadd.f32 0.0, %v283
  %285 = vdwg.mxu0
  %286 = vmatpush.bf16.msra.mxu0 %v220
  %287 = vmatpush.bf16.msra.mxu0 %v219
  %288 = vmatpush.bf16.msra.mxu0 %v218
  %289 = vmatpush.bf16.msra.mxu0 %v217
  %290 = vmatpush.bf16.msra.mxu0 %v216
  %291 = vmatpush.bf16.msra.mxu0 %v215
  %292 = vmatpush.bf16.msra.mxu0 %v214
  %293 = vmatpush.bf16.msra.mxu0 %v213
  %294 = vmatmul.bf16.gmra.mxu0 %v110
  %v295 = vpop.f32.mrf.mxu0
  %v296 = vadd.f32 %v247, %v295
  %v297 = vpop.f32.mrf.mxu0
  %v298 = vadd.f32 %v249, %v297
  %299 = vmatmul.bf16.gmra.mxu0 %v112
  %v300 = vpop.f32.mrf.mxu0
  %v301 = vadd.f32 %v252, %v300
  %v302 = vpop.f32.mrf.mxu0
  %v303 = vadd.f32 %v254, %v302
  %304 = vmatmul.bf16.gmra.mxu0 %v114
  %v305 = vpop.f32.mrf.mxu0
  %v306 = vadd.f32 %v257, %v305
  %v307 = vpop.f32.mrf.mxu0
  %v308 = vadd.f32 %v259, %v307
  %309 = vmatmul.bf16.gmra.mxu0 %v116
  %v310 = vpop.f32.mrf.mxu0
  %v311 = vadd.f32 %v262, %v310
  %v312 = vpop.f32.mrf.mxu0
  %v313 = vadd.f32 %v264, %v312
  %314 = vmatmul.bf16.gmra.mxu0 %v118
  %v315 = vpop.f32.mrf.mxu0
  %v316 = vadd.f32 %v267, %v315
  %v317 = vpop.f32.mrf.mxu0
  %v318 = vadd.f32 %v269, %v317
  %319 = vmatmul.bf16.gmra.mxu0 %v120
  %v320 = vpop.f32.mrf.mxu0
  %v321 = vadd.f32 %v272, %v320
  %v322 = vpop.f32.mrf.mxu0
  %v323 = vadd.f32 %v274, %v322
  %324 = vmatmul.bf16.gmra.mxu0 %v122
  %v325 = vpop.f32.mrf.mxu0
  %v326 = vadd.f32 %v277, %v325
  %v327 = vpop.f32.mrf.mxu0
  %v328 = vadd.f32 %v279, %v327
  %329 = vmatmul.bf16.gmra.mxu0 %v124
  %v330 = vpop.f32.mrf.mxu0
  %v331 = vadd.f32 %v282, %v330
  %v332 = vpop.f32.mrf.mxu0
  %v333 = vadd.f32 %v284, %v332
  %334 = vdwg.mxu0
  %v335 = vpack.c.bf16 %v296, %v296
  %v336 = vpack.c.bf16 %v298, %v298
  %v337 = vpack.c.bf16 %v301, %v301
  %v338 = vpack.c.bf16 %v303, %v303
  %v339 = vpack.c.bf16 %v306, %v306
  %v340 = vpack.c.bf16 %v308, %v308
  %v341 = vpack.c.bf16 %v311, %v311
  %v342 = vpack.c.bf16 %v313, %v313
  %v343 = vpack.c.bf16 %v316, %v316
  %v344 = vpack.c.bf16 %v318, %v318
  %v345 = vpack.c.bf16 %v321, %v321
  %v346 = vpack.c.bf16 %v323, %v323
  %v347 = vpack.c.bf16 %v326, %v326
  %v348 = vpack.c.bf16 %v328, %v328
  %v349 = vpack.c.bf16 %v331, %v331
  %v350 = vpack.c.bf16 %v333, %v333
  %351 = vst [vmem:[%s2] sm:$0xf] %v335
  %352 = vst [vmem:[%s2 + $0x4] sm:$0xf] %v336
  %353 = vst [vmem:[%s2 + $0x8] sm:$0xf] %v337
  %354 = vst [vmem:[%s2 + $0xc] sm:$0xf] %v338
  %355 = vst [vmem:[%s2 + $0x10] sm:$0xf] %v339
  %356 = vst [vmem:[%s2 + $0x14] sm:$0xf] %v340
  %357 = vst [vmem:[%s2 + $0x18] sm:$0xf] %v341
  %358 = vst [vmem:[%s2 + $0x1c] sm:$0xf] %v342
  %359 = vst [vmem:[%s2 + $0x20] sm:$0xf] %v343
  %360 = vst [vmem:[%s2 + $0x24] sm:$0xf] %v344
  %361 = vst [vmem:[%s2 + $0x28] sm:$0xf] %v345
  %362 = vst [vmem:[%s2 + $0x2c] sm:$0xf] %v346
  %363 = vst [vmem:[%s2 + $0x30] sm:$0xf] %v347
  %364 = vst [vmem:[%s2 + $0x34] sm:$0xf] %v348
  %365 = vst [vmem:[%s2 + $0x38] sm:$0xf] %v349
  %366 = vst [vmem:[%s2 + $0x3c] sm:$0xf] %v350
  %v367 = vadd.f32 %v296, %v298
  %v368 = vadd.f32 %v367, %v301
  %v369 = vadd.f32 %v368, %v303
  %v370 = vadd.f32 %v369, %v306
  %v371 = vadd.f32 %v370, %v308
  %v372 = vadd.f32 %v371, %v311
  %v373 = vadd.f32 %v372, %v313
  %v374 = vadd.f32 %v373, %v316
  %v375 = vadd.f32 %v374, %v318
  %v376 = vadd.f32 %v375, %v321
  %v377 = vadd.f32 %v376, %v323
  %v378 = vadd.f32 %v377, %v326
  %v379 = vadd.f32 %v378, %v328
  %v380 = vadd.f32 %v379, %v331
  %v381 = vadd.f32 %v380, %v333
  %v382 = vrot.slane %v381, 4
  %v383 = vadd.f32 %v381, %v382
  %v384 = vrot.slane %v383, 2
  %v385 = vadd.f32 %v383, %v384
  %v386 = vrot.slane %v385, 1
  %v387 = vadd.f32 %v385, %v386
  %v388 = vmul.f32 %v387, 0.0078125
  %v389 = vsub.f32 %v296, %v388
  %v390 = vsub.f32 %v298, %v388
  %v391 = vsub.f32 %v301, %v388
  %v392 = vsub.f32 %v303, %v388
  %v393 = vsub.f32 %v306, %v388
  %v394 = vsub.f32 %v308, %v388
  %v395 = vsub.f32 %v311, %v388
  %v396 = vsub.f32 %v313, %v388
  %v397 = vsub.f32 %v316, %v388
  %v398 = vsub.f32 %v318, %v388
  %v399 = vsub.f32 %v321, %v388
  %v400 = vsub.f32 %v323, %v388
  %v401 = vsub.f32 %v326, %v388
  %v402 = vsub.f32 %v328, %v388
  %v403 = vsub.f32 %v331, %v388
  %v404 = vsub.f32 %v333, %v388
  %v405 = vmul.f32 %v389, %v389
  %v406 = vmul.f32 %v390, %v390
  %v407 = vmul.f32 %v391, %v391
  %v408 = vmul.f32 %v392, %v392
  %v409 = vmul.f32 %v393, %v393
  %v410 = vmul.f32 %v394, %v394
  %v411 = vmul.f32 %v395, %v395
  %v412 = vmul.f32 %v396, %v396
  %v413 = vmul.f32 %v397, %v397
  %v414 = vmul.f32 %v398, %v398
  %v415 = vmul.f32 %v399, %v399
  %v416 = vmul.f32 %v400, %v400
  %v417 = vmul.f32 %v401, %v401
  %v418 = vmul.f32 %v402, %v402
  %v419 = vmul.f32 %v403, %v403
  %v420 = vmul.f32 %v404, %v404
  %v421 = vadd.f32 %v405, %v406
  %v422 = vadd.f32 %v421, %v407
  %v423 = vadd.f32 %v422, %v408
  %v424 = vadd.f32 %v423, %v409
  %v425 = vadd.f32 %v424, %v410
  %v426 = vadd.f32 %v425, %v411
  %v427 = vadd.f32 %v426, %v412
  %v428 = vadd.f32 %v427, %v413
  %v429 = vadd.f32 %v428, %v414
  %v430 = vadd.f32 %v429, %v415
  %v431 = vadd.f32 %v430, %v416
  %v432 = vadd.f32 %v431, %v417
  %v433 = vadd.f32 %v432, %v418
  %v434 = vadd.f32 %v433, %v419
  %v435 = vadd.f32 %v434, %v420
  %v436 = vrot.slane %v435, 4
  %v437 = vadd.f32 %v435, %v436
  %v438 = vrot.slane %v437, 2
  %v439 = vadd.f32 %v437, %v438
  %v440 = vrot.slane %v439, 1
  %v441 = vadd.f32 %v439, %v440
  %vm442 = vcmask 1040384
  %v443 = vsel %vm442, %v387, %v441
  %444 = vst [vmem:[%s3] sm:$0x3] %v443
  // Predicated region
  $region10: #{bottleneck_forward_nhwc.4} parent=0 // pred_check
    _
  $region11: #{bottleneck_forward_nhwc.4} parent=0 // pred_check_branch
    %446 = sbr.rel (0) target = $region13
  $region12: #{bottleneck_forward_nhwc.4} parent=0 // pred_region
    _
  $region13: #{bottleneck_forward_nhwc.4} parent=0 // pred_fallthru
    _
  // Predicated region
  $region14: #{bottleneck_forward_nhwc.4} parent=0 // pred_check
    _
  $region15: #{bottleneck_forward_nhwc.4} parent=0 // pred_check_branch
    %448 = sbr.rel (0) target = $region17
  $region16: #{bottleneck_forward_nhwc.4} parent=0 // pred_region
    _
  $region17: #{bottleneck_forward_nhwc.4} parent=0 // pred_fallthru
    _
  // Predicated region
  $region18: #{bottleneck_forward_nhwc.4} parent=0 // pred_check
    _
  $region19: #{bottleneck_forward_nhwc.4} parent=0 // pred_check_branch
    %450 = sbr.rel (0) target = $region21
  $region20: #{bottleneck_forward_nhwc.4} parent=0 // pred_region
    _
  $region21: #{bottleneck_forward_nhwc.4} parent=0 // pred_fallthru
    _
  // Predicated region
  $region22: #{bottleneck_forward_nhwc.4} parent=0 // pred_check
    _
  $region23: #{bottleneck_forward_nhwc.4} parent=0 // pred_check_branch
    %452 = sbr.rel (0) target = $region25
  $region24: #{bottleneck_forward_nhwc.4} parent=0 // pred_region
    _
  $region25: #{bottleneck_forward_nhwc.4} parent=0 // pred_fallthru
    _

// kernel: bottleneck_forward_nhwc.7
$region0: #{bottleneck_forward_nhwc.7}
  #allocation0 [shape = 'u32[]', space=smem, size = 0x4, offset = 0x4, fixed_abs, tag = 'smem constant byte address 0x4 - core index']
  #allocation1 [shape = 'u32[72,128]{1,0:T(1,128)}', space=vmem, size = 0x9000, scoped, tag = 'internal scratch']
  %s0 = inlined_call_operand.vmem [shape: bf16[128,256], index: 0, kind: input, shape index: {}]
  %s1 = inlined_call_operand.vmem [shape: f32[1,256], index: 1, kind: input, shape index: {}]
  %s2 = inlined_call_operand.vmem [shape: f32[1,256], index: 2, kind: input, shape index: {}]
  %s3 = inlined_call_operand.vmem [shape: bf16[128,256], index: 3, kind: input, shape index: {}]
  %s4 = inlined_call_operand.hbm [shape: f32[128,256], index: 4, kind: output, shape index: {}]
  %s5 = sld [smem:[#allocation0]]
  $region26: #{bottleneck_forward_nhwc.7} parent=0
    _
  %s7 = ssub.s32 1, %s5
  %s8 = scalar_select 0, %s7, %s5
  $region1: #{bottleneck_forward_nhwc.7} parent=0
    #allocation2 [shape = 'u8[131072]{0}', space=vmem, size = 0x20000, scoped, tag = 'output window, operand 0, single buffered']
    #allocation3 [shape = 's32[1]{0}', space=sflag, size = 0x4, scoped, tag = 'scoped memory for bottleneck_forward_nhwc.7']
    %9 = vsyncpa [#allocation3], 0
    // Predicated region
    $region2: #{bottleneck_forward_nhwc.7} parent=1 // pred_check
      _
    $region3: #{bottleneck_forward_nhwc.7} parent=1 // pred_check_branch
      %11 = sbr.rel (0) target = $region5
    $region4: #{bottleneck_forward_nhwc.7} parent=1 // pred_region
      _
    $region5: #{bottleneck_forward_nhwc.7} parent=1 // pred_fallthru
      _
    // Predicated region
    $region6: #{bottleneck_forward_nhwc.7} parent=1 // pred_check
      _
    $region7: #{bottleneck_forward_nhwc.7} parent=1 // pred_check_branch
      %13 = sbr.rel (0) target = $region9
    $region8: #{bottleneck_forward_nhwc.7} parent=1 // pred_region
      _
    $region9: #{bottleneck_forward_nhwc.7} parent=1 // pred_fallthru
      _
    // Predicated region
    $region10: #{bottleneck_forward_nhwc.7} parent=1 // pred_check
      _
    $region11: #{bottleneck_forward_nhwc.7} parent=1 // pred_check_branch
      %15 = sbr.rel (0) target = $region13
    $region12: #{bottleneck_forward_nhwc.7} parent=1 // pred_region
      _
    $region13: #{bottleneck_forward_nhwc.7} parent=1 // pred_fallthru
      _
    // Predicated region
    $region14: #{bottleneck_forward_nhwc.7} parent=1 // pred_check
      _
    $region15: #{bottleneck_forward_nhwc.7} parent=1 // pred_check_branch
      %17 = sbr.rel (0) target = $region17
    $region16: #{bottleneck_forward_nhwc.7} parent=1 // pred_region
      _
    $region17: #{bottleneck_forward_nhwc.7} parent=1 // pred_fallthru
      _
    %v18 = vld [vmem:[%s0] sm:$0xff]
    %v19 = vld [vmem:[%s0 + $0x8] sm:$0xff]
    %v20 = vld [vmem:[%s0 + $0x10] sm:$0xff]
    %v21 = vld [vmem:[%s0 + $0x18] sm:$0xff]
    %v22 = vld [vmem:[%s0 + $0x20] sm:$0xff]
    %v23 = vld [vmem:[%s0 + $0x28] sm:$0xff]
    %v24 = vld [vmem:[%s0 + $0x30] sm:$0xff]
    %v25 = vld [vmem:[%s0 + $0x38] sm:$0xff]
    %v26 = vld [vmem:[%s0 + $0x40] sm:$0xff]
    %v27 = vld [vmem:[%s0 + $0x48] sm:$0xff]
    %v28 = vld [vmem:[%s0 + $0x50] sm:$0xff]
    %v29 = vld [vmem:[%s0 + $0x58] sm:$0xff]
    %v30 = vld [vmem:[%s0 + $0x60] sm:$0xff]
    %v31 = vld [vmem:[%s0 + $0x68] sm:$0xff]
    %v32 = vld [vmem:[%s0 + $0x70] sm:$0xff]
    %v33 = vld [vmem:[%s0 + $0x78] sm:$0xff]
    %v34 = vunpack.c.l.bf16 %v18
    %v35 = vunpack.c.h.bf16 %v18
    %v36 = vunpack.c.l.bf16 %v19
    %v37 = vunpack.c.h.bf16 %v19
    %v38 = vunpack.c.l.bf16 %v20
    %v39 = vunpack.c.h.bf16 %v20
    %v40 = vunpack.c.l.bf16 %v21
    %v41 = vunpack.c.h.bf16 %v21
    %v42 = vunpack.c.l.bf16 %v22
    %v43 = vunpack.c.h.bf16 %v22
    %v44 = vunpack.c.l.bf16 %v23
    %v45 = vunpack.c.h.bf16 %v23
    %v46 = vunpack.c.l.bf16 %v24
    %v47 = vunpack.c.h.bf16 %v24
    %v48 = vunpack.c.l.bf16 %v25
    %v49 = vunpack.c.h.bf16 %v25
    %v50 = vunpack.c.l.bf16 %v26
    %v51 = vunpack.c.h.bf16 %v26
    %v52 = vunpack.c.l.bf16 %v27
    %v53 = vunpack.c.h.bf16 %v27
    %v54 = vunpack.c.l.bf16 %v28
    %v55 = vunpack.c.h.bf16 %v28
    %v56 = vunpack.c.l.bf16 %v29
    %v57 = vunpack.c.h.bf16 %v29
    %v58 = vunpack.c.l.bf16 %v30
    %v59 = vunpack.c.h.bf16 %v30
    %v60 = vunpack.c.l.bf16 %v31
    %v61 = vunpack.c.h.bf16 %v31
    %v62 = vunpack.c.l.bf16 %v32
    %v63 = vunpack.c.h.bf16 %v32
    %v64 = vunpack.c.l.bf16 %v33
    %v65 = vunpack.c.h.bf16 %v33
    %v66 = vld [vmem:[%s1] sm:$0x3]
    %v68 = vperm.slane %v66, 0
    %v69 = vperm.slane %v66, 1
    %v72 = vmul.f32 %v34, %v68
    %v73 = vmul.f32 %v35, %v69
    %v74 = vmul.f32 %v36, %v68
    %v75 = vmul.f32 %v37, %v69
    %v76 = vmul.f32 %v38, %v68
    %v77 = vmul.f32 %v39, %v69
    %v78 = vmul.f32 %v40, %v68
    %v79 = vmul.f32 %v41, %v69
    %v80 = vmul.f32 %v42, %v68
    %v81 = vmul.f32 %v43, %v69
    %v82 = vmul.f32 %v44, %v68
    %v83 = vmul.f32 %v45, %v69
    %v84 = vmul.f32 %v46, %v68
    %v85 = vmul.f32 %v47, %v69
    %v86 = vmul.f32 %v48, %v68
    %v87 = vmul.f32 %v49, %v69
    %v88 = vmul.f32 %v50, %v68
    %v89 = vmul.f32 %v51, %v69
    %v90 = vmul.f32 %v52, %v68
    %v91 = vmul.f32 %v53, %v69
    %v92 = vmul.f32 %v54, %v68
    %v93 = vmul.f32 %v55, %v69
    %v94 = vmul.f32 %v56, %v68
    %v95 = vmul.f32 %v57, %v69
    %v96 = vmul.f32 %v58, %v68
    %v97 = vmul.f32 %v59, %v69
    %v98 = vmul.f32 %v60, %v68
    %v99 = vmul.f32 %v61, %v69
    %v100 = vmul.f32 %v62, %v68
    %v101 = vmul.f32 %v63, %v69
    %v102 = vmul.f32 %v64, %v68
    %v103 = vmul.f32 %v65, %v69
    %v104 = vld [vmem:[%s2] sm:$0x3]
    %v106 = vperm.slane %v104, 0
    %v107 = vperm.slane %v104, 1
    %v110 = vadd.f32 %v72, %v106
    %v111 = vadd.f32 %v73, %v107
    %v112 = vadd.f32 %v74, %v106
    %v113 = vadd.f32 %v75, %v107
    %v114 = vadd.f32 %v76, %v106
    %v115 = vadd.f32 %v77, %v107
    %v116 = vadd.f32 %v78, %v106
    %v117 = vadd.f32 %v79, %v107
    %v118 = vadd.f32 %v80, %v106
    %v119 = vadd.f32 %v81, %v107
    %v120 = vadd.f32 %v82, %v106
    %v121 = vadd.f32 %v83, %v107
    %v122 = vadd.f32 %v84, %v106
    %v123 = vadd.f32 %v85, %v107
    %v124 = vadd.f32 %v86, %v106
    %v125 = vadd.f32 %v87, %v107
    %v126 = vadd.f32 %v88, %v106
    %v127 = vadd.f32 %v89, %v107
    %v128 = vadd.f32 %v90, %v106
    %v129 = vadd.f32 %v91, %v107
    %v130 = vadd.f32 %v92, %v106
    %v131 = vadd.f32 %v93, %v107
    %v132 = vadd.f32 %v94, %v106
    %v133 = vadd.f32 %v95, %v107
    %v134 = vadd.f32 %v96, %v106
    %v135 = vadd.f32 %v97, %v107
    %v136 = vadd.f32 %v98, %v106
    %v137 = vadd.f32 %v99, %v107
    %v138 = vadd.f32 %v100, %v106
    %v139 = vadd.f32 %v101, %v107
    %v140 = vadd.f32 %v102, %v106
    %v141 = vadd.f32 %v103, %v107
    %v142 = vld [vmem:[%s3] sm:$0xff]
    %v143 = vld [vmem:[%s3 + $0x8] sm:$0xff]
    %v144 = vld [vmem:[%s3 + $0x10] sm:$0xff]
    %v145 = vld [vmem:[%s3 + $0x18] sm:$0xff]
    %v146 = vld [vmem:[%s3 + $0x20] sm:$0xff]
    %v147 = vld [vmem:[%s3 + $0x28] sm:$0xff]
    %v148 = vld [vmem:[%s3 + $0x30] sm:$0xff]
    %v149 = vld [vmem:[%s3 + $0x38] sm:$0xff]
    %v150 = vld [vmem:[%s3 + $0x40] sm:$0xff]
    %v151 = vld [vmem:[%s3 + $0x48] sm:$0xff]
    %v152 = vld [vmem:[%s3 + $0x50] sm:$0xff]
    %v153 = vld [vmem:[%s3 + $0x58] sm:$0xff]
    %v154 = vld [vmem:[%s3 + $0x60] sm:$0xff]
    %v155 = vld [vmem:[%s3 + $0x68] sm:$0xff]
    %v156 = vld [vmem:[%s3 + $0x70] sm:$0xff]
    %v157 = vld [vmem:[%s3 + $0x78] sm:$0xff]
    %v158 = vunpack.c.l.bf16 %v142
    %v159 = vunpack.c.h.bf16 %v142
    %v160 = vunpack.c.l.bf16 %v143
    %v161 = vunpack.c.h.bf16 %v143
    %v162 = vunpack.c.l.bf16 %v144
    %v163 = vunpack.c.h.bf16 %v144
    %v164 = vunpack.c.l.bf16 %v145
    %v165 = vunpack.c.h.bf16 %v145
    %v166 = vunpack.c.l.bf16 %v146
    %v167 = vunpack.c.h.bf16 %v146
    %v168 = vunpack.c.l.bf16 %v147
    %v169 = vunpack.c.h.bf16 %v147
    %v170 = vunpack.c.l.bf16 %v148
    %v171 = vunpack.c.h.bf16 %v148
    %v172 = vunpack.c.l.bf16 %v149
    %v173 = vunpack.c.h.bf16 %v149
    %v174 = vunpack.c.l.bf16 %v150
    %v175 = vunpack.c.h.bf16 %v150
    %v176 = vunpack.c.l.bf16 %v151
    %v177 = vunpack.c.h.bf16 %v151
    %v178 = vunpack.c.l.bf16 %v152
    %v179 = vunpack.c.h.bf16 %v152
    %v180 = vunpack.c.l.bf16 %v153
    %v181 = vunpack.c.h.bf16 %v153
    %v182 = vunpack.c.l.bf16 %v154
    %v183 = vunpack.c.h.bf16 %v154
    %v184 = vunpack.c.l.bf16 %v155
    %v185 = vunpack.c.h.bf16 %v155
    %v186 = vunpack.c.l.bf16 %v156
    %v187 = vunpack.c.h.bf16 %v156
    %v188 = vunpack.c.l.bf16 %v157
    %v189 = vunpack.c.h.bf16 %v157
    %v190 = vadd.f32 %v110, %v158
    %v191 = vadd.f32 %v111, %v159
    %v192 = vadd.f32 %v112, %v160
    %v193 = vadd.f32 %v113, %v161
    %v194 = vadd.f32 %v114, %v162
    %v195 = vadd.f32 %v115, %v163
    %v196 = vadd.f32 %v116, %v164
    %v197 = vadd.f32 %v117, %v165
    %v198 = vadd.f32 %v118, %v166
    %v199 = vadd.f32 %v119, %v167
    %v200 = vadd.f32 %v120, %v168
    %v201 = vadd.f32 %v121, %v169
    %v202 = vadd.f32 %v122, %v170
    %v203 = vadd.f32 %v123, %v171
    %v204 = vadd.f32 %v124, %v172
    %v205 = vadd.f32 %v125, %v173
    %v206 = vadd.f32 %v126, %v174
    %v207 = vadd.f32 %v127, %v175
    %v208 = vadd.f32 %v128, %v176
    %v209 = vadd.f32 %v129, %v177
    %v210 = vadd.f32 %v130, %v178
    %v211 = vadd.f32 %v131, %v179
    %v212 = vadd.f32 %v132, %v180
    %v213 = vadd.f32 %v133, %v181
    %v214 = vadd.f32 %v134, %v182
    %v215 = vadd.f32 %v135, %v183
    %v216 = vadd.f32 %v136, %v184
    %v217 = vadd.f32 %v137, %v185
    %v218 = vadd.f32 %v138, %v186
    %v219 = vadd.f32 %v139, %v187
    %v220 = vadd.f32 %v140, %v188
    %v221 = vadd.f32 %v141, %v189
    %v222 = vmax.f32 %v190, 0.0
    %v223 = vmax.f32 %v191, 0.0
    %v224 = vmax.f32 %v192, 0.0
    %v225 = vmax.f32 %v193, 0.0
    %v226 = vmax.f32 %v194, 0.0
    %v227 = vmax.f32 %v195, 0.0
    %v228 = vmax.f32 %v196, 0.0
    %v229 = vmax.f32 %v197, 0.0
    %v230 = vmax.f32 %v198, 0.0
    %v231 = vmax.f32 %v199, 0.0
    %v232 = vmax.f32 %v200, 0.0
    %v233 = vmax.f32 %v201, 0.0
    %v234 = vmax.f32 %v202, 0.0
    %v235 = vmax.f32 %v203, 0.0
    %v236 = vmax.f32 %v204, 0.0
    %v237 = vmax.f32 %v205, 0.0
    %v238 = vmax.f32 %v206, 0.0
    %v239 = vmax.f32 %v207, 0.0
    %v240 = vmax.f32 %v208, 0.0
    %v241 = vmax.f32 %v209, 0.0
    %v242 = vmax.f32 %v210, 0.0
    %v243 = vmax.f32 %v211, 0.0
    %v244 = vmax.f32 %v212, 0.0
    %v245 = vmax.f32 %v213, 0.0
    %v246 = vmax.f32 %v214, 0.0
    %v247 = vmax.f32 %v215, 0.0
    %v248 = vmax.f32 %v216, 0.0
    %v249 = vmax.f32 %v217, 0.0
    %v250 = vmax.f32 %v218, 0.0
    %v251 = vmax.f32 %v219, 0.0
    %v252 = vmax.f32 %v220, 0.0
    %v253 = vmax.f32 %v221, 0.0
    %254 = vst [vmem:[#allocation2] sm:$0xff] %v222
    %255 = vst [vmem:[#allocation2 + $0x8] sm:$0xff] %v223
    %256 = vst [vmem:[#allocation2 + $0x10] sm:$0xff] %v224
    %257 = vst [vmem:[#allocation2 + $0x18] sm:$0xff] %v225
    %258 = vst [vmem:[#allocation2 + $0x20] sm:$0xff] %v226
    %259 = vst [vmem:[#allocation2 + $0x28] sm:$0xff] %v227
    %260 = vst [vmem:[#allocation2 + $0x30] sm:$0xff] %v228
    %261 = vst [vmem:[#allocation2 + $0x38] sm:$0xff] %v229
    %262 = vst [vmem:[#allocation2 + $0x40] sm:$0xff] %v230
    %263 = vst [vmem:[#allocation2 + $0x48] sm:$0xff] %v231
    %264 = vst [vmem:[#allocation2 + $0x50] sm:$0xff] %v232
    %265 = vst [vmem:[#allocation2 + $0x58] sm:$0xff] %v233
    %266 = vst [vmem:[#allocation2 + $0x60] sm:$0xff] %v234
    %267 = vst [vmem:[#allocation2 + $0x68] sm:$0xff] %v235
    %268 = vst [vmem:[#allocation2 + $0x70] sm:$0xff] %v236
    %269 = vst [vmem:[#allocation2 + $0x78] sm:$0xff] %v237
    %270 = vst [vmem:[#allocation2 + $0x80] sm:$0xff] %v238
    %271 = vst [vmem:[#allocation2 + $0x88] sm:$0xff] %v239
    %272 = vst [vmem:[#allocation2 + $0x90] sm:$0xff] %v240
    %273 = vst [vmem:[#allocation2 + $0x98] sm:$0xff] %v241
    %274 = vst [vmem:[#allocation2 + $0xa0] sm:$0xff] %v242
    %275 = vst [vmem:[#allocation2 + $0xa8] sm:$0xff] %v243
    %276 = vst [vmem:[#allocation2 + $0xb0] sm:$0xff] %v244
    %277 = vst [vmem:[#allocation2 + $0xb8] sm:$0xff] %v245
    %278 = vst [vmem:[#allocation2 + $0xc0] sm:$0xff] %v246
    %279 = vst [vmem:[#allocation2 + $0xc8] sm:$0xff] %v247
    %280 = vst [vmem:[#allocation2 + $0xd0] sm:$0xff] %v248
    %281 = vst [vmem:[#allocation2 + $0xd8] sm:$0xff] %v249
    %282 = vst [vmem:[#allocation2 + $0xe0] sm:$0xff] %v250
    %283 = vst [vmem:[#allocation2 + $0xe8] sm:$0xff] %v251
    %284 = vst [vmem:[#allocation2 + $0xf0] sm:$0xff] %v252
    %285 = vst [vmem:[#allocation2 + $0xf8] sm:$0xff] %v253
    // Predicated region
    $region18: #{bottleneck_forward_nhwc.7} parent=1 // pred_check
      _
    $region19: #{bottleneck_forward_nhwc.7} parent=1 // pred_check_branch
      %287 = sbr.rel (0) target = $region21
    $region20: #{bottleneck_forward_nhwc.7} parent=1 // pred_region
      %289 = vsyncadd [#allocation3], 0
      %s290 = sshll.u32 [#allocation2], 4
      %s291 = int_to_ptr.vmem [resolvable:$true] %s290
      %s292 = sshll.u32 %s4, 4
      %s293 = int_to_ptr.hbm [resolvable:$true] %s292
      %298 = dma.vmem_to_hbm [thread:$0]  %s291, 4096, %s293, [#allocation3], 256, 256, 16
    $region21: #{bottleneck_forward_nhwc.7} parent=1 // pred_fallthru
      _
    // Predicated region
    $region22: #{bottleneck_forward_nhwc.7} parent=1 // pred_check
      _
    $region23: #{bottleneck_forward_nhwc.7} parent=1 // pred_check_branch
      %300 = sbr.rel (0) target = $region25
    $region24: #{bottleneck_forward_nhwc.7} parent=1 // pred_region
      %302 = dma.done [#allocation3], 4096
    $region25: #{bottleneck_forward_nhwc.7} parent=1 // pred_fallthru
      _
    %303 = vsyncpa [#allocation3], 1

// kernel: bottleneck_forward_nhwc.6
$region0: #{bottleneck_forward_nhwc.6}
  #allocation0 [shape = 'u32[]', space=smem, size = 0x4, offset = 0x4, fixed_abs, tag = 'smem constant byte address 0x4 - core index']
  #allocation1 [shape = 'u32[72,128]{1,0:T(1,128)}', space=vmem, size = 0x9000, scoped, tag = 'internal scratch']
  %s0 = inlined_call_operand.vmem [shape: bf16[128,128], index: 0, kind: input, shape index: {}]
  %s1 = inlined_call_operand.vmem [shape: f32[1,128], index: 1, kind: input, shape index: {}]
  %s2 = inlined_call_operand.vmem [shape: f32[1,128], index: 2, kind: input, shape index: {}]
  %s3 = inlined_call_operand.vmem [shape: bf16[128,256], index: 3, kind: input, shape index: {}]
  %s4 = inlined_call_operand.vmem [shape: bf16[128,256], index: 4, kind: output, shape index: {0}]
  %s5 = inlined_call_operand.vmem [shape: f32[1,2,256], index: 5, kind: output, shape index: {1}]
  %6 = xla_tuple %s4, %s5
  %s7 = sld [smem:[#allocation0]]
  $region34: #{bottleneck_forward_nhwc.6} parent=0
    _
  %s9 = ssub.s32 1, %s7
  %s10 = scalar_select 0, %s9, %s7
  // Predicated region
  $region2: #{bottleneck_forward_nhwc.6} parent=0 // pred_check
    _
  $region3: #{bottleneck_forward_nhwc.6} parent=0 // pred_check_branch
    %12 = sbr.rel (0) target = $region5
  $region4: #{bottleneck_forward_nhwc.6} parent=0 // pred_region
    _
  $region5: #{bottleneck_forward_nhwc.6} parent=0 // pred_fallthru
    _
  // Predicated region
  $region6: #{bottleneck_forward_nhwc.6} parent=0 // pred_check
    _
  $region7: #{bottleneck_forward_nhwc.6} parent=0 // pred_check_branch
    %14 = sbr.rel (0) target = $region9
  $region8: #{bottleneck_forward_nhwc.6} parent=0 // pred_region
    _
  $region9: #{bottleneck_forward_nhwc.6} parent=0 // pred_fallthru
    _
  // Predicated region
  $region10: #{bottleneck_forward_nhwc.6} parent=0 // pred_check
    _
  $region11: #{bottleneck_forward_nhwc.6} parent=0 // pred_check_branch
    %16 = sbr.rel (0) target = $region13
  $region12: #{bottleneck_forward_nhwc.6} parent=0 // pred_region
    _
  $region13: #{bottleneck_forward_nhwc.6} parent=0 // pred_fallthru
    _
  // Predicated region
  $region14: #{bottleneck_forward_nhwc.6} parent=0 // pred_check
    _
  $region15: #{bottleneck_forward_nhwc.6} parent=0 // pred_check_branch
    %18 = sbr.rel (0) target = $region17
  $region16: #{bottleneck_forward_nhwc.6} parent=0 // pred_region
    _
  $region17: #{bottleneck_forward_nhwc.6} parent=0 // pred_fallthru
    _
  %v19 = vld [vmem:[%s0] sm:$0xf]
  %v20 = vld [vmem:[%s0 + $0x4] sm:$0xf]
  %v21 = vld [vmem:[%s0 + $0x8] sm:$0xf]
  %v22 = vld [vmem:[%s0 + $0xc] sm:$0xf]
  %v23 = vld [vmem:[%s0 + $0x10] sm:$0xf]
  %v24 = vld [vmem:[%s0 + $0x14] sm:$0xf]
  %v25 = vld [vmem:[%s0 + $0x18] sm:$0xf]
  %v26 = vld [vmem:[%s0 + $0x1c] sm:$0xf]
  %v27 = vld [vmem:[%s0 + $0x20] sm:$0xf]
  %v28 = vld [vmem:[%s0 + $0x24] sm:$0xf]
  %v29 = vld [vmem:[%s0 + $0x28] sm:$0xf]
  %v30 = vld [vmem:[%s0 + $0x2c] sm:$0xf]
  %v31 = vld [vmem:[%s0 + $0x30] sm:$0xf]
  %v32 = vld [vmem:[%s0 + $0x34] sm:$0xf]
  %v33 = vld [vmem:[%s0 + $0x38] sm:$0xf]
  %v34 = vld [vmem:[%s0 + $0x3c] sm:$0xf]
  %v35 = vunpack.c.l.bf16 %v19
  %v36 = vunpack.c.l.bf16 %v20
  %v37 = vunpack.c.l.bf16 %v21
  %v38 = vunpack.c.l.bf16 %v22
  %v39 = vunpack.c.l.bf16 %v23
  %v40 = vunpack.c.l.bf16 %v24
  %v41 = vunpack.c.l.bf16 %v25
  %v42 = vunpack.c.l.bf16 %v26
  %v43 = vunpack.c.l.bf16 %v27
  %v44 = vunpack.c.l.bf16 %v28
  %v45 = vunpack.c.l.bf16 %v29
  %v46 = vunpack.c.l.bf16 %v30
  %v47 = vunpack.c.l.bf16 %v31
  %v48 = vunpack.c.l.bf16 %v32
  %v49 = vunpack.c.l.bf16 %v33
  %v50 = vunpack.c.l.bf16 %v34
  %v51 = vld [vmem:[%s1] sm:$0x1]
  %v53 = vperm.slane %v51, 0
  %v55 = vmul.f32 %v35, %v53
  %v56 = vmul.f32 %v36, %v53
  %v57 = vmul.f32 %v37, %v53
  %v58 = vmul.f32 %v38, %v53
  %v59 = vmul.f32 %v39, %v53
  %v60 = vmul.f32 %v40, %v53
  %v61 = vmul.f32 %v41, %v53
  %v62 = vmul.f32 %v42, %v53
  %v63 = vmul.f32 %v43, %v53
  %v64 = vmul.f32 %v44, %v53
  %v65 = vmul.f32 %v45, %v53
  %v66 = vmul.f32 %v46, %v53
  %v67 = vmul.f32 %v47, %v53
  %v68 = vmul.f32 %v48, %v53
  %v69 = vmul.f32 %v49, %v53
  %v70 = vmul.f32 %v50, %v53
  %v71 = vld [vmem:[%s2] sm:$0x1]
  %v73 = vperm.slane %v71, 0
  %v75 = vadd.f32 %v55, %v73
  %v76 = vadd.f32 %v56, %v73
  %v77 = vadd.f32 %v57, %v73
  %v78 = vadd.f32 %v58, %v73
  %v79 = vadd.f32 %v59, %v73
  %v80 = vadd.f32 %v60, %v73
  %v81 = vadd.f32 %v61, %v73
  %v82 = vadd.f32 %v62, %v73
  %v83 = vadd.f32 %v63, %v73
  %v84 = vadd.f32 %v64, %v73
  %v85 = vadd.f32 %v65, %v73
  %v86 = vadd.f32 %v66, %v73
  %v87 = vadd.f32 %v67, %v73
  %v88 = vadd.f32 %v68, %v73
  %v89 = vadd.f32 %v69, %v73
  %v90 = vadd.f32 %v70, %v73
  %v91 = vmax.f32 %v75, 0.0
  %v92 = vmax.f32 %v76, 0.0
  %v93 = vmax.f32 %v77, 0.0
  %v94 = vmax.f32 %v78, 0.0
  %v95 = vmax.f32 %v79, 0.0
  %v96 = vmax.f32 %v80, 0.0
  %v97 = vmax.f32 %v81, 0.0
  %v98 = vmax.f32 %v82, 0.0
  %v99 = vmax.f32 %v83, 0.0
  %v100 = vmax.f32 %v84, 0.0
  %v101 = vmax.f32 %v85, 0.0
  %v102 = vmax.f32 %v86, 0.0
  %v103 = vmax.f32 %v87, 0.0
  %v104 = vmax.f32 %v88, 0.0
  %v105 = vmax.f32 %v89, 0.0
  %v106 = vmax.f32 %v90, 0.0
  %v107 = vpack.c.bf16 %v92, %v91
  %v108 = vpack.c.bf16 %v94, %v93
  %v109 = vpack.c.bf16 %v96, %v95
  %v110 = vpack.c.bf16 %v98, %v97
  %v111 = vpack.c.bf16 %v100, %v99
  %v112 = vpack.c.bf16 %v102, %v101
  %v113 = vpack.c.bf16 %v104, %v103
  %v114 = vpack.c.bf16 %v106, %v105
  %v115 = vld [vmem:[%s3] sm:$0xff]
  %v116 = vld [vmem:[%s3 + $0x8] sm:$0xff]
  %v117 = vld [vmem:[%s3 + $0x10] sm:$0xff]
  %v118 = vld [vmem:[%s3 + $0x18] sm:$0xff]
  %v119 = vld [vmem:[%s3 + $0x20] sm:$0xff]
  %v120 = vld [vmem:[%s3 + $0x28] sm:$0xff]
  %v121 = vld [vmem:[%s3 + $0x30] sm:$0xff]
  %v122 = vld [vmem:[%s3 + $0x38] sm:$0xff]
  %v123 = vld [vmem:[%s3 + $0x40] sm:$0xff]
  %v124 = vld [vmem:[%s3 + $0x48] sm:$0xff]
  %v125 = vld [vmem:[%s3 + $0x50] sm:$0xff]
  %v126 = vld [vmem:[%s3 + $0x58] sm:$0xff]
  %v127 = vld [vmem:[%s3 + $0x60] sm:$0xff]
  %v128 = vld [vmem:[%s3 + $0x68] sm:$0xff]
  %v129 = vld [vmem:[%s3 + $0x70] sm:$0xff]
  %v130 = vld [vmem:[%s3 + $0x78] sm:$0xff]
  %v147 = vunpack.c.l.b16 %v115
  %v148 = vunpack.c.h.b16 %v115
  %v149 = vunpack.c.l.b16 %v116
  %v150 = vunpack.c.h.b16 %v116
  %v151 = vunpack.c.l.b16 %v117
  %v152 = vunpack.c.h.b16 %v117
  %v153 = vunpack.c.l.b16 %v118
  %v154 = vunpack.c.h.b16 %v118
  %v155 = vunpack.c.l.b16 %v119
  %v156 = vunpack.c.h.b16 %v119
  %v157 = vunpack.c.l.b16 %v120
  %v158 = vunpack.c.h.b16 %v120
  %v159 = vunpack.c.l.b16 %v121
  %v160 = vunpack.c.h.b16 %v121
  %v161 = vunpack.c.l.b16 %v122
  %v162 = vunpack.c.h.b16 %v122
  %v163 = vunpack.c.l.b16 %v123
  %v164 = vunpack.c.h.b16 %v123
  %v165 = vunpack.c.l.b16 %v124
  %v166 = vunpack.c.h.b16 %v124
  %v167 = vunpack.c.l.b16 %v125
  %v168 = vunpack.c.h.b16 %v125
  %v169 = vunpack.c.l.b16 %v126
  %v170 = vunpack.c.h.b16 %v126
  %v171 = vunpack.c.l.b16 %v127
  %v172 = vunpack.c.h.b16 %v127
  %v173 = vunpack.c.l.b16 %v128
  %v174 = vunpack.c.h.b16 %v128
  %v175 = vunpack.c.l.b16 %v129
  %v176 = vunpack.c.h.b16 %v129
  %v177 = vunpack.c.l.b16 %v130
  %v178 = vunpack.c.h.b16 %v130
  %v179 = vpack.c.b16 %v149, %v147
  %v180 = vpack.c.b16 %v150, %v148
  %v181 = vpack.c.b16 %v153, %v151
  %v182 = vpack.c.b16 %v154, %v152
  %v183 = vpack.c.b16 %v157, %v155
  %v184 = vpack.c.b16 %v158, %v156
  %v185 = vpack.c.b16 %v161, %v159
  %v186 = vpack.c.b16 %v162, %v160
  %v187 = vpack.c.b16 %v165, %v163
  %v188 = vpack.c.b16 %v166, %v164
  %v189 = vpack.c.b16 %v169, %v167
  %v190 = vpack.c.b16 %v170, %v168
  %v191 = vpack.c.b16 %v173, %v171
  %v192 = vpack.c.b16 %v174, %v172
  %v193 = vpack.c.b16 %v177, %v175
  %v194 = vpack.c.b16 %v178, %v176
  %211 = vmatpush.bf16.msra.mxu0 %v193
  %212 = vmatpush.bf16.msra.mxu0 %v191
  %213 = vmatpush.bf16.msra.mxu0 %v189
  %214 = vmatpush.bf16.msra.mxu0 %v187
  %215 = vmatpush.bf16.msra.mxu0 %v185
  %216 = vmatpush.bf16.msra.mxu0 %v183
  %217 = vmatpush.bf16.msra.mxu0 %v181
  %218 = vmatpush.bf16.msra.mxu0 %v179
  %219 = vmatmul.bf16.gmra.mxu0 %v107
  %v220 = vpop.f32.mrf.mxu0
  %v221 = vadd.f32 0.0, %v220
  %v222 = vpop.f32.mrf.mxu0
  %v223 = vadd.f32 0.0, %v222
  %224 = vmatmul.bf16.gmra.mxu0 %v108
  %v225 = vpop.f32.mrf.mxu0
  %v226 = vadd.f32 0.0, %v225
  %v227 = vpop.f32.mrf.mxu0
  %v228 = vadd.f32 0.0, %v227
  %229 = vmatmul.bf16.gmra.mxu0 %v109
  %v230 = vpop.f32.mrf.mxu0
  %v231 = vadd.f32 0.0, %v230
  %v232 = vpop.f32.mrf.mxu0
  %v233 = vadd.f32 0.0, %v232
  %234 = vmatmul.bf16.gmra.mxu0 %v110
  %v235 = vpop.f32.mrf.mxu0
  %v236 = vadd.f32 0.0, %v235
  %v237 = vpop.f32.mrf.mxu0
  %v238 = vadd.f32 0.0, %v237
  %239 = vmatmul.bf16.gmra.mxu0 %v111
  %v240 = vpop.f32.mrf.mxu0
  %v241 = vadd.f32 0.0, %v240
  %v242 = vpop.f32.mrf.mxu0
  %v243 = vadd.f32 0.0, %v242
  %244 = vmatmul.bf16.gmra.mxu0 %v112
  %v245 = vpop.f32.mrf.mxu0
  %v246 = vadd.f32 0.0, %v245
  %v247 = vpop.f32.mrf.mxu0
  %v248 = vadd.f32 0.0, %v247
  %249 = vmatmul.bf16.gmra.mxu0 %v113
  %v250 = vpop.f32.mrf.mxu0
  %v251 = vadd.f32 0.0, %v250
  %v252 = vpop.f32.mrf.mxu0
  %v253 = vadd.f32 0.0, %v252
  %254 = vmatmul.bf16.gmra.mxu0 %v114
  %v255 = vpop.f32.mrf.mxu0
  %v256 = vadd.f32 0.0, %v255
  %v257 = vpop.f32.mrf.mxu0
  %v258 = vadd.f32 0.0, %v257
  %259 = vdwg.mxu0
  %260 = vmatpush.bf16.msra.mxu0 %v194
  %261 = vmatpush.bf16.msra.mxu0 %v192
  %262 = vmatpush.bf16.msra.mxu0 %v190
  %263 = vmatpush.bf16.msra.mxu0 %v188
  %264 = vmatpush.bf16.msra.mxu0 %v186
  %265 = vmatpush.bf16.msra.mxu0 %v184
  %266 = vmatpush.bf16.msra.mxu0 %v182
  %267 = vmatpush.bf16.msra.mxu0 %v180
  %268 = vmatmul.bf16.gmra.mxu0 %v107
  %v269 = vpop.f32.mrf.mxu0
  %v270 = vadd.f32 0.0, %v269
  %v271 = vpop.f32.mrf.mxu0
  %v272 = vadd.f32 0.0, %v271
  %273 = vmatmul.bf16.gmra.mxu0 %v108
  %v274 = vpop.f32.mrf.mxu0
  %v275 = vadd.f32 0.0, %v274
  %v276 = vpop.f32.mrf.mxu0
  %v277 = vadd.f32 0.0, %v276
  %278 = vmatmul.bf16.gmra.mxu0 %v109
  %v279 = vpop.f32.mrf.mxu0
  %v280 = vadd.f32 0.0, %v279
  %v281 = vpop.f32.mrf.mxu0
  %v282 = vadd.f32 0.0, %v281
  %283 = vmatmul.bf16.gmra.mxu0 %v110
  %v284 = vpop.f32.mrf.mxu0
  %v285 = vadd.f32 0.0, %v284
  %v286 = vpop.f32.mrf.mxu0
  %v287 = vadd.f32 0.0, %v286
  %288 = vmatmul.bf16.gmra.mxu0 %v111
  %v289 = vpop.f32.mrf.mxu0
  %v290 = vadd.f32 0.0, %v289
  %v291 = vpop.f32.mrf.mxu0
  %v292 = vadd.f32 0.0, %v291
  %293 = vmatmul.bf16.gmra.mxu0 %v112
  %v294 = vpop.f32.mrf.mxu0
  %v295 = vadd.f32 0.0, %v294
  %v296 = vpop.f32.mrf.mxu0
  %v297 = vadd.f32 0.0, %v296
  %298 = vmatmul.bf16.gmra.mxu0 %v113
  %v299 = vpop.f32.mrf.mxu0
  %v300 = vadd.f32 0.0, %v299
  %v301 = vpop.f32.mrf.mxu0
  %v302 = vadd.f32 0.0, %v301
  %303 = vmatmul.bf16.gmra.mxu0 %v114
  %v304 = vpop.f32.mrf.mxu0
  %v305 = vadd.f32 0.0, %v304
  %v306 = vpop.f32.mrf.mxu0
  %v307 = vadd.f32 0.0, %v306
  %308 = vdwg.mxu0
  %v309 = vpack.c.bf16 %v270, %v221
  %v310 = vpack.c.bf16 %v272, %v223
  %v311 = vpack.c.bf16 %v275, %v226
  %v312 = vpack.c.bf16 %v277, %v228
  %v313 = vpack.c.bf16 %v280, %v231
  %v314 = vpack.c.bf16 %v282, %v233
  %v315 = vpack.c.bf16 %v285, %v236
  %v316 = vpack.c.bf16 %v287, %v238
  %v317 = vpack.c.bf16 %v290, %v241
  %v318 = vpack.c.bf16 %v292, %v243
  %v319 = vpack.c.bf16 %v295, %v246
  %v320 = vpack.c.bf16 %v297, %v248
  %v321 = vpack.c.bf16 %v300, %v251
  %v322 = vpack.c.bf16 %v302, %v253
  %v323 = vpack.c.bf16 %v305, %v256
  %v324 = vpack.c.bf16 %v307, %v258
  %325 = vst [vmem:[%s4] sm:$0xff] %v309
  %326 = vst [vmem:[%s4 + $0x8] sm:$0xff] %v310
  %327 = vst [vmem:[%s4 + $0x10] sm:$0xff] %v311
  %328 = vst [vmem:[%s4 + $0x18] sm:$0xff] %v312
  %329 = vst [vmem:[%s4 + $0x20] sm:$0xff] %v313
  %330 = vst [vmem:[%s4 + $0x28] sm:$0xff] %v314
  %331 = vst [vmem:[%s4 + $0x30] sm:$0xff] %v315
  %332 = vst [vmem:[%s4 + $0x38] sm:$0xff] %v316
  %333 = vst [vmem:[%s4 + $0x40] sm:$0xff] %v317
  %334 = vst [vmem:[%s4 + $0x48] sm:$0xff] %v318
  %335 = vst [vmem:[%s4 + $0x50] sm:$0xff] %v319
  %336 = vst [vmem:[%s4 + $0x58] sm:$0xff] %v320
  %337 = vst [vmem:[%s4 + $0x60] sm:$0xff] %v321
  %338 = vst [vmem:[%s4 + $0x68] sm:$0xff] %v322
  %339 = vst [vmem:[%s4 + $0x70] sm:$0xff] %v323
  %340 = vst [vmem:[%s4 + $0x78] sm:$0xff] %v324
  %v341 = vadd.f32 %v221, %v223
  %v342 = vadd.f32 %v341, %v226
  %v343 = vadd.f32 %v342, %v228
  %v344 = vadd.f32 %v343, %v231
  %v345 = vadd.f32 %v344, %v233
  %v346 = vadd.f32 %v345, %v236
  %v347 = vadd.f32 %v346, %v238
  %v348 = vadd.f32 %v347, %v241
  %v349 = vadd.f32 %v348, %v243
  %v350 = vadd.f32 %v349, %v246
  %v351 = vadd.f32 %v350, %v248
  %v352 = vadd.f32 %v351, %v251
  %v353 = vadd.f32 %v352, %v253
  %v354 = vadd.f32 %v353, %v256
  %v355 = vadd.f32 %v354, %v258
  %v356 = vrot.slane %v355, 4
  %v357 = vadd.f32 %v355, %v356
  %v358 = vrot.slane %v357, 2
  %v359 = vadd.f32 %v357, %v358
  %v360 = vrot.slane %v359, 1
  %v361 = vadd.f32 %v359, %v360
  %v362 = vadd.f32 %v270, %v272
  %v363 = vadd.f32 %v362, %v275
  %v364 = vadd.f32 %v363, %v277
  %v365 = vadd.f32 %v364, %v280
  %v366 = vadd.f32 %v365, %v282
  %v367 = vadd.f32 %v366, %v285
  %v368 = vadd.f32 %v367, %v287
  %v369 = vadd.f32 %v368, %v290
  %v370 = vadd.f32 %v369, %v292
  %v371 = vadd.f32 %v370, %v295
  %v372 = vadd.f32 %v371, %v297
  %v373 = vadd.f32 %v372, %v300
  %v374 = vadd.f32 %v373, %v302
  %v375 = vadd.f32 %v374, %v305
  %v376 = vadd.f32 %v375, %v307
  %v377 = vrot.slane %v376, 4
  %v378 = vadd.f32 %v376, %v377
  %v379 = vrot.slane %v378, 2
  %v380 = vadd.f32 %v378, %v379
  %v381 = vrot.slane %v380, 1
  %v382 = vadd.f32 %v380, %v381
  %v383 = vmul.f32 %v361, 0.0078125
  %v384 = vmul.f32 %v382, 0.0078125
  %v385 = vsub.f32 %v221, %v383
  %v386 = vsub.f32 %v270, %v384
  %v387 = vsub.f32 %v223, %v383
  %v388 = vsub.f32 %v272, %v384
  %v389 = vsub.f32 %v226, %v383
  %v390 = vsub.f32 %v275, %v384
  %v391 = vsub.f32 %v228, %v383
  %v392 = vsub.f32 %v277, %v384
  %v393 = vsub.f32 %v231, %v383
  %v394 = vsub.f32 %v280, %v384
  %v395 = vsub.f32 %v233, %v383
  %v396 = vsub.f32 %v282, %v384
  %v397 = vsub.f32 %v236, %v383
  %v398 = vsub.f32 %v285, %v384
  %v399 = vsub.f32 %v238, %v383
  %v400 = vsub.f32 %v287, %v384
  %v401 = vsub.f32 %v241, %v383
  %v402 = vsub.f32 %v290, %v384
  %v403 = vsub.f32 %v243, %v383
  %v404 = vsub.f32 %v292, %v384
  %v405 = vsub.f32 %v246, %v383
  %v406 = vsub.f32 %v295, %v384
  %v407 = vsub.f32 %v248, %v383
  %v408 = vsub.f32 %v297, %v384
  %v409 = vsub.f32 %v251, %v383
  %v410 = vsub.f32 %v300, %v384
  %v411 = vsub.f32 %v253, %v383
  %v412 = vsub.f32 %v302, %v384
  %v413 = vsub.f32 %v256, %v383
  %v414 = vsub.f32 %v305, %v384
  %v415 = vsub.f32 %v258, %v383
  %v416 = vsub.f32 %v307, %v384
  %v417 = vmul.f32 %v385, %v385
  %v418 = vmul.f32 %v386, %v386
  %v419 = vmul.f32 %v387, %v387
  %v420 = vmul.f32 %v388, %v388
  %v421 = vmul.f32 %v389, %v389
  %v422 = vmul.f32 %v390, %v390
  %v423 = vmul.f32 %v391, %v391
  %v424 = vmul.f32 %v392, %v392
  %v425 = vmul.f32 %v393, %v393
  %v426 = vmul.f32 %v394, %v394
  %v427 = vmul.f32 %v395, %v395
  %v428 = vmul.f32 %v396, %v396
  %v429 = vmul.f32 %v397, %v397
  %v430 = vmul.f32 %v398, %v398
  %v431 = vmul.f32 %v399, %v399
  %v432 = vmul.f32 %v400, %v400
  %v433 = vmul.f32 %v401, %v401
  %v434 = vmul.f32 %v402, %v402
  %v435 = vmul.f32 %v403, %v403
  %v436 = vmul.f32 %v404, %v404
  %v437 = vmul.f32 %v405, %v405
  %v438 = vmul.f32 %v406, %v406
  %v439 = vmul.f32 %v407, %v407
  %v440 = vmul.f32 %v408, %v408
  %v441 = vmul.f32 %v409, %v409
  %v442 = vmul.f32 %v410, %v410
  %v443 = vmul.f32 %v411, %v411
  %v444 = vmul.f32 %v412, %v412
  %v445 = vmul.f32 %v413, %v413
  %v446 = vmul.f32 %v414, %v414
  %v447 = vmul.f32 %v415, %v415
  %v448 = vmul.f32 %v416, %v416
  %v449 = vadd.f32 %v417, %v419
  %v450 = vadd.f32 %v449, %v421
  %v451 = vadd.f32 %v450, %v423
  %v452 = vadd.f32 %v451, %v425
  %v453 = vadd.f32 %v452, %v427
  %v454 = vadd.f32 %v453, %v429
  %v455 = vadd.f32 %v454, %v431
  %v456 = vadd.f32 %v455, %v433
  %v457 = vadd.f32 %v456, %v435
  %v458 = vadd.f32 %v457, %v437
  %v459 = vadd.f32 %v458, %v439
  %v460 = vadd.f32 %v459, %v441
  %v461 = vadd.f32 %v460, %v443
  %v462 = vadd.f32 %v461, %v445
  %v463 = vadd.f32 %v462, %v447
  %v464 = vrot.slane %v463, 4
  %v465 = vadd.f32 %v463, %v464
  %v466 = vrot.slane %v465, 2
  %v467 = vadd.f32 %v465, %v466
  %v468 = vrot.slane %v467, 1
  %v469 = vadd.f32 %v467, %v468
  %v470 = vadd.f32 %v418, %v420
  %v471 = vadd.f32 %v470, %v422
  %v472 = vadd.f32 %v471, %v424
  %v473 = vadd.f32 %v472, %v426
  %v474 = vadd.f32 %v473, %v428
  %v475 = vadd.f32 %v474, %v430
  %v476 = vadd.f32 %v475, %v432
  %v477 = vadd.f32 %v476, %v434
  %v478 = vadd.f32 %v477, %v436
  %v479 = vadd.f32 %v478, %v438
  %v480 = vadd.f32 %v479, %v440
  %v481 = vadd.f32 %v480, %v442
  %v482 = vadd.f32 %v481, %v444
  %v483 = vadd.f32 %v482, %v446
  %v484 = vadd.f32 %v483, %v448
  %v485 = vrot.slane %v484, 4
  %v486 = vadd.f32 %v484, %v485
  %v487 = vrot.slane %v486, 2
  %v488 = vadd.f32 %v486, %v487
  %v489 = vrot.slane %v488, 1
  %v490 = vadd.f32 %v488, %v489
  %vm491 = vcmask 1040384
  %v492 = vsel %vm491, %v361, %v469
  %v493 = vsel %vm491, %v382, %v490
  %v496 = vrot.slane %v493, 6
  %vm497 = vcmask 1041408
  %v498 = vsel %vm497, %v492, %v496
  %500 = vst [vmem:[%s5] sm:$0xf] %v498
  // Predicated region
  $region18: #{bottleneck_forward_nhwc.6} parent=0 // pred_check
    _
  $region19: #{bottleneck_forward_nhwc.6} parent=0 // pred_check_branch
    %502 = sbr.rel (0) target = $region21
  $region20: #{bottleneck_forward_nhwc.6} parent=0 // pred_region
    _
  $region21: #{bottleneck_forward_nhwc.6} parent=0 // pred_fallthru
    _
  // Predicated region
  $region22: #{bottleneck_forward_nhwc.6} parent=0 // pred_check
    _
  $region23: #{bottleneck_forward_nhwc.6} parent=0 // pred_check_branch
    %504 = sbr.rel (0) target = $region25
  $region24: #{bottleneck_forward_nhwc.6} parent=0 // pred_region
    _
  $region25: #{bottleneck_forward_nhwc.6} parent=0 // pred_fallthru
    _
  // Predicated region
  $region26: #{bottleneck_forward_nhwc.6} parent=0 // pred_check
    _
  $region27: #{bottleneck_forward_nhwc.6} parent=0 // pred_check_branch
    %506 = sbr.rel (0) target = $region29
  $region28: #{bottleneck_forward_nhwc.6} parent=0 // pred_region
    _
  $region29: #{bottleneck_forward_nhwc.6} parent=0 // pred_fallthru
    _
  // Predicated region
  $region30: #{bottleneck_forward_nhwc.6} parent=0 // pred_check
    _
  $region31: #{bottleneck_forward_nhwc.6} parent=0 // pred_check_branch
    %508 = sbr.rel (0) target = $region33
  $region32: #{bottleneck_forward_nhwc.6} parent=0 // pred_region
    _
  $region33: #{bottleneck_forward_nhwc.6} parent=0 // pred_fallthru
    _

// kernel: bottleneck_forward_nhwc.5
$region0: #{bottleneck_forward_nhwc.5}
  #allocation0 [shape = 'u32[]', space=smem, size = 0x4, offset = 0x4, fixed_abs, tag = 'smem constant byte address 0x4 - core index']
  #allocation1 [shape = 'u32[72,128]{1,0:T(1,128)}', space=vmem, size = 0x9000, scoped, tag = 'internal scratch']
  %s0 = inlined_call_operand.vmem [shape: bf16[2,8,8,128], index: 0, kind: input, shape index: {}]
  %s1 = inlined_call_operand.vmem [shape: f32[1,128], index: 1, kind: input, shape index: {}]
  %s2 = inlined_call_operand.vmem [shape: f32[1,128], index: 2, kind: input, shape index: {}]
  %s3 = inlined_call_operand.vmem [shape: bf16[9,128,128], index: 3, kind: input, shape index: {}]
  %s4 = inlined_call_operand.vmem [shape: bf16[2,8,8,128], index: 4, kind: output, shape index: {0}]
  %s5 = inlined_call_operand.vmem [shape: f32[2,2,128], index: 5, kind: output, shape index: {1}]
  %6 = xla_tuple %s4, %s5
  %s7 = sld [smem:[#allocation0]]
  $region57: #{bottleneck_forward_nhwc.5} parent=0
    _
  %s9 = ssub.s32 1, %s7
  %s10 = scalar_select 0, %s9, %s7
  loop: start=0, step=1, limit=4
  $region2: #{bottleneck_forward_nhwc.5} parent=0 // loop_pre_header
    _
  $region3: #{bottleneck_forward_nhwc.5} parent=0 // loop_header
    %s12 = sphi 0, %s16
    %p13 = scmp.ge.s32.totalorder %s12, 4
    %s22 = sphi 0, %s24
    %s25 = sphi 0, %s22
    %s26 = sphi 0, %s25
    %s42 = sphi 0, %s26
    %s46 = sphi 0, %s46
    %s48 = sphi 0, %s46
    %s49 = sphi 0, %s48
    %s63 = sphi 0, %s49
    %s67 = sphi 0, %s67
    %s69 = sphi 0, %s67
    %s70 = sphi 0, %s69
    %s84 = sphi 0, %s70
    %s88 = sphi 0, %s88
    %s90 = sphi 0, %s88
    %s91 = sphi 0, %s90
    %s105 = sphi 0, %s91
    %s111 = sphi 0, %s113
    %s114 = sphi 0, %s111
    %s115 = sphi 0, %s114
    %s131 = sphi 0, %s115
    %s137 = sphi 0, %s139
    %s140 = sphi 0, %s137
    %s141 = sphi 0, %s140
    %s157 = sphi 0, %s141
  $region4: #{bottleneck_forward_nhwc.5} parent=0 // loop_header_branch
    %15 = sbr.rel (%p13) target = $region8
  $region5: #{bottleneck_forward_nhwc.5} parent=0 // loop_body
    %s17 = ssub.s32 %s12, 1
    %s18 = ssub.s32 %s12, 2
    %s19 = sadd.s32 %s12, 1
    %s20 = ssub.s32 %s12, %s19
    %p21 = scmp.eq.s32.totalorder %s20, 0
    %s23 = sadd.s32 %s22, 1
    %s24 = scalar_select %p21, %s22, %s23
    %p27 = pneg %p21
    %p28 = scmp.eq.s32.totalorder %s12, 1
    %p29 = por %p27, %p28
    %p30 = scmp.ne.s32.totalorder %s22, %s25
    %p31 = scmp.eq.s32.totalorder %s12, 0
    %p32 = por %p30, %p31
    %p33 = scmp.ne.s32.totalorder %s22, %s25
    %p34 = scmp.eq.s32.totalorder %s17, 1
    %p35 = por %p33, %p34
    %p36 = scmp.ne.s32.totalorder %s25, %s26
    %p37 = scmp.eq.s32.totalorder %s17, 0
    %p38 = por %p36, %p37
    %p39 = scmp.ne.s32.totalorder %s25, %s26
    %p40 = scmp.eq.s32.totalorder %s18, 1
    %p41 = por %p39, %p40
    %p43 = scmp.ne.s32.totalorder %s26, %s42
    %p44 = scmp.eq.s32.totalorder %s18, 0
    %p45 = por %p43, %p44
    %s47 = sadd.s32 %s46, 1
    %p50 = scmp.eq.s32.totalorder %s12, 1
    %p51 = scmp.ne.s32.totalorder %s46, %s48
    %p52 = scmp.eq.s32.totalorder %s12, 0
    %p53 = por %p51, %p52
    %p54 = scmp.ne.s32.totalorder %s46, %s48
    %p55 = scmp.eq.s32.totalorder %s17, 1
    %p56 = por %p54, %p55
    %p57 = scmp.ne.s32.totalorder %s48, %s49
    %p58 = scmp.eq.s32.totalorder %s17, 0
    %p59 = por %p57, %p58
    %p60 = scmp.ne.s32.totalorder %s48, %s49
    %p61 = scmp.eq.s32.totalorder %s18, 1
    %p62 = por %p60, %p61
    %p64 = scmp.ne.s32.totalorder %s49, %s63
    %p65 = scmp.eq.s32.totalorder %s18, 0
    %p66 = por %p64, %p65
    %s68 = sadd.s32 %s67, 1
    %p71 = scmp.eq.s32.totalorder %s12, 1
    %p72 = scmp.ne.s32.totalorder %s67, %s69
    %p73 = scmp.eq.s32.totalorder %s12, 0
    %p74 = por %p72, %p73
    %p75 = scmp.ne.s32.totalorder %s67, %s69
    %p76 = scmp.eq.s32.totalorder %s17, 1
    %p77 = por %p75, %p76
    %p78 = scmp.ne.s32.totalorder %s69, %s70
    %p79 = scmp.eq.s32.totalorder %s17, 0
    %p80 = por %p78, %p79
    %p81 = scmp.ne.s32.totalorder %s69, %s70
    %p82 = scmp.eq.s32.totalorder %s18, 1
    %p83 = por %p81, %p82
    %p85 = scmp.ne.s32.totalorder %s70, %s84
    %p86 = scmp.eq.s32.totalorder %s18, 0
    %p87 = por %p85, %p86
    %s89 = sadd.s32 %s88, 1
    %p92 = scmp.eq.s32.totalorder %s12, 1
    %p93 = scmp.ne.s32.totalorder %s88, %s90
    %p94 = scmp.eq.s32.totalorder %s12, 0
    %p95 = por %p93, %p94
    %p96 = scmp.ne.s32.totalorder %s88, %s90
    %p97 = scmp.eq.s32.totalorder %s17, 1
    %p98 = por %p96, %p97
    %p99 = scmp.ne.s32.totalorder %s90, %s91
    %p100 = scmp.eq.s32.totalorder %s17, 0
    %p101 = por %p99, %p100
    %p102 = scmp.ne.s32.totalorder %s90, %s91
    %p103 = scmp.eq.s32.totalorder %s18, 1
    %p104 = por %p102, %p103
    %p106 = scmp.ne.s32.totalorder %s91, %s105
    %p107 = scmp.eq.s32.totalorder %s18, 0
    %p108 = por %p106, %p107
    %s109 = ssub.s32 %s12, %s19
    %p110 = scmp.eq.s32.totalorder %s109, 0
    %s112 = sadd.s32 %s111, 1
    %s113 = scalar_select %p110, %s111, %s112
    %p116 = pneg %p110
    %p117 = scmp.eq.s32.totalorder %s12, 1
    %p118 = por %p116, %p117
    %p119 = scmp.ne.s32.totalorder %s111, %s114
    %p120 = scmp.eq.s32.totalorder %s12, 0
    %p121 = por %p119, %p120
    %p122 = scmp.ne.s32.totalorder %s111, %s114
    %p123 = scmp.eq.s32.totalorder %s17, 1
    %p124 = por %p122, %p123
    %p125 = scmp.ne.s32.totalorder %s114, %s115
    %p126 = scmp.eq.s32.totalorder %s17, 0
    %p127 = por %p125, %p126
    %p128 = scmp.ne.s32.totalorder %s114, %s115
    %p129 = scmp.eq.s32.totalorder %s18, 1
    %p130 = por %p128, %p129
    %p132 = scmp.ne.s32.totalorder %s115, %s131
    %p133 = scmp.eq.s32.totalorder %s18, 0
    %p134 = por %p132, %p133
    %s135 = ssub.s32 %s12, %s19
    %p136 = scmp.eq.s32.totalorder %s135, 0
    %s138 = sadd.s32 %s137, 1
    %s139 = scalar_select %p136, %s137, %s138
    %p142 = pneg %p136
    %p143 = scmp.eq.s32.totalorder %s12, 1
    %p144 = por %p142, %p143
    %p145 = scmp.ne.s32.totalorder %s137, %s140
    %p146 = scmp.eq.s32.totalorder %s12, 0
    %p147 = por %p145, %p146
    %p148 = scmp.ne.s32.totalorder %s137, %s140
    %p149 = scmp.eq.s32.totalorder %s17, 1
    %p150 = por %p148, %p149
    %p151 = scmp.ne.s32.totalorder %s140, %s141
    %p152 = scmp.eq.s32.totalorder %s17, 0
    %p153 = por %p151, %p152
    %p154 = scmp.ne.s32.totalorder %s140, %s141
    %p155 = scmp.eq.s32.totalorder %s18, 1
    %p156 = por %p154, %p155
    %p158 = scmp.ne.s32.totalorder %s141, %s157
    %p159 = scmp.eq.s32.totalorder %s18, 0
    %p160 = por %p158, %p159
    %p161 = scmp.le.s32.totalorder 1, %s12
    %p162 = scmp.lt.s32.totalorder %s12, 3
    %p163 = pnand %p161, %p162
    %p164 = pneg %p163
    // Predicated region
    $region9: #{bottleneck_forward_nhwc.5} parent=5 // pred_check
      _
    $region10: #{bottleneck_forward_nhwc.5} parent=5 // pred_check_branch
      %166 = sbr.rel (%p163) target = $region12
    $region11: #{bottleneck_forward_nhwc.5} parent=5 // pred_region
      %s167 = ssub.s32 %s12, 1
      // Predicated region
      $region13: #{bottleneck_forward_nhwc.5} parent=11 // pred_check
        %p168 = pneg %p59
      $region14: #{bottleneck_forward_nhwc.5} parent=11 // pred_check_branch
        %170 = sbr.rel (%p168) target = $region16
      $region15: #{bottleneck_forward_nhwc.5} parent=11 // pred_region
        _
      $region16: #{bottleneck_forward_nhwc.5} parent=11 // pred_fallthru
        _
      // Predicated region
      $region17: #{bottleneck_forward_nhwc.5} parent=11 // pred_check
        %p171 = pneg %p80
      $region18: #{bottleneck_forward_nhwc.5} parent=11 // pred_check_branch
        %173 = sbr.rel (%p171) target = $region20
      $region19: #{bottleneck_forward_nhwc.5} parent=11 // pred_region
        _
      $region20: #{bottleneck_forward_nhwc.5} parent=11 // pred_fallthru
        _
      // Predicated region
      $region21: #{bottleneck_forward_nhwc.5} parent=11 // pred_check
        %p174 = pneg %p101
      $region22: #{bottleneck_forward_nhwc.5} parent=11 // pred_check_branch
        %176 = sbr.rel (%p174) target = $region24
      $region23: #{bottleneck_forward_nhwc.5} parent=11 // pred_region
        _
      $region24: #{bottleneck_forward_nhwc.5} parent=11 // pred_fallthru
        _
    $region12: #{bottleneck_forward_nhwc.5} parent=5 // pred_fallthru
      _
    %p177 = scmp.lt.s32.totalorder %s12, 2
    // Predicated region
    $region25: #{bottleneck_forward_nhwc.5} parent=5 // pred_check
      %p178 = pneg %p177
    $region26: #{bottleneck_forward_nhwc.5} parent=5 // pred_check_branch
      %180 = sbr.rel (%p178) target = $region28
    $region27: #{bottleneck_forward_nhwc.5} parent=5 // pred_region
      // Predicated region
      $region29: #{bottleneck_forward_nhwc.5} parent=27 // pred_check
        %p181 = pneg %p32
      $region30: #{bottleneck_forward_nhwc.5} parent=27 // pred_check_branch
        %183 = sbr.rel (%p181) target = $region32
      $region31: #{bottleneck_forward_nhwc.5} parent=27 // pred_region
        %p184 = scmp.lt.s32.totalorder %s12, 1
        %s185 = scalar_select %p184, %s12, 1
        %s186 = smul.addr %s185, 8
        %s187 = smul.addr %s186, 4
        %s188 = scalar_lea.vmem %s0, %s187
      $region32: #{bottleneck_forward_nhwc.5} parent=27 // pred_fallthru
        _
    $region28: #{bottleneck_forward_nhwc.5} parent=5 // pred_fallthru
      _
    %p189 = scmp.le.s32.totalorder 1, %s12
    %p190 = scmp.lt.s32.totalorder %s12, 3
    %p191 = pnand %p189, %p190
    %p192 = pneg %p191
    // Predicated region
    $region33: #{bottleneck_forward_nhwc.5} parent=5 // pred_check
      _
    $region34: #{bottleneck_forward_nhwc.5} parent=5 // pred_check_branch
      %194 = sbr.rel (%p191) target = $region36
    $region35: #{bottleneck_forward_nhwc.5} parent=5 // pred_region
      %s195 = ssub.s32 %s12, 1
      %p196 = scmp.lt.s32.totalorder %s17, 1
      %s197 = scalar_select %p196, %s17, 1
      %s198 = smul.addr %s197, 8
      %s199 = smul.addr %s198, 4
      %s200 = scalar_lea.vmem %s0, %s199
      %p201 = pneg %p38
      %p202 = pneg %p35
      %p203 = pneg %p59
      %p204 = pneg %p56
      %p205 = pneg %p80
      %p206 = pneg %p77
      %p207 = pneg %p101
      %p208 = pneg %p98
      %p209 = pneg %p127
      %p210 = pneg %p124
      %p211 = scmp.lt.s32.totalorder %s17, 1
      %s212 = scalar_select %p211, %s17, 1
      %s213 = smul.addr %s212, 8
      %s214 = smul.addr %s213, 4
      %s215 = scalar_lea.vmem %s4, %s214
      %p216 = pneg %p153
      %p217 = pneg %p150
      %p218 = scmp.lt.s32.totalorder %s17, 1
      %s219 = scalar_select %p218, %s17, 1
      %s220 = smul.addr %s219, 2
      %s221 = scalar_lea.vmem %s5, %s220
      %p222 = scmp.lt.s32.totalorder %s17, 1
      %s223 = scalar_select %p222, %s17, 1
      %s224 = smul.addr %s223, 8
      %s225 = smul.addr %s224, 4
      %s226 = scalar_lea.vmem %s0, %s225
      %p227 = scmp.lt.s32.totalorder %s17, 1
      %s228 = scalar_select %p227, %s17, 1
      %s229 = smul.addr %s228, 8
      %s230 = smul.addr %s229, 4
      %s231 = scalar_lea.vmem %s4, %s230
      %p232 = scmp.lt.s32.totalorder %s17, 1
      %s233 = scalar_select %p232, %s17, 1
      %s234 = smul.addr %s233, 2
      %s235 = scalar_lea.vmem %s5, %s234
      %v237 = vld [vmem:[%s226] sm:$0xf]
      %v238 = vld [vmem:[%s226 + $0x4] sm:$0xf]
      %v239 = vld [vmem:[%s226 + $0x8] sm:$0xf]
      %v240 = vld [vmem:[%s226 + $0xc] sm:$0xf]
      %v241 = vld [vmem:[%s226 + $0x10] sm:$0xf]
      %v242 = vld [vmem:[%s226 + $0x14] sm:$0xf]
      %v243 = vld [vmem:[%s226 + $0x18] sm:$0xf]
      %v244 = vld [vmem:[%s226 + $0x1c] sm:$0xf]
      %v245 = vunpack.c.l.bf16 %v237
      %v246 = vunpack.c.l.bf16 %v238
      %v247 = vunpack.c.l.bf16 %v239
      %v248 = vunpack.c.l.bf16 %v240
      %v249 = vunpack.c.l.bf16 %v241
      %v250 = vunpack.c.l.bf16 %v242
      %v251 = vunpack.c.l.bf16 %v243
      %v252 = vunpack.c.l.bf16 %v244
      %v253 = vld [vmem:[%s1] sm:$0x1]
      %v255 = vperm.slane %v253, 0
      %v257 = vmul.f32 %v245, %v255
      %v258 = vmul.f32 %v246, %v255
      %v259 = vmul.f32 %v247, %v255
      %v260 = vmul.f32 %v248, %v255
      %v261 = vmul.f32 %v249, %v255
      %v262 = vmul.f32 %v250, %v255
      %v263 = vmul.f32 %v251, %v255
      %v264 = vmul.f32 %v252, %v255
      %v265 = vld [vmem:[%s2] sm:$0x1]
      %v267 = vperm.slane %v265, 0
      %v269 = vadd.f32 %v257, %v267
      %v270 = vadd.f32 %v258, %v267
      %v271 = vadd.f32 %v259, %v267
      %v272 = vadd.f32 %v260, %v267
      %v273 = vadd.f32 %v261, %v267
      %v274 = vadd.f32 %v262, %v267
      %v275 = vadd.f32 %v263, %v267
      %v276 = vadd.f32 %v264, %v267
      %v277 = vmax.f32 %v269, 0.0
      %v278 = vmax.f32 %v270, 0.0
      %v279 = vmax.f32 %v271, 0.0
      %v280 = vmax.f32 %v272, 0.0
      %v281 = vmax.f32 %v273, 0.0
      %v282 = vmax.f32 %v274, 0.0
      %v283 = vmax.f32 %v275, 0.0
      %v284 = vmax.f32 %v276, 0.0
      %v285 = vpack.c.bf16 %v277, %v277
      %v286 = vpack.c.bf16 %v278, %v278
      %v287 = vpack.c.bf16 %v279, %v279
      %v288 = vpack.c.bf16 %v280, %v280
      %v289 = vpack.c.bf16 %v281, %v281
      %v290 = vpack.c.bf16 %v282, %v282
      %v291 = vpack.c.bf16 %v283, %v283
      %v292 = vpack.c.bf16 %v284, %v284
      %v301 = vunpack.c.l.b16 %v285
      %v302 = vunpack.c.l.b16 %v286
      %v303 = vunpack.c.l.b16 %v287
      %v304 = vunpack.c.l.b16 %v288
      %v305 = vunpack.c.l.b16 %v289
      %v306 = vunpack.c.l.b16 %v290
      %v307 = vunpack.c.l.b16 %v291
      %v308 = vunpack.c.l.b16 %v292
      %v309 = vpack.c.b16 %v301, %v301
      %v310 = vpack.c.b16 %v302, %v302
      %v311 = vpack.c.b16 %v303, %v303
      %v312 = vpack.c.b16 %v304, %v304
      %v313 = vpack.c.b16 %v305, %v305
      %v314 = vpack.c.b16 %v306, %v306
      %v315 = vpack.c.b16 %v307, %v307
      %v316 = vpack.c.b16 %v308, %v308
      %v318 = vshrl.u32 %v309, 16
      %v320 = vrot.slane %v318, 7
      %v321 = vshll.u32 %v309, 16
      %v323 = vor.u32 %v320, %v321
      %v325 = vshrl.u32 %v310, 16
      %v327 = vrot.slane %v325, 7
      %v328 = vshll.u32 %v310, 16
      %v330 = vor.u32 %v327, %v328
      %v332 = vshrl.u32 %v311, 16
      %v334 = vrot.slane %v332, 7
      %v335 = vshll.u32 %v311, 16
      %v337 = vor.u32 %v334, %v335
      %v339 = vshrl.u32 %v312, 16
      %v341 = vrot.slane %v339, 7
      %v342 = vshll.u32 %v312, 16
      %v344 = vor.u32 %v341, %v342
      %v346 = vshrl.u32 %v313, 16
      %v348 = vrot.slane %v346, 7
      %v349 = vshll.u32 %v313, 16
      %v351 = vor.u32 %v348, %v349
      %v353 = vshrl.u32 %v314, 16
      %v355 = vrot.slane %v353, 7
      %v356 = vshll.u32 %v314, 16
      %v358 = vor.u32 %v355, %v356
      %v360 = vshrl.u32 %v315, 16
      %v362 = vrot.slane %v360, 7
      %v363 = vshll.u32 %v315, 16
      %v365 = vor.u32 %v362, %v363
      %v367 = vshrl.u32 %v316, 16
      %v369 = vrot.slane %v367, 7
      %v370 = vshll.u32 %v316, 16
      %v372 = vor.u32 %v369, %v370
      %vm381 = vcmask 1040384
      %vm382 = vsmask.f32 256
      %vm383 = vmand %vm381, %vm382
      %v384 = vsel %vm383, 0, %v323
      %v385 = vsel %vm383, 0, %v330
      %v386 = vsel %vm383, 0, %v337
      %v387 = vsel %vm383, 0, %v344
      %v388 = vsel %vm383, 0, %v351
      %v389 = vsel %vm383, 0, %v358
      %v390 = vsel %vm383, 0, %v365
      %v391 = vsel %vm383, 0, %v372
      %vm392 = vcmask 1044480
      %vm393 = vsmask.f32 4352
      %vm394 = vmand %vm392, %vm393
      %v395 = vsel %vm394, %v384, 0
      %v396 = vsel %vm394, %v385, 0
      %v397 = vsel %vm394, %v386, 0
      %v398 = vsel %vm394, %v387, 0
      %v399 = vsel %vm394, %v388, 0
      %v400 = vsel %vm394, %v389, 0
      %v401 = vsel %vm394, %v390, 0
      %v402 = vsel %vm394, %v391, 0
      %v403 = vld [vmem:[%s3] sm:$0xf]
      %v404 = vld [vmem:[%s3 + $0x4] sm:$0xf]
      %v405 = vld [vmem:[%s3 + $0x8] sm:$0xf]
      %v406 = vld [vmem:[%s3 + $0xc] sm:$0xf]
      %v407 = vld [vmem:[%s3 + $0x10] sm:$0xf]
      %v408 = vld [vmem:[%s3 + $0x14] sm:$0xf]
      %v409 = vld [vmem:[%s3 + $0x18] sm:$0xf]
      %v410 = vld [vmem:[%s3 + $0x1c] sm:$0xf]
      %v411 = vld [vmem:[%s3 + $0x20] sm:$0xf]
      %v412 = vld [vmem:[%s3 + $0x24] sm:$0xf]
      %v413 = vld [vmem:[%s3 + $0x28] sm:$0xf]
      %v414 = vld [vmem:[%s3 + $0x2c] sm:$0xf]
      %v415 = vld [vmem:[%s3 + $0x30] sm:$0xf]
      %v416 = vld [vmem:[%s3 + $0x34] sm:$0xf]
      %v417 = vld [vmem:[%s3 + $0x38] sm:$0xf]
      %v418 = vld [vmem:[%s3 + $0x3c] sm:$0xf]
      %v427 = vunpack.c.l.b16 0
      %v428 = vunpack.c.h.b16 0
      %v429 = vunpack.c.l.b16 %v395
      %v430 = vunpack.c.h.b16 %v395
      %v431 = vunpack.c.l.b16 %v396
      %v432 = vunpack.c.h.b16 %v396
      %v433 = vunpack.c.l.b16 %v397
      %v434 = vunpack.c.h.b16 %v397
      %v435 = vunpack.c.l.b16 %v398
      %v436 = vunpack.c.h.b16 %v398
      %v437 = vunpack.c.l.b16 %v399
      %v438 = vunpack.c.h.b16 %v399
      %v439 = vunpack.c.l.b16 %v400
      %v440 = vunpack.c.h.b16 %v400
      %v441 = vunpack.c.l.b16 %v401
      %v442 = vunpack.c.h.b16 %v401
      %v443 = vpack.c.b16 %v427, %v427
      %v444 = vpack.c.b16 %v428, %v428
      %v445 = vpack.c.b16 %v429, %v429
      %v446 = vpack.c.b16 %v430, %v430
      %v447 = vpack.c.b16 %v431, %v431
      %v448 = vpack.c.b16 %v432, %v432
      %v449 = vpack.c.b16 %v433, %v433
      %v450 = vpack.c.b16 %v434, %v434
      %v451 = vpack.c.b16 %v435, %v435
      %v452 = vpack.c.b16 %v436, %v436
      %v453 = vpack.c.b16 %v437, %v437
      %v454 = vpack.c.b16 %v438, %v438
      %v455 = vpack.c.b16 %v439, %v439
      %v456 = vpack.c.b16 %v440, %v440
      %v457 = vpack.c.b16 %v441, %v441
      %v458 = vpack.c.b16 %v442, %v442
      %vm459 = vsmask.f32 3328
      %vm460 = vsmask.f32 7440
      %vm461 = vmor %vm459, %vm460
      %v463 = vshrl.u32 %v443, 16
      %v465 = vrot.slane %v463, 4
      %v466 = vshll.u32 %v443, 16
      %v468 = vrot.slane %v466, 5
      %v469 = vor.u32 %v465, %v468
      %v470 = vrot.slane %v469, 4
      %v472 = vshll.u32 %v444, 16
      %v474 = vrot.slane %v472, 5
      %v475 = vsel %vm461, %v470, %v474
      %v477 = vshrl.u32 %v445, 16
      %v479 = vrot.slane %v477, 4
      %v480 = vshll.u32 %v445, 16
      %v482 = vrot.slane %v480, 5
      %v483 = vor.u32 %v479, %v482
      %v484 = vrot.slane %v483, 4
      %v486 = vshll.u32 %v446, 16
      %v488 = vrot.slane %v486, 5
      %v489 = vsel %vm461, %v484, %v488
      %v491 = vshrl.u32 %v447, 16
      %v493 = vrot.slane %v491, 4
      %v494 = vshll.u32 %v447, 16
      %v496 = vrot.slane %v494, 5
      %v497 = vor.u32 %v493, %v496
      %v498 = vrot.slane %v497, 4
      %v500 = vshll.u32 %v448, 16
      %v502 = vrot.slane %v500, 5
      %v503 = vsel %vm461, %v498, %v502
      %v505 = vshrl.u32 %v449, 16
      %v507 = vrot.slane %v505, 4
      %v508 = vshll.u32 %v449, 16
      %v510 = vrot.slane %v508, 5
      %v511 = vor.u32 %v507, %v510
      %v512 = vrot.slane %v511, 4
      %v514 = vshll.u32 %v450, 16
      %v516 = vrot.slane %v514, 5
      %v517 = vsel %vm461, %v512, %v516
      %v519 = vshrl.u32 %v451, 16
      %v521 = vrot.slane %v519, 4
      %v522 = vshll.u32 %v451, 16
      %v524 = vrot.slane %v522, 5
      %v525 = vor.u32 %v521, %v524
      %v526 = vrot.slane %v525, 4
      %v528 = vshll.u32 %v452, 16
      %v530 = vrot.slane %v528, 5
      %v531 = vsel %vm461, %v526, %v530
      %v533 = vshrl.u32 %v453, 16
      %v535 = vrot.slane %v533, 4
      %v536 = vshll.u32 %v453, 16
      %v538 = vrot.slane %v536, 5
      %v539 = vor.u32 %v535, %v538
      %v540 = vrot.slane %v539, 4
      %v542 = vshll.u32 %v454, 16
      %v544 = vrot.slane %v542, 5
      %v545 = vsel %vm461, %v540, %v544
      %v547 = vshrl.u32 %v455, 16
      %v549 = vrot.slane %v547, 4
      %v550 = vshll.u32 %v455, 16
      %v552 = vrot.slane %v550, 5
      %v553 = vor.u32 %v549, %v552
      %v554 = vrot.slane %v553, 4
      %v556 = vshll.u32 %v456, 16
      %v558 = vrot.slane %v556, 5
      %v559 = vsel %vm461, %v554, %v558
      %v561 = vshrl.u32 %v457, 16
      %v563 = vrot.slane %v561, 4
      %v564 = vshll.u32 %v457, 16
      %v566 = vrot.slane %v564, 5
      %v567 = vor.u32 %v563, %v566
      %v568 = vrot.slane %v567, 4
      %v570 = vshll.u32 %v458, 16
      %v572 = vrot.slane %v570, 5
      %v573 = vsel %vm461, %v568, %v572
      %s574 = scalar_lea.vmem %s3, 64
      %v575 = vld [vmem:[%s574] sm:$0xf]
      %v576 = vld [vmem:[%s574 + $0x4] sm:$0xf]
      %v577 = vld [vmem:[%s574 + $0x8] sm:$0xf]
      %v578 = vld [vmem:[%s574 + $0xc] sm:$0xf]
      %v579 = vld [vmem:[%s574 + $0x10] sm:$0xf]
      %v580 = vld [vmem:[%s574 + $0x14] sm:$0xf]
      %v581 = vld [vmem:[%s574 + $0x18] sm:$0xf]
      %v582 = vld [vmem:[%s574 + $0x1c] sm:$0xf]
      %v583 = vld [vmem:[%s574 + $0x20] sm:$0xf]
      %v584 = vld [vmem:[%s574 + $0x24] sm:$0xf]
      %v585 = vld [vmem:[%s574 + $0x28] sm:$0xf]
      %v586 = vld [vmem:[%s574 + $0x2c] sm:$0xf]
      %v587 = vld [vmem:[%s574 + $0x30] sm:$0xf]
      %v588 = vld [vmem:[%s574 + $0x34] sm:$0xf]
      %v589 = vld [vmem:[%s574 + $0x38] sm:$0xf]
      %v590 = vld [vmem:[%s574 + $0x3c] sm:$0xf]
      %v591 = vunpack.c.l.b16 %v475
      %v592 = vunpack.c.l.b16 %v489
      %v593 = vunpack.c.l.b16 %v503
      %v594 = vunpack.c.l.b16 %v517
      %v595 = vunpack.c.l.b16 %v531
      %v596 = vunpack.c.l.b16 %v545
      %v597 = vunpack.c.l.b16 %v559
      %v598 = vunpack.c.l.b16 %v573
      %v599 = vpack.c.b16 %v592, %v591
      %v600 = vpack.c.b16 %v594, %v593
      %v601 = vpack.c.b16 %v596, %v595
      %v602 = vpack.c.b16 %v598, %v597
      %v623 = vunpack.c.l.b16 %v575
      %v624 = vunpack.c.l.b16 %v576
      %v625 = vunpack.c.l.b16 %v577
      %v626 = vunpack.c.l.b16 %v578
      %v627 = vunpack.c.l.b16 %v579
      %v628 = vunpack.c.l.b16 %v580
      %v629 = vunpack.c.l.b16 %v581
      %v630 = vunpack.c.l.b16 %v582
      %v631 = vunpack.c.l.b16 %v583
      %v632 = vunpack.c.l.b16 %v584
      %v633 = vunpack.c.l.b16 %v585
      %v634 = vunpack.c.l.b16 %v586
      %v635 = vunpack.c.l.b16 %v587
      %v636 = vunpack.c.l.b16 %v588
      %v637 = vunpack.c.l.b16 %v589
      %v638 = vunpack.c.l.b16 %v590
      %v639 = vpack.c.b16 %v624, %v623
      %v640 = vpack.c.b16 %v626, %v625
      %v641 = vpack.c.b16 %v628, %v627
      %v642 = vpack.c.b16 %v630, %v629
      %v643 = vpack.c.b16 %v632, %v631
      %v644 = vpack.c.b16 %v634, %v633
      %v645 = vpack.c.b16 %v636, %v635
      %v646 = vpack.c.b16 %v638, %v637
      %655 = vmatpush.bf16.msra.mxu0 %v646
      %656 = vmatpush.bf16.msra.mxu0 %v645
      %657 = vmatpush.bf16.msra.mxu0 %v644
      %658 = vmatpush.bf16.msra.mxu0 %v643
      %659 = vmatpush.bf16.msra.mxu0 %v642
      %660 = vmatpush.bf16.msra.mxu0 %v641
      %661 = vmatpush.bf16.msra.mxu0 %v640
      %662 = vmatpush.bf16.msra.mxu0 %v639
      %663 = vmatmul.bf16.gmra.mxu0 %v599
      %v664 = vpop.f32.mrf.mxu0
      %v665 = vadd.f32 0.0, %v664
      %v666 = vpop.f32.mrf.mxu0
      %v667 = vadd.f32 0.0, %v666
      %668 = vmatmul.bf16.gmra.mxu0 %v600
      %v669 = vpop.f32.mrf.mxu0
      %v670 = vadd.f32 0.0, %v669
      %v671 = vpop.f32.mrf.mxu0
      %v672 = vadd.f32 0.0, %v671
      %673 = vmatmul.bf16.gmra.mxu0 %v601
      %v674 = vpop.f32.mrf.mxu0
      %v675 = vadd.f32 0.0, %v674
      %v676 = vpop.f32.mrf.mxu0
      %v677 = vadd.f32 0.0, %v676
      %678 = vmatmul.bf16.gmra.mxu0 %v602
      %v679 = vpop.f32.mrf.mxu0
      %v680 = vadd.f32 0.0, %v679
      %v681 = vpop.f32.mrf.mxu0
      %v682 = vadd.f32 0.0, %v681
      %683 = vdwg.mxu0
      %v684 = vpack.c.b16 %v429, %v427
      %v685 = vpack.c.b16 %v433, %v431
      %v686 = vpack.c.b16 %v437, %v435
      %v687 = vpack.c.b16 %v441, %v439
      %v708 = vunpack.c.l.b16 %v403
      %v709 = vunpack.c.l.b16 %v404
      %v710 = vunpack.c.l.b16 %v405
      %v711 = vunpack.c.l.b16 %v406
      %v712 = vunpack.c.l.b16 %v407
      %v713 = vunpack.c.l.b16 %v408
      %v714 = vunpack.c.l.b16 %v409
      %v715 = vunpack.c.l.b16 %v410
      %v716 = vunpack.c.l.b16 %v411
      %v717 = vunpack.c.l.b16 %v412
      %v718 = vunpack.c.l.b16 %v413
      %v719 = vunpack.c.l.b16 %v414
      %v720 = vunpack.c.l.b16 %v415
      %v721 = vunpack.c.l.b16 %v416
      %v722 = vunpack.c.l.b16 %v417
      %v723 = vunpack.c.l.b16 %v418
      %v724 = vpack.c.b16 %v709, %v708
      %v725 = vpack.c.b16 %v711, %v710
      %v726 = vpack.c.b16 %v713, %v712
      %v727 = vpack.c.b16 %v715, %v714
      %v728 = vpack.c.b16 %v717, %v716
      %v729 = vpack.c.b16 %v719, %v718
      %v730 = vpack.c.b16 %v721, %v720
      %v731 = vpack.c.b16 %v723, %v722
      %740 = vmatpush.bf16.msra.mxu0 %v731
      %741 = vmatpush.bf16.msra.mxu0 %v730
      %742 = vmatpush.bf16.msra.mxu0 %v729
      %743 = vmatpush.bf16.msra.mxu0 %v728
      %744 = vmatpush.bf16.msra.mxu0 %v727
      %745 = vmatpush.bf16.msra.mxu0 %v726
      %746 = vmatpush.bf16.msra.mxu0 %v725
      %747 = vmatpush.bf16.msra.mxu0 %v724
      %748 = vmatmul.bf16.gmra.mxu0 %v684
      %v749 = vpop.f32.mrf.mxu0
      %v750 = vadd.f32 %v665, %v749
      %v751 = vpop.f32.mrf.mxu0
      %v752 = vadd.f32 %v667, %v751
      %753 = vmatmul.bf16.gmra.mxu0 %v685
      %v754 = vpop.f32.mrf.mxu0
      %v755 = vadd.f32 %v670, %v754
      %v756 = vpop.f32.mrf.mxu0
      %v757 = vadd.f32 %v672, %v756
      %758 = vmatmul.bf16.gmra.mxu0 %v686
      %v759 = vpop.f32.mrf.mxu0
      %v760 = vadd.f32 %v675, %v759
      %v761 = vpop.f32.mrf.mxu0
      %v762 = vadd.f32 %v677, %v761
      %763 = vmatmul.bf16.gmra.mxu0 %v687
      %v764 = vpop.f32.mrf.mxu0
      %v765 = vadd.f32 %v680, %v764
      %v766 = vpop.f32.mrf.mxu0
      %v767 = vadd.f32 %v682, %v766
      %768 = vdwg.mxu0
      %vm769 = vcmask 1042432
      %vm770 = vcmask 1046532
      %vm771 = vmor %vm769, %vm770
      %v772 = vrot.slane %v443, 5
      %v773 = vrot.slane %v772, 4
      %v774 = vrot.slane %v444, 5
      %v775 = vsel %vm771, %v773, %v774
      %v776 = vrot.slane %v445, 5
      %v777 = vrot.slane %v776, 4
      %v778 = vrot.slane %v446, 5
      %v779 = vsel %vm771, %v777, %v778
      %v780 = vrot.slane %v447, 5
      %v781 = vrot.slane %v780, 4
      %v782 = vrot.slane %v448, 5
      %v783 = vsel %vm771, %v781, %v782
      %v784 = vrot.slane %v449, 5
      %v785 = vrot.slane %v784, 4
      %v786 = vrot.slane %v450, 5
      %v787 = vsel %vm771, %v785, %v786
      %v788 = vrot.slane %v451, 5
      %v789 = vrot.slane %v788, 4
      %v790 = vrot.slane %v452, 5
      %v791 = vsel %vm771, %v789, %v790
      %v792 = vrot.slane %v453, 5
      %v793 = vrot.slane %v792, 4
      %v794 = vrot.slane %v454, 5
      %v795 = vsel %vm771, %v793, %v794
      %v796 = vrot.slane %v455, 5
      %v797 = vrot.slane %v796, 4
      %v798 = vrot.slane %v456, 5
      %v799 = vsel %vm771, %v797, %v798
      %v800 = vrot.slane %v457, 5
      %v801 = vrot.slane %v800, 4
      %v802 = vrot.slane %v458, 5
      %v803 = vsel %vm771, %v801, %v802
      %s804 = scalar_lea.vmem %s3, 128
      %v805 = vld [vmem:[%s804] sm:$0xf]
      %v806 = vld [vmem:[%s804 + $0x4] sm:$0xf]
      %v807 = vld [vmem:[%s804 + $0x8] sm:$0xf]
      %v808 = vld [vmem:[%s804 + $0xc] sm:$0xf]
      %v809 = vld [vmem:[%s804 + $0x10] sm:$0xf]
      %v810 = vld [vmem:[%s804 + $0x14] sm:$0xf]
      %v811 = vld [vmem:[%s804 + $0x18] sm:$0xf]
      %v812 = vld [vmem:[%s804 + $0x1c] sm:$0xf]
      %v813 = vld [vmem:[%s804 + $0x20] sm:$0xf]
      %v814 = vld [vmem:[%s804 + $0x24] sm:$0xf]
      %v815 = vld [vmem:[%s804 + $0x28] sm:$0xf]
      %v816 = vld [vmem:[%s804 + $0x2c] sm:$0xf]
      %v817 = vld [vmem:[%s804 + $0x30] sm:$0xf]
      %v818 = vld [vmem:[%s804 + $0x34] sm:$0xf]
      %v819 = vld [vmem:[%s804 + $0x38] sm:$0xf]
      %v820 = vld [vmem:[%s804 + $0x3c] sm:$0xf]
      %v821 = vunpack.c.l.b16 %v775
      %v822 = vunpack.c.l.b16 %v779
      %v823 = vunpack.c.l.b16 %v783
      %v824 = vunpack.c.l.b16 %v787
      %v825 = vunpack.c.l.b16 %v791
      %v826 = vunpack.c.l.b16 %v795
      %v827 = vunpack.c.l.b16 %v799
      %v828 = vunpack.c.l.b16 %v803
      %v829 = vpack.c.b16 %v822, %v821
      %v830 = vpack.c.b16 %v824, %v823
      %v831 = vpack.c.b16 %v826, %v825
      %v832 = vpack.c.b16 %v828, %v827
      %v853 = vunpack.c.l.b16 %v805
      %v854 = vunpack.c.l.b16 %v806
      %v855 = vunpack.c.l.b16 %v807
      %v856 = vunpack.c.l.b16 %v808
      %v857 = vunpack.c.l.b16 %v809
      %v858 = vunpack.c.l.b16 %v810
      %v859 = vunpack.c.l.b16 %v811
      %v860 = vunpack.c.l.b16 %v812
      %v861 = vunpack.c.l.b16 %v813
      %v862 = vunpack.c.l.b16 %v814
      %v863 = vunpack.c.l.b16 %v815
      %v864 = vunpack.c.l.b16 %v816
      %v865 = vunpack.c.l.b16 %v817
      %v866 = vunpack.c.l.b16 %v818
      %v867 = vunpack.c.l.b16 %v819
      %v868 = vunpack.c.l.b16 %v820
      %v869 = vpack.c.b16 %v854, %v853
      %v870 = vpack.c.b16 %v856, %v855
      %v871 = vpack.c.b16 %v858, %v857
      %v872 = vpack.c.b16 %v860, %v859
      %v873 = vpack.c.b16 %v862, %v861
      %v874 = vpack.c.b16 %v864, %v863
      %v875 = vpack.c.b16 %v866, %v865
      %v876 = vpack.c.b16 %v868, %v867
      %885 = vmatpush.bf16.msra.mxu0 %v876
      %886 = vmatpush.bf16.msra.mxu0 %v875
      %887 = vmatpush.bf16.msra.mxu0 %v874
      %888 = vmatpush.bf16.msra.mxu0 %v873
      %889 = vmatpush.bf16.msra.mxu0 %v872
      %890 = vmatpush.bf16.msra.mxu0 %v871
      %891 = vmatpush.bf16.msra.mxu0 %v870
      %892 = vmatpush.bf16.msra.mxu0 %v869
      %893 = vmatmul.bf16.gmra.mxu0 %v829
      %v894 = vpop.f32.mrf.mxu0
      %v895 = vadd.f32 0.0, %v894
      %v896 = vpop.f32.mrf.mxu0
      %v897 = vadd.f32 0.0, %v896
      %898 = vmatmul.bf16.gmra.mxu0 %v830
      %v899 = vpop.f32.mrf.mxu0
      %v900 = vadd.f32 0.0, %v899
      %v901 = vpop.f32.mrf.mxu0
      %v902 = vadd.f32 0.0, %v901
      %903 = vmatmul.bf16.gmra.mxu0 %v831
      %v904 = vpop.f32.mrf.mxu0
      %v905 = vadd.f32 0.0, %v904
      %v906 = vpop.f32.mrf.mxu0
      %v907 = vadd.f32 0.0, %v906
      %908 = vmatmul.bf16.gmra.mxu0 %v832
      %v909 = vpop.f32.mrf.mxu0
      %v910 = vadd.f32 0.0, %v909
      %v911 = vpop.f32.mrf.mxu0
      %v912 = vadd.f32 0.0, %v911
      %913 = vdwg.mxu0
      %v914 = vadd.f32 %v750, %v895
      %v915 = vadd.f32 %v752, %v897
      %v916 = vadd.f32 %v755, %v900
      %v917 = vadd.f32 %v757, %v902
      %v918 = vadd.f32 %v760, %v905
      %v919 = vadd.f32 %v762, %v907
      %v920 = vadd.f32 %v765, %v910
      %v921 = vadd.f32 %v767, %v912
      %s922 = scalar_lea.vmem %s3, 192
      %v923 = vld [vmem:[%s922] sm:$0xf]
      %v924 = vld [vmem:[%s922 + $0x4] sm:$0xf]
      %v925 = vld [vmem:[%s922 + $0x8] sm:$0xf]
      %v926 = vld [vmem:[%s922 + $0xc] sm:$0xf]
      %v927 = vld [vmem:[%s922 + $0x10] sm:$0xf]
      %v928 = vld [vmem:[%s922 + $0x14] sm:$0xf]
      %v929 = vld [vmem:[%s922 + $0x18] sm:$0xf]
      %v930 = vld [vmem:[%s922 + $0x1c] sm:$0xf]
      %v931 = vld [vmem:[%s922 + $0x20] sm:$0xf]
      %v932 = vld [vmem:[%s922 + $0x24] sm:$0xf]
      %v933 = vld [vmem:[%s922 + $0x28] sm:$0xf]
      %v934 = vld [vmem:[%s922 + $0x2c] sm:$0xf]
      %v935 = vld [vmem:[%s922 + $0x30] sm:$0xf]
      %v936 = vld [vmem:[%s922 + $0x34] sm:$0xf]
      %v937 = vld [vmem:[%s922 + $0x38] sm:$0xf]
      %v938 = vld [vmem:[%s922 + $0x3c] sm:$0xf]
      %v940 = vunpack.c.l.b16 %v402
      %v941 = vpack.c.b16 %v431, %v429
      %v942 = vpack.c.b16 %v435, %v433
      %v943 = vpack.c.b16 %v439, %v437
      %v944 = vpack.c.b16 %v940, %v441
      %v965 = vunpack.c.l.b16 %v923
      %v966 = vunpack.c.l.b16 %v924
      %v967 = vunpack.c.l.b16 %v925
      %v968 = vunpack.c.l.b16 %v926
      %v969 = vunpack.c.l.b16 %v927
      %v970 = vunpack.c.l.b16 %v928
      %v971 = vunpack.c.l.b16 %v929
      %v972 = vunpack.c.l.b16 %v930
      %v973 = vunpack.c.l.b16 %v931
      %v974 = vunpack.c.l.b16 %v932
      %v975 = vunpack.c.l.b16 %v933
      %v976 = vunpack.c.l.b16 %v934
      %v977 = vunpack.c.l.b16 %v935
      %v978 = vunpack.c.l.b16 %v936
      %v979 = vunpack.c.l.b16 %v937
      %v980 = vunpack.c.l.b16 %v938
      %v981 = vpack.c.b16 %v966, %v965
      %v982 = vpack.c.b16 %v968, %v967
      %v983 = vpack.c.b16 %v970, %v969
      %v984 = vpack.c.b16 %v972, %v971
      %v985 = vpack.c.b16 %v974, %v973
      %v986 = vpack.c.b16 %v976, %v975
      %v987 = vpack.c.b16 %v978, %v977
      %v988 = vpack.c.b16 %v980, %v979
      %997 = vmatpush.bf16.msra.mxu0 %v988
      %998 = vmatpush.bf16.msra.mxu0 %v987
      %999 = vmatpush.bf16.msra.mxu0 %v986
      %1000 = vmatpush.bf16.msra.mxu0 %v985
      %1001 = vmatpush.bf16.msra.mxu0 %v984
      %1002 = vmatpush.bf16.msra.mxu0 %v983
      %1003 = vmatpush.bf16.msra.mxu0 %v982
      %1004 = vmatpush.bf16.msra.mxu0 %v981
      %1005 = vmatmul.bf16.gmra.mxu0 %v941
      %v1006 = vpop.f32.mrf.mxu0
      %v1007 = vadd.f32 0.0, %v1006
      %v1008 = vpop.f32.mrf.mxu0
      %v1009 = vadd.f32 0.0, %v1008
      %1010 = vmatmul.bf16.gmra.mxu0 %v942
      %v1011 = vpop.f32.mrf.mxu0
      %v1012 = vadd.f32 0.0, %v1011
      %v1013 = vpop.f32.mrf.mxu0
      %v1014 = vadd.f32 0.0, %v1013
      %1015 = vmatmul.bf16.gmra.mxu0 %v943
      %v1016 = vpop.f32.mrf.mxu0
      %v1017 = vadd.f32 0.0, %v1016
      %v1018 = vpop.f32.mrf.mxu0
      %v1019 = vadd.f32 0.0, %v1018
      %1020 = vmatmul.bf16.gmra.mxu0 %v944
      %v1021 = vpop.f32.mrf.mxu0
      %v1022 = vadd.f32 0.0, %v1021
      %v1023 = vpop.f32.mrf.mxu0
      %v1024 = vadd.f32 0.0, %v1023
      %1025 = vdwg.mxu0
      %v1026 = vadd.f32 %v914, %v1007
      %v1027 = vadd.f32 %v915, %v1009
      %v1028 = vadd.f32 %v916, %v1012
      %v1029 = vadd.f32 %v917, %v1014
      %v1030 = vadd.f32 %v918, %v1017
      %v1031 = vadd.f32 %v919, %v1019
      %v1032 = vadd.f32 %v920, %v1022
      %v1033 = vadd.f32 %v921, %v1024
      %v1034 = vunpack.c.h.b16 %v402
      %v1035 = vpack.c.b16 %v940, %v940
      %v1036 = vpack.c.b16 %v1034, %v1034
      %v1038 = vshrl.u32 %v1035, 16
      %v1040 = vrot.slane %v1038, 4
      %v1041 = vshll.u32 %v1035, 16
      %v1043 = vrot.slane %v1041, 5
      %v1044 = vor.u32 %v1040, %v1043
      %v1045 = vrot.slane %v1044, 4
      %v1047 = vshll.u32 %v1036, 16
      %v1049 = vrot.slane %v1047, 5
      %v1050 = vsel %vm461, %v1045, %v1049
      %s1051 = scalar_lea.vmem %s3, 256
      %v1052 = vld [vmem:[%s1051] sm:$0xf]
      %v1053 = vld [vmem:[%s1051 + $0x4] sm:$0xf]
      %v1054 = vld [vmem:[%s1051 + $0x8] sm:$0xf]
      %v1055 = vld [vmem:[%s1051 + $0xc] sm:$0xf]
      %v1056 = vld [vmem:[%s1051 + $0x10] sm:$0xf]
      %v1057 = vld [vmem:[%s1051 + $0x14] sm:$0xf]
      %v1058 = vld [vmem:[%s1051 + $0x18] sm:$0xf]
      %v1059 = vld [vmem:[%s1051 + $0x1c] sm:$0xf]
      %v1060 = vld [vmem:[%s1051 + $0x20] sm:$0xf]
      %v1061 = vld [vmem:[%s1051 + $0x24] sm:$0xf]
      %v1062 = vld [vmem:[%s1051 + $0x28] sm:$0xf]
      %v1063 = vld [vmem:[%s1051 + $0x2c] sm:$0xf]
      %v1064 = vld [vmem:[%s1051 + $0x30] sm:$0xf]
      %v1065 = vld [vmem:[%s1051 + $0x34] sm:$0xf]
      %v1066 = vld [vmem:[%s1051 + $0x38] sm:$0xf]
      %v1067 = vld [vmem:[%s1051 + $0x3c] sm:$0xf]
      %v1068 = vunpack.c.l.b16 %v1050
      %v1069 = vpack.c.b16 %v593, %v592
      %v1070 = vpack.c.b16 %v595, %v594
      %v1071 = vpack.c.b16 %v597, %v596
      %v1072 = vpack.c.b16 %v1068, %v598
      %v1093 = vunpack.c.l.b16 %v1052
      %v1094 = vunpack.c.l.b16 %v1053
      %v1095 = vunpack.c.l.b16 %v1054
      %v1096 = vunpack.c.l.b16 %v1055
      %v1097 = vunpack.c.l.b16 %v1056
      %v1098 = vunpack.c.l.b16 %v1057
      %v1099 = vunpack.c.l.b16 %v1058
      %v1100 = vunpack.c.l.b16 %v1059
      %v1101 = vunpack.c.l.b16 %v1060
      %v1102 = vunpack.c.l.b16 %v1061
      %v1103 = vunpack.c.l.b16 %v1062
      %v1104 = vunpack.c.l.b16 %v1063
      %v1105 = vunpack.c.l.b16 %v1064
      %v1106 = vunpack.c.l.b16 %v1065
      %v1107 = vunpack.c.l.b16 %v1066
      %v1108 = vunpack.c.l.b16 %v1067
      %v1109 = vpack.c.b16 %v1094, %v1093
      %v1110 = vpack.c.b16 %v1096, %v1095
      %v1111 = vpack.c.b16 %v1098, %v1097
      %v1112 = vpack.c.b16 %v1100, %v1099
      %v1113 = vpack.c.b16 %v1102, %v1101
      %v1114 = vpack.c.b16 %v1104, %v1103
      %v1115 = vpack.c.b16 %v1106, %v1105
      %v1116 = vpack.c.b16 %v1108, %v1107
      %1125 = vmatpush.bf16.msra.mxu0 %v1116
      %1126 = vmatpush.bf16.msra.mxu0 %v1115
      %1127 = vmatpush.bf16.msra.mxu0 %v1114
      %1128 = vmatpush.bf16.msra.mxu0 %v1113
      %1129 = vmatpush.bf16.msra.mxu0 %v1112
      %1130 = vmatpush.bf16.msra.mxu0 %v1111
      %1131 = vmatpush.bf16.msra.mxu0 %v1110
      %1132 = vmatpush.bf16.msra.mxu0 %v1109
      %1133 = vmatmul.bf16.gmra.mxu0 %v1069
      %v1134 = vpop.f32.mrf.mxu0
      %v1135 = vadd.f32 0.0, %v1134
      %v1136 = vpop.f32.mrf.mxu0
      %v1137 = vadd.f32 0.0, %v1136
      %1138 = vmatmul.bf16.gmra.mxu0 %v1070
      %v1139 = vpop.f32.mrf.mxu0
      %v1140 = vadd.f32 0.0, %v1139
      %v1141 = vpop.f32.mrf.mxu0
      %v1142 = vadd.f32 0.0, %v1141
      %1143 = vmatmul.bf16.gmra.mxu0 %v1071
      %v1144 = vpop.f32.mrf.mxu0
      %v1145 = vadd.f32 0.0, %v1144
      %v1146 = vpop.f32.mrf.mxu0
      %v1147 = vadd.f32 0.0, %v1146
      %1148 = vmatmul.bf16.gmra.mxu0 %v1072
      %v1149 = vpop.f32.mrf.mxu0
      %v1150 = vadd.f32 0.0, %v1149
      %v1151 = vpop.f32.mrf.mxu0
      %v1152 = vadd.f32 0.0, %v1151
      %1153 = vdwg.mxu0
      %v1154 = vadd.f32 %v1026, %v1135
      %v1155 = vadd.f32 %v1027, %v1137
      %v1156 = vadd.f32 %v1028, %v1140
      %v1157 = vadd.f32 %v1029, %v1142
      %v1158 = vadd.f32 %v1030, %v1145
      %v1159 = vadd.f32 %v1031, %v1147
      %v1160 = vadd.f32 %v1032, %v1150
      %v1161 = vadd.f32 %v1033, %v1152
      %v1162 = vrot.slane %v1035, 5
      %v1163 = vrot.slane %v1162, 4
      %v1164 = vrot.slane %v1036, 5
      %v1165 = vsel %vm771, %v1163, %v1164
      %s1166 = scalar_lea.vmem %s3, 320
      %v1167 = vld [vmem:[%s1166] sm:$0xf]
      %v1168 = vld [vmem:[%s1166 + $0x4] sm:$0xf]
      %v1169 = vld [vmem:[%s1166 + $0x8] sm:$0xf]
      %v1170 = vld [vmem:[%s1166 + $0xc] sm:$0xf]
      %v1171 = vld [vmem:[%s1166 + $0x10] sm:$0xf]
      %v1172 = vld [vmem:[%s1166 + $0x14] sm:$0xf]
      %v1173 = vld [vmem:[%s1166 + $0x18] sm:$0xf]
      %v1174 = vld [vmem:[%s1166 + $0x1c] sm:$0xf]
      %v1175 = vld [vmem:[%s1166 + $0x20] sm:$0xf]
      %v1176 = vld [vmem:[%s1166 + $0x24] sm:$0xf]
      %v1177 = vld [vmem:[%s1166 + $0x28] sm:$0xf]
      %v1178 = vld [vmem:[%s1166 + $0x2c] sm:$0xf]
      %v1179 = vld [vmem:[%s1166 + $0x30] sm:$0xf]
      %v1180 = vld [vmem:[%s1166 + $0x34] sm:$0xf]
      %v1181 = vld [vmem:[%s1166 + $0x38] sm:$0xf]
      %v1182 = vld [vmem:[%s1166 + $0x3c] sm:$0xf]
      %v1183 = vunpack.c.l.b16 %v1165
      %v1184 = vpack.c.b16 %v823, %v822
      %v1185 = vpack.c.b16 %v825, %v824
      %v1186 = vpack.c.b16 %v827, %v826
      %v1187 = vpack.c.b16 %v1183, %v828
      %v1208 = vunpack.c.l.b16 %v1167
      %v1209 = vunpack.c.l.b16 %v1168
      %v1210 = vunpack.c.l.b16 %v1169
      %v1211 = vunpack.c.l.b16 %v1170
      %v1212 = vunpack.c.l.b16 %v1171
      %v1213 = vunpack.c.l.b16 %v1172
      %v1214 = vunpack.c.l.b16 %v1173
      %v1215 = vunpack.c.l.b16 %v1174
      %v1216 = vunpack.c.l.b16 %v1175
      %v1217 = vunpack.c.l.b16 %v1176
      %v1218 = vunpack.c.l.b16 %v1177
      %v1219 = vunpack.c.l.b16 %v1178
      %v1220 = vunpack.c.l.b16 %v1179
      %v1221 = vunpack.c.l.b16 %v1180
      %v1222 = vunpack.c.l.b16 %v1181
      %v1223 = vunpack.c.l.b16 %v1182
      %v1224 = vpack.c.b16 %v1209, %v1208
      %v1225 = vpack.c.b16 %v1211, %v1210
      %v1226 = vpack.c.b16 %v1213, %v1212
      %v1227 = vpack.c.b16 %v1215, %v1214
      %v1228 = vpack.c.b16 %v1217, %v1216
      %v1229 = vpack.c.b16 %v1219, %v1218
      %v1230 = vpack.c.b16 %v1221, %v1220
      %v1231 = vpack.c.b16 %v1223, %v1222
      %1240 = vmatpush.bf16.msra.mxu0 %v1231
      %1241 = vmatpush.bf16.msra.mxu0 %v1230
      %1242 = vmatpush.bf16.msra.mxu0 %v1229
      %1243 = vmatpush.bf16.msra.mxu0 %v1228
      %1244 = vmatpush.bf16.msra.mxu0 %v1227
      %1245 = vmatpush.bf16.msra.mxu0 %v1226
      %1246 = vmatpush.bf16.msra.mxu0 %v1225
      %1247 = vmatpush.bf16.msra.mxu0 %v1224
      %1248 = vmatmul.bf16.gmra.mxu0 %v1184
      %v1249 = vpop.f32.mrf.mxu0
      %v1250 = vadd.f32 0.0, %v1249
      %v1251 = vpop.f32.mrf.mxu0
      %v1252 = vadd.f32 0.0, %v1251
      %1253 = vmatmul.bf16.gmra.mxu0 %v1185
      %v1254 = vpop.f32.mrf.mxu0
      %v1255 = vadd.f32 0.0, %v1254
      %v1256 = vpop.f32.mrf.mxu0
      %v1257 = vadd.f32 0.0, %v1256
      %1258 = vmatmul.bf16.gmra.mxu0 %v1186
      %v1259 = vpop.f32.mrf.mxu0
      %v1260 = vadd.f32 0.0, %v1259
      %v1261 = vpop.f32.mrf.mxu0
      %v1262 = vadd.f32 0.0, %v1261
      %1263 = vmatmul.bf16.gmra.mxu0 %v1187
      %v1264 = vpop.f32.mrf.mxu0
      %v1265 = vadd.f32 0.0, %v1264
      %v1266 = vpop.f32.mrf.mxu0
      %v1267 = vadd.f32 0.0, %v1266
      %1268 = vdwg.mxu0
      %v1269 = vadd.f32 %v1154, %v1250
      %v1270 = vadd.f32 %v1155, %v1252
      %v1271 = vadd.f32 %v1156, %v1255
      %v1272 = vadd.f32 %v1157, %v1257
      %v1273 = vadd.f32 %v1158, %v1260
      %v1274 = vadd.f32 %v1159, %v1262
      %v1275 = vadd.f32 %v1160, %v1265
      %v1276 = vadd.f32 %v1161, %v1267
      %s1277 = scalar_lea.vmem %s3, 384
      %v1278 = vld [vmem:[%s1277] sm:$0xf]
      %v1279 = vld [vmem:[%s1277 + $0x4] sm:$0xf]
      %v1280 = vld [vmem:[%s1277 + $0x8] sm:$0xf]
      %v1281 = vld [vmem:[%s1277 + $0xc] sm:$0xf]
      %v1282 = vld [vmem:[%s1277 + $0x10] sm:$0xf]
      %v1283 = vld [vmem:[%s1277 + $0x14] sm:$0xf]
      %v1284 = vld [vmem:[%s1277 + $0x18] sm:$0xf]
      %v1285 = vld [vmem:[%s1277 + $0x1c] sm:$0xf]
      %v1286 = vld [vmem:[%s1277 + $0x20] sm:$0xf]
      %v1287 = vld [vmem:[%s1277 + $0x24] sm:$0xf]
      %v1288 = vld [vmem:[%s1277 + $0x28] sm:$0xf]
      %v1289 = vld [vmem:[%s1277 + $0x2c] sm:$0xf]
      %v1290 = vld [vmem:[%s1277 + $0x30] sm:$0xf]
      %v1291 = vld [vmem:[%s1277 + $0x34] sm:$0xf]
      %v1292 = vld [vmem:[%s1277 + $0x38] sm:$0xf]
      %v1293 = vld [vmem:[%s1277 + $0x3c] sm:$0xf]
      %v1294 = vpack.c.b16 %v427, %v940
      %v1312 = vunpack.c.l.b16 %v1278
      %v1313 = vunpack.c.l.b16 %v1279
      %v1314 = vunpack.c.l.b16 %v1280
      %v1315 = vunpack.c.l.b16 %v1281
      %v1316 = vunpack.c.l.b16 %v1282
      %v1317 = vunpack.c.l.b16 %v1283
      %v1318 = vunpack.c.l.b16 %v1284
      %v1319 = vunpack.c.l.b16 %v1285
      %v1320 = vunpack.c.l.b16 %v1286
      %v1321 = vunpack.c.l.b16 %v1287
      %v1322 = vunpack.c.l.b16 %v1288
      %v1323 = vunpack.c.l.b16 %v1289
      %v1324 = vunpack.c.l.b16 %v1290
      %v1325 = vunpack.c.l.b16 %v1291
      %v1326 = vunpack.c.l.b16 %v1292
      %v1327 = vunpack.c.l.b16 %v1293
      %v1328 = vpack.c.b16 %v1313, %v1312
      %v1329 = vpack.c.b16 %v1315, %v1314
      %v1330 = vpack.c.b16 %v1317, %v1316
      %v1331 = vpack.c.b16 %v1319, %v1318
      %v1332 = vpack.c.b16 %v1321, %v1320
      %v1333 = vpack.c.b16 %v1323, %v1322
      %v1334 = vpack.c.b16 %v1325, %v1324
      %v1335 = vpack.c.b16 %v1327, %v1326
      %1344 = vmatpush.bf16.msra.mxu0 %v1335
      %1345 = vmatpush.bf16.msra.mxu0 %v1334
      %1346 = vmatpush.bf16.msra.mxu0 %v1333
      %1347 = vmatpush.bf16.msra.mxu0 %v1332
      %1348 = vmatpush.bf16.msra.mxu0 %v1331
      %1349 = vmatpush.bf16.msra.mxu0 %v1330
      %1350 = vmatpush.bf16.msra.mxu0 %v1329
      %1351 = vmatpush.bf16.msra.mxu0 %v1328
      %1352 = vmatmul.bf16.gmra.mxu0 %v685
      %v1353 = vpop.f32.mrf.mxu0
      %v1354 = vadd.f32 0.0, %v1353
      %v1355 = vpop.f32.mrf.mxu0
      %v1356 = vadd.f32 0.0, %v1355
      %1357 = vmatmul.bf16.gmra.mxu0 %v686
      %v1358 = vpop.f32.mrf.mxu0
      %v1359 = vadd.f32 0.0, %v1358
      %v1360 = vpop.f32.mrf.mxu0
      %v1361 = vadd.f32 0.0, %v1360
      %1362 = vmatmul.bf16.gmra.mxu0 %v687
      %v1363 = vpop.f32.mrf.mxu0
      %v1364 = vadd.f32 0.0, %v1363
      %v1365 = vpop.f32.mrf.mxu0
      %v1366 = vadd.f32 0.0, %v1365
      %1367 = vmatmul.bf16.gmra.mxu0 %v1294
      %v1368 = vpop.f32.mrf.mxu0
      %v1369 = vadd.f32 0.0, %v1368
      %v1370 = vpop.f32.mrf.mxu0
      %v1371 = vadd.f32 0.0, %v1370
      %1372 = vdwg.mxu0
      %v1373 = vadd.f32 %v1269, %v1354
      %v1374 = vadd.f32 %v1270, %v1356
      %v1375 = vadd.f32 %v1271, %v1359
      %v1376 = vadd.f32 %v1272, %v1361
      %v1377 = vadd.f32 %v1273, %v1364
      %v1378 = vadd.f32 %v1274, %v1366
      %v1379 = vadd.f32 %v1275, %v1369
      %v1380 = vadd.f32 %v1276, %v1371
      %s1381 = scalar_lea.vmem %s3, 448
      %v1382 = vld [vmem:[%s1381] sm:$0xf]
      %v1383 = vld [vmem:[%s1381 + $0x4] sm:$0xf]
      %v1384 = vld [vmem:[%s1381 + $0x8] sm:$0xf]
      %v1385 = vld [vmem:[%s1381 + $0xc] sm:$0xf]
      %v1386 = vld [vmem:[%s1381 + $0x10] sm:$0xf]
      %v1387 = vld [vmem:[%s1381 + $0x14] sm:$0xf]
      %v1388 = vld [vmem:[%s1381 + $0x18] sm:$0xf]
      %v1389 = vld [vmem:[%s1381 + $0x1c] sm:$0xf]
      %v1390 = vld [vmem:[%s1381 + $0x20] sm:$0xf]
      %v1391 = vld [vmem:[%s1381 + $0x24] sm:$0xf]
      %v1392 = vld [vmem:[%s1381 + $0x28] sm:$0xf]
      %v1393 = vld [vmem:[%s1381 + $0x2c] sm:$0xf]
      %v1394 = vld [vmem:[%s1381 + $0x30] sm:$0xf]
      %v1395 = vld [vmem:[%s1381 + $0x34] sm:$0xf]
      %v1396 = vld [vmem:[%s1381 + $0x38] sm:$0xf]
      %v1397 = vld [vmem:[%s1381 + $0x3c] sm:$0xf]
      %v1398 = vpack.c.b16 %v591, %v1068
      %v1416 = vunpack.c.l.b16 %v1382
      %v1417 = vunpack.c.l.b16 %v1383
      %v1418 = vunpack.c.l.b16 %v1384
      %v1419 = vunpack.c.l.b16 %v1385
      %v1420 = vunpack.c.l.b16 %v1386
      %v1421 = vunpack.c.l.b16 %v1387
      %v1422 = vunpack.c.l.b16 %v1388
      %v1423 = vunpack.c.l.b16 %v1389
      %v1424 = vunpack.c.l.b16 %v1390
      %v1425 = vunpack.c.l.b16 %v1391
      %v1426 = vunpack.c.l.b16 %v1392
      %v1427 = vunpack.c.l.b16 %v1393
      %v1428 = vunpack.c.l.b16 %v1394
      %v1429 = vunpack.c.l.b16 %v1395
      %v1430 = vunpack.c.l.b16 %v1396
      %v1431 = vunpack.c.l.b16 %v1397
      %v1432 = vpack.c.b16 %v1417, %v1416
      %v1433 = vpack.c.b16 %v1419, %v1418
      %v1434 = vpack.c.b16 %v1421, %v1420
      %v1435 = vpack.c.b16 %v1423, %v1422
      %v1436 = vpack.c.b16 %v1425, %v1424
      %v1437 = vpack.c.b16 %v1427, %v1426
      %v1438 = vpack.c.b16 %v1429, %v1428
      %v1439 = vpack.c.b16 %v1431, %v1430
      %1448 = vmatpush.bf16.msra.mxu0 %v1439
      %1449 = vmatpush.bf16.msra.mxu0 %v1438
      %1450 = vmatpush.bf16.msra.mxu0 %v1437
      %1451 = vmatpush.bf16.msra.mxu0 %v1436
      %1452 = vmatpush.bf16.msra.mxu0 %v1435
      %1453 = vmatpush.bf16.msra.mxu0 %v1434
      %1454 = vmatpush.bf16.msra.mxu0 %v1433
      %1455 = vmatpush.bf16.msra.mxu0 %v1432
      %1456 = vmatmul.bf16.gmra.mxu0 %v600
      %v1457 = vpop.f32.mrf.mxu0
      %v1458 = vadd.f32 0.0, %v1457
      %v1459 = vpop.f32.mrf.mxu0
      %v1460 = vadd.f32 0.0, %v1459
      %1461 = vmatmul.bf16.gmra.mxu0 %v601
      %v1462 = vpop.f32.mrf.mxu0
      %v1463 = vadd.f32 0.0, %v1462
      %v1464 = vpop.f32.mrf.mxu0
      %v1465 = vadd.f32 0.0, %v1464
      %1466 = vmatmul.bf16.gmra.mxu0 %v602
      %v1467 = vpop.f32.mrf.mxu0
      %v1468 = vadd.f32 0.0, %v1467
      %v1469 = vpop.f32.mrf.mxu0
      %v1470 = vadd.f32 0.0, %v1469
      %1471 = vmatmul.bf16.gmra.mxu0 %v1398
      %v1472 = vpop.f32.mrf.mxu0
      %v1473 = vadd.f32 0.0, %v1472
      %v1474 = vpop.f32.mrf.mxu0
      %v1475 = vadd.f32 0.0, %v1474
      %1476 = vdwg.mxu0
      %v1477 = vadd.f32 %v1373, %v1458
      %v1478 = vadd.f32 %v1374, %v1460
      %v1479 = vadd.f32 %v1375, %v1463
      %v1480 = vadd.f32 %v1376, %v1465
      %v1481 = vadd.f32 %v1377, %v1468
      %v1482 = vadd.f32 %v1378, %v1470
      %v1483 = vadd.f32 %v1379, %v1473
      %v1484 = vadd.f32 %v1380, %v1475
      %s1485 = scalar_lea.vmem %s3, 512
      %v1486 = vld [vmem:[%s1485] sm:$0xf]
      %v1487 = vld [vmem:[%s1485 + $0x4] sm:$0xf]
      %v1488 = vld [vmem:[%s1485 + $0x8] sm:$0xf]
      %v1489 = vld [vmem:[%s1485 + $0xc] sm:$0xf]
      %v1490 = vld [vmem:[%s1485 + $0x10] sm:$0xf]
      %v1491 = vld [vmem:[%s1485 + $0x14] sm:$0xf]
      %v1492 = vld [vmem:[%s1485 + $0x18] sm:$0xf]
      %v1493 = vld [vmem:[%s1485 + $0x1c] sm:$0xf]
      %v1494 = vld [vmem:[%s1485 + $0x20] sm:$0xf]
      %v1495 = vld [vmem:[%s1485 + $0x24] sm:$0xf]
      %v1496 = vld [vmem:[%s1485 + $0x28] sm:$0xf]
      %v1497 = vld [vmem:[%s1485 + $0x2c] sm:$0xf]
      %v1498 = vld [vmem:[%s1485 + $0x30] sm:$0xf]
      %v1499 = vld [vmem:[%s1485 + $0x34] sm:$0xf]
      %v1500 = vld [vmem:[%s1485 + $0x38] sm:$0xf]
      %v1501 = vld [vmem:[%s1485 + $0x3c] sm:$0xf]
      %v1502 = vpack.c.b16 %v821, %v1183
      %v1520 = vunpack.c.l.b16 %v1486
      %v1521 = vunpack.c.l.b16 %v1487
      %v1522 = vunpack.c.l.b16 %v1488
      %v1523 = vunpack.c.l.b16 %v1489
      %v1524 = vunpack.c.l.b16 %v1490
      %v1525 = vunpack.c.l.b16 %v1491
      %v1526 = vunpack.c.l.b16 %v1492
      %v1527 = vunpack.c.l.b16 %v1493
      %v1528 = vunpack.c.l.b16 %v1494
      %v1529 = vunpack.c.l.b16 %v1495
      %v1530 = vunpack.c.l.b16 %v1496
      %v1531 = vunpack.c.l.b16 %v1497
      %v1532 = vunpack.c.l.b16 %v1498
      %v1533 = vunpack.c.l.b16 %v1499
      %v1534 = vunpack.c.l.b16 %v1500
      %v1535 = vunpack.c.l.b16 %v1501
      %v1536 = vpack.c.b16 %v1521, %v1520
      %v1537 = vpack.c.b16 %v1523, %v1522
      %v1538 = vpack.c.b16 %v1525, %v1524
      %v1539 = vpack.c.b16 %v1527, %v1526
      %v1540 = vpack.c.b16 %v1529, %v1528
      %v1541 = vpack.c.b16 %v1531, %v1530
      %v1542 = vpack.c.b16 %v1533, %v1532
      %v1543 = vpack.c.b16 %v1535, %v1534
      %1552 = vmatpush.bf16.msra.mxu0 %v1543
      %1553 = vmatpush.bf16.msra.mxu0 %v1542
      %1554 = vmatpush.bf16.msra.mxu0 %v1541
      %1555 = vmatpush.bf16.msra.mxu0 %v1540
      %1556 = vmatpush.bf16.msra.mxu0 %v1539
      %1557 = vmatpush.bf16.msra.mxu0 %v1538
      %1558 = vmatpush.bf16.msra.mxu0 %v1537
      %1559 = vmatpush.bf16.msra.mxu0 %v1536
      %1560 = vmatmul.bf16.gmra.mxu0 %v830
      %v1561 = vpop.f32.mrf.mxu0
      %v1562 = vadd.f32 0.0, %v1561
      %v1563 = vpop.f32.mrf.mxu0
      %v1564 = vadd.f32 0.0, %v1563
      %1565 = vmatmul.bf16.gmra.mxu0 %v831
      %v1566 = vpop.f32.mrf.mxu0
      %v1567 = vadd.f32 0.0, %v1566
      %v1568 = vpop.f32.mrf.mxu0
      %v1569 = vadd.f32 0.0, %v1568
      %1570 = vmatmul.bf16.gmra.mxu0 %v832
      %v1571 = vpop.f32.mrf.mxu0
      %v1572 = vadd.f32 0.0, %v1571
      %v1573 = vpop.f32.mrf.mxu0
      %v1574 = vadd.f32 0.0, %v1573
      %1575 = vmatmul.bf16.gmra.mxu0 %v1502
      %v1576 = vpop.f32.mrf.mxu0
      %v1577 = vadd.f32 0.0, %v1576
      %v1578 = vpop.f32.mrf.mxu0
      %v1579 = vadd.f32 0.0, %v1578
      %1580 = vdwg.mxu0
      %v1581 = vadd.f32 %v1477, %v1562
      %v1582 = vadd.f32 %v1478, %v1564
      %v1583 = vadd.f32 %v1479, %v1567
      %v1584 = vadd.f32 %v1480, %v1569
      %v1585 = vadd.f32 %v1481, %v1572
      %v1586 = vadd.f32 %v1482, %v1574
      %v1587 = vadd.f32 %v1483, %v1577
      %v1588 = vadd.f32 %v1484, %v1579
      %v1589 = vpack.c.bf16 %v1581, %v1581
      %v1590 = vpack.c.bf16 %v1582, %v1582
      %v1591 = vpack.c.bf16 %v1583, %v1583
      %v1592 = vpack.c.bf16 %v1584, %v1584
      %v1593 = vpack.c.bf16 %v1585, %v1585
      %v1594 = vpack.c.bf16 %v1586, %v1586
      %v1595 = vpack.c.bf16 %v1587, %v1587
      %v1596 = vpack.c.bf16 %v1588, %v1588
      %1597 = vst [vmem:[%s231] sm:$0xf] %v1589
      %1598 = vst [vmem:[%s231 + $0x4] sm:$0xf] %v1590
      %1599 = vst [vmem:[%s231 + $0x8] sm:$0xf] %v1591
      %1600 = vst [vmem:[%s231 + $0xc] sm:$0xf] %v1592
      %1601 = vst [vmem:[%s231 + $0x10] sm:$0xf] %v1593
      %1602 = vst [vmem:[%s231 + $0x14] sm:$0xf] %v1594
      %1603 = vst [vmem:[%s231 + $0x18] sm:$0xf] %v1595
      %1604 = vst [vmem:[%s231 + $0x1c] sm:$0xf] %v1596
      %v1605 = vadd.f32 %v1581, %v1582
      %v1606 = vadd.f32 %v1605, %v1583
      %v1607 = vadd.f32 %v1606, %v1584
      %v1608 = vadd.f32 %v1607, %v1585
      %v1609 = vadd.f32 %v1608, %v1586
      %v1610 = vadd.f32 %v1609, %v1587
      %v1611 = vadd.f32 %v1610, %v1588
      %v1612 = vrot.slane %v1611, 4
      %v1613 = vadd.f32 %v1611, %v1612
      %v1614 = vrot.slane %v1613, 2
      %v1615 = vadd.f32 %v1613, %v1614
      %v1616 = vrot.slane %v1615, 1
      %v1617 = vadd.f32 %v1615, %v1616
      %v1618 = vmul.f32 %v1617, 0.015625
      %v1619 = vsub.f32 %v1581, %v1618
      %v1620 = vsub.f32 %v1582, %v1618
      %v1621 = vsub.f32 %v1583, %v1618
      %v1622 = vsub.f32 %v1584, %v1618
      %v1623 = vsub.f32 %v1585, %v1618
      %v1624 = vsub.f32 %v1586, %v1618
      %v1625 = vsub.f32 %v1587, %v1618
      %v1626 = vsub.f32 %v1588, %v1618
      %v1627 = vmul.f32 %v1619, %v1619
      %v1628 = vmul.f32 %v1620, %v1620
      %v1629 = vmul.f32 %v1621, %v1621
      %v1630 = vmul.f32 %v1622, %v1622
      %v1631 = vmul.f32 %v1623, %v1623
      %v1632 = vmul.f32 %v1624, %v1624
      %v1633 = vmul.f32 %v1625, %v1625
      %v1634 = vmul.f32 %v1626, %v1626
      %v1635 = vadd.f32 %v1627, %v1628
      %v1636 = vadd.f32 %v1635, %v1629
      %v1637 = vadd.f32 %v1636, %v1630
      %v1638 = vadd.f32 %v1637, %v1631
      %v1639 = vadd.f32 %v1638, %v1632
      %v1640 = vadd.f32 %v1639, %v1633
      %v1641 = vadd.f32 %v1640, %v1634
      %v1642 = vrot.slane %v1641, 4
      %v1643 = vadd.f32 %v1641, %v1642
      %v1644 = vrot.slane %v1643, 2
      %v1645 = vadd.f32 %v1643, %v1644
      %v1646 = vrot.slane %v1645, 1
      %v1647 = vadd.f32 %v1645, %v1646
      %vm1648 = vcmask 1040384
      %v1649 = vsel %vm1648, %v1617, %v1647
      %1650 = vst [vmem:[%s235] sm:$0x3] %v1649
      %p1651 = scmp.lt.s32.totalorder %s17, 1
      %s1652 = scalar_select %p1651, %s17, 1
      %s1653 = smul.addr %s1652, 8
      %s1654 = smul.addr %s1653, 4
      %s1655 = scalar_lea.vmem %s4, %s1654
      %p1656 = scmp.lt.s32.totalorder %s17, 1
      %s1657 = scalar_select %p1656, %s17, 1
      %s1658 = smul.addr %s1657, 2
      %s1659 = scalar_lea.vmem %s5, %s1658
      // Predicated region
      $region37: #{bottleneck_forward_nhwc.5} parent=35 // pred_check
        %p1660 = pneg %p124
      $region38: #{bottleneck_forward_nhwc.5} parent=35 // pred_check_branch
        %1662 = sbr.rel (%p1660) target = $region40
      $region39: #{bottleneck_forward_nhwc.5} parent=35 // pred_region
        _
      $region40: #{bottleneck_forward_nhwc.5} parent=35 // pred_fallthru
        _
      // Predicated region
      $region41: #{bottleneck_forward_nhwc.5} parent=35 // pred_check
        %p1663 = pneg %p150
      $region42: #{bottleneck_forward_nhwc.5} parent=35 // pred_check_branch
        %1665 = sbr.rel (%p1663) target = $region44
      $region43: #{bottleneck_forward_nhwc.5} parent=35 // pred_region
        _
      $region44: #{bottleneck_forward_nhwc.5} parent=35 // pred_fallthru
        _
    $region36: #{bottleneck_forward_nhwc.5} parent=5 // pred_fallthru
      _
    %p1666 = scmp.le.s32.totalorder 2, %s12
    // Predicated region
    $region45: #{bottleneck_forward_nhwc.5} parent=5 // pred_check
      %p1667 = pneg %p1666
    $region46: #{bottleneck_forward_nhwc.5} parent=5 // pred_check_branch
      %1669 = sbr.rel (%p1667) target = $region48
    $region47: #{bottleneck_forward_nhwc.5} parent=5 // pred_region
      %s1670 = ssub.s32 %s12, 2
      // Predicated region
      $region49: #{bottleneck_forward_nhwc.5} parent=47 // pred_check
        %p1671 = pneg %p130
      $region50: #{bottleneck_forward_nhwc.5} parent=47 // pred_check_branch
        %1673 = sbr.rel (%p1671) target = $region52
      $region51: #{bottleneck_forward_nhwc.5} parent=47 // pred_region
        %p1674 = scmp.lt.s32.totalorder %s18, 1
        %s1675 = scalar_select %p1674, %s18, 1
        %s1676 = smul.addr %s1675, 8
        %s1677 = smul.addr %s1676, 4
        %s1678 = scalar_lea.vmem %s4, %s1677
      $region52: #{bottleneck_forward_nhwc.5} parent=47 // pred_fallthru
        _
      // Predicated region
      $region53: #{bottleneck_forward_nhwc.5} parent=47 // pred_check
        %p1679 = pneg %p156
      $region54: #{bottleneck_forward_nhwc.5} parent=47 // pred_check_branch
        %1681 = sbr.rel (%p1679) target = $region56
      $region55: #{bottleneck_forward_nhwc.5} parent=47 // pred_region
        %p1682 = scmp.lt.s32.totalorder %s18, 1
        %s1683 = scalar_select %p1682, %s18, 1
        %s1684 = smul.addr %s1683, 2
        %s1685 = scalar_lea.vmem %s5, %s1684
      $region56: #{bottleneck_forward_nhwc.5} parent=47 // pred_fallthru
        _
    $region48: #{bottleneck_forward_nhwc.5} parent=5 // pred_fallthru
      _
  $region6: #{bottleneck_forward_nhwc.5} parent=0 // loop_footer
    %s16 = sadd.s32 1, %s12
  $region7: #{bottleneck_forward_nhwc.5} parent=0 // loop_footer_branch
    %11 = sbr.rel target = $region3
  $region8: #{bottleneck_forward_nhwc.5} parent=0 // loop_exit
    _

</llo_original>
